<compile_context>
chip_gen: v7x
topology: tpu7x:2x2x1
jax: 0.10.0
libtpu: 0.0.40
codegen_flags: <defaults>
</compile_context>

<pallas_src>
import functools

import jax
import jax.numpy as jnp
from jax.experimental import pallas as pl
from jax.experimental.pallas import tpu as pltpu


def _round_up(n, m):
    return ((n + m - 1) // m) * m


def lstm_kernel(x_ref,            # (Tc*Bp, X)      this chunk's inputs (weight dtype)
                wx_ref,           # (X,  4*Hp)      fused input->gate weights
                whc_ref,          # (2*Hp, 4*Hp)    fused [h ; c_{t-1}] -> gate weights
                woc_ref,          # (Hp, Hp)        c_t peephole for the o gate
                b_ref,            # (1,  4*Hp)      fused biases (f32)
                h_out_ref,        # (Bp, Hp)        final hidden state (f32)
                xw_scr,           # VMEM (Tc, Bp, 4*Hp) f32: cached x@Wx + b
                h_scr,            # VMEM (Bp, Hp) f32: persistent h across chunks
                c_scr,            # VMEM (Bp, Hp) f32: persistent c across chunks
                *, seq_len, chunk, batch, hidden, mask_tail, unroll):
    Tc, Bp, Hp = chunk, batch, hidden
    ci = pl.program_id(0)

    @pl.when(ci == 0)
    def _init():
        h_scr[...] = jnp.zeros_like(h_scr)
        c_scr[...] = jnp.zeros_like(c_scr)

    # One large MXU matmul for every time step of this chunk, fused bias added
    # exactly once (broadcast), result cached in f32 VMEM scratch.
    xw = jnp.dot(x_ref[...], wx_ref[...],
                 preferred_element_type=jnp.float32) + b_ref[...]
    xw_scr[...] = xw.reshape(xw_scr.shape)          # (Tc*Bp,4Hp) -> (Tc,Bp,4Hp), tile-aligned

    whc = whc_ref[...]                              # (2Hp, 4Hp)
    woc = woc_ref[...]                              # (Hp, Hp)
    w_dtype = whc.dtype

    def step(t, carry):
        h_1, c_1 = carry
        zx = xw_scr[t]                              # (Bp, 4Hp) cached x proj + bias
        # Single fused recurrent matmul: [h_1 | c_1] @ [[Wh],[Wc_if|0]].
        hc = jnp.concatenate([h_1, c_1], axis=1).astype(w_dtype)     # (Bp, 2Hp)
        z = zx + jnp.dot(hc, whc, preferred_element_type=jnp.float32)  # (Bp, 4Hp)

        # Gate slices land exactly on 128-lane boundaries (Hp % 128 == 0).
        i_g = jax.nn.sigmoid(z[:, 0:Hp])
        f_g = jax.nn.sigmoid(z[:, Hp:2 * Hp])
        g = jnp.tanh(z[:, 2 * Hp:3 * Hp])
        c_new = f_g * c_1 + i_g * g
        o_g = jax.nn.sigmoid(
            z[:, 3 * Hp:4 * Hp]
            + jnp.dot(c_new.astype(w_dtype), woc,
                      preferred_element_type=jnp.float32))
        h_new = o_g * jnp.tanh(c_new)

        if mask_tail:
            # Padded tail steps of the last chunk must not advance the state.
            valid = ((ci * Tc + t) < seq_len).astype(jnp.float32)
            h_new = valid * h_new + (1.0 - valid) * h_1
            c_new = valid * c_new + (1.0 - valid) * c_1
        return h_new, c_new

    h, c = jax.lax.fori_loop(0, Tc, step, (h_scr[...], c_scr[...]),
                             unroll=unroll)
    h_scr[...] = h
    c_scr[...] = c

    @pl.when(ci == pl.num_programs(0) - 1)
    def _finalize():
        h_out_ref[...] = h


def _pick_chunk_and_vmem(T, Bp, X, Hp, w_bytes):
    """Pick the time-chunk size Tc from a VMEM budget and the matching limit."""
    x_row = Bp * _round_up(max(X, 128), 128) * w_bytes   # one time step of x, lane padded
    xw_row = Bp * 4 * Hp * 4                             # f32 scratch row
    per_t = 2 * x_row + 2 * xw_row                       # x double-buffered + scratch/temp
    fixed = 2 * (X * 4 * Hp + 2 * Hp * 4 * Hp + Hp * Hp) * w_bytes   # weights (2 bufs)
    fixed += 2 * 4 * Hp * 4                              # bias
    fixed += 2 * Bp * Hp * 4                             # output
    fixed += 2 * Bp * Hp * 4                             # h/c scratch
    budget = 32 << 20                                    # chunk-scaled part stays small
    tc = int(max(1, min(T, (budget - fixed) // per_t)))
    est = fixed + tc * per_t
    # Cap at 48 MiB so this also fits v7x's 64 MiB physical VMEM.
    vmem_limit = int(min(max(est + (8 << 20), 32 << 20), 48 << 20))
    return tc, vmem_limit


def lstm_forward(x_seq, params, *, weight_dtype=jnp.bfloat16, max_chunk=None):
    """x_seq: (T, B, size_x) float32. Returns final h: (B, size_h) float32."""
    T, B, X = x_seq.shape
    H = params["W_ih"].shape[0]

    # Empty-sequence branch of the PyTorch module: return the reset (zero) state.
    if T == 0:
        return jnp.zeros((B, H), jnp.float32)

    w_bytes = jnp.dtype(weight_dtype).itemsize
    sub = 16 if w_bytes == 2 else 8         # keep x blocks sublane-pack aligned for bf16
    Bp = _round_up(B, sub)
    # TODO(synk): for production hidden sizes on v6e/v7x, round Hp to 256 (full MXU
    # contraction width) and split the batch across the two v7x TensorCores with a
    # leading "parallel" grid axis; unnecessary at these sizes.
    Hp = _round_up(H, 128)

    Tc, vmem_limit = _pick_chunk_and_vmem(T, Bp, X, Hp, w_bytes)
    if max_chunk is not None:
        Tc = max(1, min(Tc, int(max_chunk)))
    n_chunks = pl.cdiv(T, Tc)
    Tp = n_chunks * Tc
    mask_tail = (Tp != T)
    unroll = True if Tc <= 32 else 4

    def padw(w, rows, cols):
        w = w.astype(jnp.float32)
        return jnp.pad(w, ((0, rows - w.shape[0]), (0, cols - w.shape[1])))

    def padb(b):
        return jnp.pad(b.astype(jnp.float32), (0, Hp - b.shape[0]))

    zero_h = jnp.zeros((Hp, Hp), jnp.float32)

    # Fused / padded parameter packing (zero padding keeps padded columns inert).
    w_x = jnp.concatenate([padw(params["W_ix"], X, Hp), padw(params["W_fx"], X, Hp),
                           padw(params["W_cx"], X, Hp), padw(params["W_ox"], X, Hp)],
                          axis=1).astype(weight_dtype)               # (X, 4Hp)
    w_h = jnp.concatenate([padw(params["W_ih"], Hp, Hp), padw(params["W_fh"], Hp, Hp),
                           padw(params["W_ch"], Hp, Hp), padw(params["W_oh"], Hp, Hp)],
                          axis=1)                                    # (Hp, 4Hp)
    w_c = jnp.concatenate([padw(params["W_ic"], Hp, Hp), padw(params["W_fc"], Hp, Hp),
                           zero_h, zero_h], axis=1)                  # (Hp, 4Hp)
    # TODO(synk): at Bp >= 128 keep the h and c matmuls separate (the fused form adds
    # ~33% zero FLOPs); at small Bp the single weight-stage/drain wins.
    w_hc = jnp.concatenate([w_h, w_c], axis=0).astype(weight_dtype)  # (2Hp, 4Hp)
    w_oc = padw(params["W_oc"], Hp, Hp).astype(weight_dtype)         # (Hp, Hp)
    bias = jnp.concatenate([padb(params["b_i"]), padb(params["b_f"]),
                            padb(params["b_c"]), padb(params["b_o"])]
                           ).reshape(1, 4 * Hp)                      # (1, 4Hp) f32

    # Pad batch and time, flatten (Tp, Bp, X) -> (Tp*Bp, X) so each chunk's input
    # projection is one large, well-shaped MXU matmul with a lane-dense result.
    x_pad = jnp.pad(x_seq.astype(jnp.float32),
                    ((0, Tp - T), (0, Bp - B), (0, 0)))
    x2d = x_pad.reshape(Tp * Bp, X).astype(weight_dtype)

    kernel = functools.partial(lstm_kernel, seq_len=T, chunk=Tc, batch=Bp,
                               hidden=Hp, mask_tail=mask_tail, unroll=unroll)

    cost = pl.CostEstimate(
        flops=(2 * Tp * Bp * X * 4 * Hp                    # bulk x @ Wx
               + Tp * 2 * Bp * (2 * Hp * 4 * Hp + Hp * Hp)),  # per-step matmuls
        transcendentals=5 * Tp * Bp * Hp,                  # 3 sigmoid + 2 tanh / step
        bytes_accessed=(x2d.size * w_bytes
                        + (w_x.size + w_hc.size + w_oc.size) * w_bytes
                        + 4 * (bias.size + Bp * Hp)),
    )

    h_pad = pl.pallas_call(
        kernel,
        out_shape=jax.ShapeDtypeStruct((Bp, Hp), jnp.float32),
        grid_spec=pltpu.PrefetchScalarGridSpec(
            num_scalar_prefetch=0,
            grid=(n_chunks,),          # sequential recurrence over time chunks
            in_specs=[
                pl.BlockSpec((Tc * Bp, X), lambda c: (c, 0)),      # streamed x chunk
                pl.BlockSpec((X, 4 * Hp), lambda c: (0, 0)),
                pl.BlockSpec((2 * Hp, 4 * Hp), lambda c: (0, 0)),
                pl.BlockSpec((Hp, Hp), lambda c: (0, 0)),
                pl.BlockSpec((1, 4 * Hp), lambda c: (0, 0)),
            ],
            out_specs=pl.BlockSpec((Bp, Hp), lambda c: (0, 0)),
            scratch_shapes=[
                pltpu.VMEM((Tc, Bp, 4 * Hp), jnp.float32),  # cached x proj (per chunk)
                pltpu.VMEM((Bp, Hp), jnp.float32),          # persistent h
                pltpu.VMEM((Bp, Hp), jnp.float32),          # persistent c
            ],
        ),
        compiler_params=pltpu.CompilerParams(
            dimension_semantics=("arbitrary",),
            vmem_limit_bytes=vmem_limit),
        cost_estimate=cost,
    )(x2d, w_x, w_hc, w_oc, bias)

    return h_pad[:B, :H]


def lstm_reference(x_seq, params):
    """Plain-JAX reference mirroring the PyTorch forward loop."""
    T, B, X = x_seq.shape
    H = params["W_ih"].shape[0]
    h = jnp.zeros((B, H), jnp.float32)
    c_1 = jnp.zeros((B, H), jnp.float32)

    def step(carry, x):
        h_1, c_1 = carry
        i = jax.nn.sigmoid(x @ params["W_ix"] + h_1 @ params["W_ih"]
                           + c_1 @ params["W_ic"] + params["b_i"])
        f = jax.nn.sigmoid(x @ params["W_fx"] + h_1 @ params["W_fh"]
                           + c_1 @ params["W_fc"] + params["b_f"])
        c = f * c_1 + i * jnp.tanh(x @ params["W_cx"] + h_1 @ params["W_ch"]
                                   + params["b_c"])
        o = jax.nn.sigmoid(x @ params["W_ox"] + h_1 @ params["W_oh"]
                           + c @ params["W_oc"] + params["b_o"])
        h = o * jnp.tanh(c)
        return (h, c), None

    (h, _), _ = jax.lax.scan(step, (h, c_1), x_seq)
    return h


def init_params(key, size_x, size_h):
    names_x = ["W_ix", "W_fx", "W_cx", "W_ox"]
    names_h = ["W_ih", "W_ic", "W_fh", "W_fc", "W_ch", "W_oh", "W_oc"]
    keys = jax.random.split(key, len(names_x) + len(names_h))
    params = {}
    k = 0
    for n in names_x:
        params[n] = 0.1 * jax.random.normal(keys[k], (size_x, size_h), jnp.float32)
        k += 1
    for n in names_h:
        params[n] = 0.1 * jax.random.normal(keys[k], (size_h, size_h), jnp.float32)
        k += 1
    for n in ["b_i", "b_f", "b_c", "b_o"]:
        params[n] = jnp.zeros((size_h,), jnp.float32)
    return params


if __name__ == "__main__":
    seq, batch, size_x, size_h = 8, 4, 16, 32

    key = jax.random.PRNGKey(0)
    k_params, k_x = jax.random.split(key)
    params = init_params(k_params, size_x, size_h)
    x_seq = jax.random.normal(k_x, (seq, batch, size_x), jnp.float32)

    h_ref = jax.block_until_ready(lstm_reference(x_seq, params))

    # 1) Exact-semantics check: f32 weights, single chunk, tight tolerance.
    h_f32 = jax.block_until_ready(
        lstm_forward(x_seq, params, weight_dtype=jnp.float32))
    assert h_f32.shape == (batch, size_h)
    assert jnp.allclose(h_f32, h_ref, atol=2e-5, rtol=2e-5), (
        float(jnp.max(jnp.abs(h_f32 - h_ref))))

    # 2) Chunked-grid check (3-step chunks -> 3 grid steps + masked tail), f32.
    h_chunk = jax.block_until_ready(
        lstm_forward(x_seq, params, weight_dtype=jnp.float32, max_chunk=3))
    assert jnp.allclose(h_chunk, h_ref, atol=2e-5, rtol=2e-5), (
        float(jnp.max(jnp.abs(h_chunk - h_ref))))

    # 3) Default fast path: bf16 weights/x, f32 accumulation + f32 state.
    h_bf16 = jax.block_until_ready(lstm_forward(x_seq, params))
    assert h_bf16.shape == (batch, size_h)
    assert jnp.allclose(h_bf16, h_ref, atol=5e-2, rtol=5e-2), (
        float(jnp.max(jnp.abs(h_bf16 - h_ref))))

    print("KERNEL_OK")
</pallas_src>

<mosaic_0001>
module attributes {stable_mosaic.version = 11 : i64} {
  func.func @lstm_kernel(%arg0: i32, %arg1: memref<64x16xf32, #tpu.memory_space<vmem>>, %arg2: memref<16x512xf32, #tpu.memory_space<vmem>>, %arg3: memref<256x512xf32, #tpu.memory_space<vmem>>, %arg4: memref<128x128xf32, #tpu.memory_space<vmem>>, %arg5: memref<1x512xf32, #tpu.memory_space<vmem>>, %arg6: memref<8x128xf32, #tpu.memory_space<vmem>>, %arg7: memref<8x8x512xf32, #tpu.memory_space<vmem>>, %arg8: memref<8x128xf32, #tpu.memory_space<vmem>>, %arg9: memref<8x128xf32, #tpu.memory_space<vmem>>) attributes {dimension_semantics = [#tpu.dimension_semantics<arbitrary>], iteration_bounds = array<i64: 1>, scalar_prefetch = 0 : i64, scratch_operands = 3 : i64, tpu.core_type = #tpu.core_type<tc>, window_params = [{transform_indices = @transform_0, window_bounds = array<i64: 64, 16>}, {pipeline_mode = #tpu.pipeline_mode<synchronous>, transform_indices = @transform_1, window_bounds = array<i64: 16, 512>}, {pipeline_mode = #tpu.pipeline_mode<synchronous>, transform_indices = @transform_2, window_bounds = array<i64: 256, 512>}, {pipeline_mode = #tpu.pipeline_mode<synchronous>, transform_indices = @transform_3, window_bounds = array<i64: 128, 128>}, {pipeline_mode = #tpu.pipeline_mode<synchronous>, transform_indices = @transform_4, window_bounds = array<i64: 1, 512>}, {pipeline_mode = #tpu.pipeline_mode<synchronous>, transform_indices = @transform_5, window_bounds = array<i64: 8, 128>}]} {
    %c0_i32 = arith.constant 0 : i32
    %0 = arith.cmpi eq, %arg0, %c0_i32 : i32
    %1 = arith.extui %0 : i1 to i32
    %c0_i32_0 = arith.constant 0 : i32
    %2 = arith.cmpi ne, %1, %c0_i32_0 : i32
    scf.if %2 {
      %cst_80 = arith.constant 0.000000e+00 : f32
      %284 = vector.broadcast %cst_80 : f32 to vector<8x128xf32>
      %c0_81 = arith.constant 0 : index
      %c0_82 = arith.constant 0 : index
      %285 = vector.load %arg8[%c0_81, %c0_82] : memref<8x128xf32, #tpu.memory_space<vmem>>, vector<8x128xf32>
      tpu.vector_store %arg8[%c0_81, %c0_82], %284 {strides = array<i32>} : memref<8x128xf32, #tpu.memory_space<vmem>>, vector<8x128xf32>,
      %cst_83 = arith.constant 0.000000e+00 : f32
      %286 = vector.broadcast %cst_83 : f32 to vector<8x128xf32>
      %c0_84 = arith.constant 0 : index
      %c0_85 = arith.constant 0 : index
      %287 = vector.load %arg9[%c0_84, %c0_85] : memref<8x128xf32, #tpu.memory_space<vmem>>, vector<8x128xf32>
      tpu.vector_store %arg9[%c0_84, %c0_85], %286 {strides = array<i32>} : memref<8x128xf32, #tpu.memory_space<vmem>>, vector<8x128xf32>,
    } else {
    }
    %c0 = arith.constant 0 : index
    %c0_1 = arith.constant 0 : index
    %3 = vector.load %arg1[%c0, %c0_1] : memref<64x16xf32, #tpu.memory_space<vmem>>, vector<64x16xf32>
    %c0_2 = arith.constant 0 : index
    %c0_3 = arith.constant 0 : index
    %4 = vector.load %arg2[%c0_2, %c0_3] : memref<16x512xf32, #tpu.memory_space<vmem>>, vector<16x512xf32>
    %cst = arith.constant dense<0.000000e+00> : vector<64x512xf32>
    %5 = tpu.matmul %3, %4, %cst {dimension_numbers = #tpu.dot_dimension_numbers<[1], [0], [0], [1], [0, 0, 1, 1], [], []>} : vector<64x16xf32>, vector<16x512xf32>, vector<64x512xf32> -> vector<64x512xf32>
    %c0_4 = arith.constant 0 : index
    %c0_5 = arith.constant 0 : index
    %6 = vector.load %arg5[%c0_4, %c0_5] : memref<1x512xf32, #tpu.memory_space<vmem>>, vector<1x512xf32>
    %7 = vector.broadcast %6 : vector<1x512xf32> to vector<64x512xf32>
    %8 = arith.addf %5, %7 : vector<64x512xf32>
    %9 = vector.shape_cast %8 : vector<64x512xf32> to vector<8x8x512xf32>
    %c0_6 = arith.constant 0 : index
    %c0_7 = arith.constant 0 : index
    %c0_8 = arith.constant 0 : index
    %10 = vector.load %arg7[%c0_6, %c0_7, %c0_8] : memref<8x8x512xf32, #tpu.memory_space<vmem>>, vector<8x8x512xf32>
    tpu.vector_store %arg7[%c0_6, %c0_7, %c0_8], %9 {strides = array<i32>} : memref<8x8x512xf32, #tpu.memory_space<vmem>>, vector<8x8x512xf32>,
    %c0_9 = arith.constant 0 : index
    %c0_10 = arith.constant 0 : index
    %11 = vector.load %arg3[%c0_9, %c0_10] : memref<256x512xf32, #tpu.memory_space<vmem>>, vector<256x512xf32>
    %c0_11 = arith.constant 0 : index
    %c0_12 = arith.constant 0 : index
    %12 = vector.load %arg4[%c0_11, %c0_12] : memref<128x128xf32, #tpu.memory_space<vmem>>, vector<128x128xf32>
    %c0_13 = arith.constant 0 : index
    %c0_14 = arith.constant 0 : index
    %13 = vector.load %arg8[%c0_13, %c0_14] : memref<8x128xf32, #tpu.memory_space<vmem>>, vector<8x128xf32>
    %c0_15 = arith.constant 0 : index
    %c0_16 = arith.constant 0 : index
    %14 = vector.load %arg9[%c0_15, %c0_16] : memref<8x128xf32, #tpu.memory_space<vmem>>, vector<8x128xf32>
    %c0_i32_17 = arith.constant 0 : i32
    %15 = arith.index_cast %c0_i32_17 : i32 to index
    %c0_18 = arith.constant 0 : index
    %c0_19 = arith.constant 0 : index
    %16 = vector.load %arg7[%15, %c0_18, %c0_19] : memref<8x8x512xf32, #tpu.memory_space<vmem>>, vector<1x8x512xf32>
    %17 = vector.shape_cast %16 : vector<1x8x512xf32> to vector<8x512xf32>
    %18 = tpu.concatenate %13, %14 in 1 : vector<8x128xf32>, vector<8x128xf32> -> vector<8x256xf32>
    %cst_20 = arith.constant dense<0.000000e+00> : vector<8x512xf32>
    %19 = tpu.matmul %18, %11, %cst_20 {dimension_numbers = #tpu.dot_dimension_numbers<[1], [0], [0], [1], [0, 0, 1, 1], [], []>} : vector<8x256xf32>, vector<256x512xf32>, vector<8x512xf32> -> vector<8x512xf32>
    %20 = arith.addf %17, %19 : vector<8x512xf32>
    %21 = vector.extract_strided_slice %20 {offsets = [0, 0], sizes = [8, 128], strides = [1, 1]} : vector<8x512xf32> to vector<8x128xf32>
    %22 = arith.negf %21 : vector<8x128xf32>
    %23 = math.exp %22 : vector<8x128xf32>
    %cst_21 = arith.constant 1.000000e+00 : f32
    %24 = vector.broadcast %cst_21 : f32 to vector<8x128xf32>
    %25 = arith.addf %24, %23 : vector<8x128xf32>
    %26 = arith.divf %24, %25 : vector<8x128xf32>
    %27 = vector.extract_strided_slice %20 {offsets = [0, 128], sizes = [8, 128], strides = [1, 1]} : vector<8x512xf32> to vector<8x128xf32>
    %28 = arith.negf %27 : vector<8x128xf32>
    %29 = math.exp %28 : vector<8x128xf32>
    %cst_22 = arith.constant 1.000000e+00 : f32
    %30 = vector.broadcast %cst_22 : f32 to vector<8x128xf32>
    %31 = arith.addf %30, %29 : vector<8x128xf32>
    %32 = arith.divf %30, %31 : vector<8x128xf32>
    %33 = vector.extract_strided_slice %20 {offsets = [0, 256], sizes = [8, 128], strides = [1, 1]} : vector<8x512xf32> to vector<8x128xf32>
    %34 = math.tanh %33 : vector<8x128xf32>
    %35 = arith.mulf %32, %14 : vector<8x128xf32>
    %36 = arith.mulf %26, %34 : vector<8x128xf32>
    %37 = arith.addf %35, %36 : vector<8x128xf32>
    %38 = vector.extract_strided_slice %20 {offsets = [0, 384], sizes = [8, 128], strides = [1, 1]} : vector<8x512xf32> to vector<8x128xf32>
    %cst_23 = arith.constant dense<0.000000e+00> : vector<8x128xf32>
    %39 = tpu.matmul %37, %12, %cst_23 {dimension_numbers = #tpu.dot_dimension_numbers<[1], [0], [0], [1], [0, 0, 1, 1], [], []>} : vector<8x128xf32>, vector<128x128xf32>, vector<8x128xf32> -> vector<8x128xf32>
    %40 = arith.addf %38, %39 : vector<8x128xf32>
    %41 = arith.negf %40 : vector<8x128xf32>
    %42 = math.exp %41 : vector<8x128xf32>
    %cst_24 = arith.constant 1.000000e+00 : f32
    %43 = vector.broadcast %cst_24 : f32 to vector<8x128xf32>
    %44 = arith.addf %43, %42 : vector<8x128xf32>
    %45 = arith.divf %43, %44 : vector<8x128xf32>
    %46 = math.tanh %37 : vector<8x128xf32>
    %47 = arith.mulf %45, %46 : vector<8x128xf32>
    %c1_i32 = arith.constant 1 : i32
    %48 = arith.index_cast %c1_i32 : i32 to index
    %c0_25 = arith.constant 0 : index
    %c0_26 = arith.constant 0 : index
    %49 = vector.load %arg7[%48, %c0_25, %c0_26] : memref<8x8x512xf32, #tpu.memory_space<vmem>>, vector<1x8x512xf32>
    %50 = vector.shape_cast %49 : vector<1x8x512xf32> to vector<8x512xf32>
    %51 = tpu.concatenate %47, %37 in 1 : vector<8x128xf32>, vector<8x128xf32> -> vector<8x256xf32>
    %cst_27 = arith.constant dense<0.000000e+00> : vector<8x512xf32>
    %52 = tpu.matmul %51, %11, %cst_27 {dimension_numbers = #tpu.dot_dimension_numbers<[1], [0], [0], [1], [0, 0, 1, 1], [], []>} : vector<8x256xf32>, vector<256x512xf32>, vector<8x512xf32> -> vector<8x512xf32>
    %53 = arith.addf %50, %52 : vector<8x512xf32>
    %54 = vector.extract_strided_slice %53 {offsets = [0, 0], sizes = [8, 128], strides = [1, 1]} : vector<8x512xf32> to vector<8x128xf32>
    %55 = arith.negf %54 : vector<8x128xf32>
    %56 = math.exp %55 : vector<8x128xf32>
    %cst_28 = arith.constant 1.000000e+00 : f32
    %57 = vector.broadcast %cst_28 : f32 to vector<8x128xf32>
    %58 = arith.addf %57, %56 : vector<8x128xf32>
    %59 = arith.divf %57, %58 : vector<8x128xf32>
    %60 = vector.extract_strided_slice %53 {offsets = [0, 128], sizes = [8, 128], strides = [1, 1]} : vector<8x512xf32> to vector<8x128xf32>
    %61 = arith.negf %60 : vector<8x128xf32>
    %62 = math.exp %61 : vector<8x128xf32>
    %cst_29 = arith.constant 1.000000e+00 : f32
    %63 = vector.broadcast %cst_29 : f32 to vector<8x128xf32>
    %64 = arith.addf %63, %62 : vector<8x128xf32>
    %65 = arith.divf %63, %64 : vector<8x128xf32>
    %66 = vector.extract_strided_slice %53 {offsets = [0, 256], sizes = [8, 128], strides = [1, 1]} : vector<8x512xf32> to vector<8x128xf32>
    %67 = math.tanh %66 : vector<8x128xf32>
    %68 = arith.mulf %65, %37 : vector<8x128xf32>
    %69 = arith.mulf %59, %67 : vector<8x128xf32>
    %70 = arith.addf %68, %69 : vector<8x128xf32>
    %71 = vector.extract_strided_slice %53 {offsets = [0, 384], sizes = [8, 128], strides = [1, 1]} : vector<8x512xf32> to vector<8x128xf32>
    %cst_30 = arith.constant dense<0.000000e+00> : vector<8x128xf32>
    %72 = tpu.matmul %70, %12, %cst_30 {dimension_numbers = #tpu.dot_dimension_numbers<[1], [0], [0], [1], [0, 0, 1, 1], [], []>} : vector<8x128xf32>, vector<128x128xf32>, vector<8x128xf32> -> vector<8x128xf32>
    %73 = arith.addf %71, %72 : vector<8x128xf32>
    %74 = arith.negf %73 : vector<8x128xf32>
    %75 = math.exp %74 : vector<8x128xf32>
    %cst_31 = arith.constant 1.000000e+00 : f32
    %76 = vector.broadcast %cst_31 : f32 to vector<8x128xf32>
    %77 = arith.addf %76, %75 : vector<8x128xf32>
    %78 = arith.divf %76, %77 : vector<8x128xf32>
    %79 = math.tanh %70 : vector<8x128xf32>
    %80 = arith.mulf %78, %79 : vector<8x128xf32>
    %c2_i32 = arith.constant 2 : i32
    %81 = arith.index_cast %c2_i32 : i32 to index
    %c0_32 = arith.constant 0 : index
    %c0_33 = arith.constant 0 : index
    %82 = vector.load %arg7[%81, %c0_32, %c0_33] : memref<8x8x512xf32, #tpu.memory_space<vmem>>, vector<1x8x512xf32>
    %83 = vector.shape_cast %82 : vector<1x8x512xf32> to vector<8x512xf32>
    %84 = tpu.concatenate %80, %70 in 1 : vector<8x128xf32>, vector<8x128xf32> -> vector<8x256xf32>
    %cst_34 = arith.constant dense<0.000000e+00> : vector<8x512xf32>
    %85 = tpu.matmul %84, %11, %cst_34 {dimension_numbers = #tpu.dot_dimension_numbers<[1], [0], [0], [1], [0, 0, 1, 1], [], []>} : vector<8x256xf32>, vector<256x512xf32>, vector<8x512xf32> -> vector<8x512xf32>
    %86 = arith.addf %83, %85 : vector<8x512xf32>
    %87 = vector.extract_strided_slice %86 {offsets = [0, 0], sizes = [8, 128], strides = [1, 1]} : vector<8x512xf32> to vector<8x128xf32>
    %88 = arith.negf %87 : vector<8x128xf32>
    %89 = math.exp %88 : vector<8x128xf32>
    %cst_35 = arith.constant 1.000000e+00 : f32
    %90 = vector.broadcast %cst_35 : f32 to vector<8x128xf32>
    %91 = arith.addf %90, %89 : vector<8x128xf32>
    %92 = arith.divf %90, %91 : vector<8x128xf32>
    %93 = vector.extract_strided_slice %86 {offsets = [0, 128], sizes = [8, 128], strides = [1, 1]} : vector<8x512xf32> to vector<8x128xf32>
    %94 = arith.negf %93 : vector<8x128xf32>
    %95 = math.exp %94 : vector<8x128xf32>
    %cst_36 = arith.constant 1.000000e+00 : f32
    %96 = vector.broadcast %cst_36 : f32 to vector<8x128xf32>
    %97 = arith.addf %96, %95 : vector<8x128xf32>
    %98 = arith.divf %96, %97 : vector<8x128xf32>
    %99 = vector.extract_strided_slice %86 {offsets = [0, 256], sizes = [8, 128], strides = [1, 1]} : vector<8x512xf32> to vector<8x128xf32>
    %100 = math.tanh %99 : vector<8x128xf32>
    %101 = arith.mulf %98, %70 : vector<8x128xf32>
    %102 = arith.mulf %92, %100 : vector<8x128xf32>
    %103 = arith.addf %101, %102 : vector<8x128xf32>
    %104 = vector.extract_strided_slice %86 {offsets = [0, 384], sizes = [8, 128], strides = [1, 1]} : vector<8x512xf32> to vector<8x128xf32>
    %cst_37 = arith.constant dense<0.000000e+00> : vector<8x128xf32>
    %105 = tpu.matmul %103, %12, %cst_37 {dimension_numbers = #tpu.dot_dimension_numbers<[1], [0], [0], [1], [0, 0, 1, 1], [], []>} : vector<8x128xf32>, vector<128x128xf32>, vector<8x128xf32> -> vector<8x128xf32>
    %106 = arith.addf %104, %105 : vector<8x128xf32>
    %107 = arith.negf %106 : vector<8x128xf32>
    %108 = math.exp %107 : vector<8x128xf32>
    %cst_38 = arith.constant 1.000000e+00 : f32
    %109 = vector.broadcast %cst_38 : f32 to vector<8x128xf32>
    %110 = arith.addf %109, %108 : vector<8x128xf32>
    %111 = arith.divf %109, %110 : vector<8x128xf32>
    %112 = math.tanh %103 : vector<8x128xf32>
    %113 = arith.mulf %111, %112 : vector<8x128xf32>
    %c3_i32 = arith.constant 3 : i32
    %114 = arith.index_cast %c3_i32 : i32 to index
    %c0_39 = arith.constant 0 : index
    %c0_40 = arith.constant 0 : index
    %115 = vector.load %arg7[%114, %c0_39, %c0_40] : memref<8x8x512xf32, #tpu.memory_space<vmem>>, vector<1x8x512xf32>
    %116 = vector.shape_cast %115 : vector<1x8x512xf32> to vector<8x512xf32>
    %117 = tpu.concatenate %113, %103 in 1 : vector<8x128xf32>, vector<8x128xf32> -> vector<8x256xf32>
    %cst_41 = arith.constant dense<0.000000e+00> : vector<8x512xf32>
    %118 = tpu.matmul %117, %11, %cst_41 {dimension_numbers = #tpu.dot_dimension_numbers<[1], [0], [0], [1], [0, 0, 1, 1], [], []>} : vector<8x256xf32>, vector<256x512xf32>, vector<8x512xf32> -> vector<8x512xf32>
    %119 = arith.addf %116, %118 : vector<8x512xf32>
    %120 = vector.extract_strided_slice %119 {offsets = [0, 0], sizes = [8, 128], strides = [1, 1]} : vector<8x512xf32> to vector<8x128xf32>
    %121 = arith.negf %120 : vector<8x128xf32>
    %122 = math.exp %121 : vector<8x128xf32>
    %cst_42 = arith.constant 1.000000e+00 : f32
    %123 = vector.broadcast %cst_42 : f32 to vector<8x128xf32>
    %124 = arith.addf %123, %122 : vector<8x128xf32>
    %125 = arith.divf %123, %124 : vector<8x128xf32>
    %126 = vector.extract_strided_slice %119 {offsets = [0, 128], sizes = [8, 128], strides = [1, 1]} : vector<8x512xf32> to vector<8x128xf32>
    %127 = arith.negf %126 : vector<8x128xf32>
    %128 = math.exp %127 : vector<8x128xf32>
    %cst_43 = arith.constant 1.000000e+00 : f32
    %129 = vector.broadcast %cst_43 : f32 to vector<8x128xf32>
    %130 = arith.addf %129, %128 : vector<8x128xf32>
    %131 = arith.divf %129, %130 : vector<8x128xf32>
    %132 = vector.extract_strided_slice %119 {offsets = [0, 256], sizes = [8, 128], strides = [1, 1]} : vector<8x512xf32> to vector<8x128xf32>
    %133 = math.tanh %132 : vector<8x128xf32>
    %134 = arith.mulf %131, %103 : vector<8x128xf32>
    %135 = arith.mulf %125, %133 : vector<8x128xf32>
    %136 = arith.addf %134, %135 : vector<8x128xf32>
    %137 = vector.extract_strided_slice %119 {offsets = [0, 384], sizes = [8, 128], strides = [1, 1]} : vector<8x512xf32> to vector<8x128xf32>
    %cst_44 = arith.constant dense<0.000000e+00> : vector<8x128xf32>
    %138 = tpu.matmul %136, %12, %cst_44 {dimension_numbers = #tpu.dot_dimension_numbers<[1], [0], [0], [1], [0, 0, 1, 1], [], []>} : vector<8x128xf32>, vector<128x128xf32>, vector<8x128xf32> -> vector<8x128xf32>
    %139 = arith.addf %137, %138 : vector<8x128xf32>
    %140 = arith.negf %139 : vector<8x128xf32>
    %141 = math.exp %140 : vector<8x128xf32>
    %cst_45 = arith.constant 1.000000e+00 : f32
    %142 = vector.broadcast %cst_45 : f32 to vector<8x128xf32>
    %143 = arith.addf %142, %141 : vector<8x128xf32>
    %144 = arith.divf %142, %143 : vector<8x128xf32>
    %145 = math.tanh %136 : vector<8x128xf32>
    %146 = arith.mulf %144, %145 : vector<8x128xf32>
    %c4_i32 = arith.constant 4 : i32
    %147 = arith.index_cast %c4_i32 : i32 to index
    %c0_46 = arith.constant 0 : index
    %c0_47 = arith.constant 0 : index
    %148 = vector.load %arg7[%147, %c0_46, %c0_47] : memref<8x8x512xf32, #tpu.memory_space<vmem>>, vector<1x8x512xf32>
    %149 = vector.shape_cast %148 : vector<1x8x512xf32> to vector<8x512xf32>
    %150 = tpu.concatenate %146, %136 in 1 : vector<8x128xf32>, vector<8x128xf32> -> vector<8x256xf32>
    %cst_48 = arith.constant dense<0.000000e+00> : vector<8x512xf32>
    %151 = tpu.matmul %150, %11, %cst_48 {dimension_numbers = #tpu.dot_dimension_numbers<[1], [0], [0], [1], [0, 0, 1, 1], [], []>} : vector<8x256xf32>, vector<256x512xf32>, vector<8x512xf32> -> vector<8x512xf32>
    %152 = arith.addf %149, %151 : vector<8x512xf32>
    %153 = vector.extract_strided_slice %152 {offsets = [0, 0], sizes = [8, 128], strides = [1, 1]} : vector<8x512xf32> to vector<8x128xf32>
    %154 = arith.negf %153 : vector<8x128xf32>
    %155 = math.exp %154 : vector<8x128xf32>
    %cst_49 = arith.constant 1.000000e+00 : f32
    %156 = vector.broadcast %cst_49 : f32 to vector<8x128xf32>
    %157 = arith.addf %156, %155 : vector<8x128xf32>
    %158 = arith.divf %156, %157 : vector<8x128xf32>
    %159 = vector.extract_strided_slice %152 {offsets = [0, 128], sizes = [8, 128], strides = [1, 1]} : vector<8x512xf32> to vector<8x128xf32>
    %160 = arith.negf %159 : vector<8x128xf32>
    %161 = math.exp %160 : vector<8x128xf32>
    %cst_50 = arith.constant 1.000000e+00 : f32
    %162 = vector.broadcast %cst_50 : f32 to vector<8x128xf32>
    %163 = arith.addf %162, %161 : vector<8x128xf32>
    %164 = arith.divf %162, %163 : vector<8x128xf32>
    %165 = vector.extract_strided_slice %152 {offsets = [0, 256], sizes = [8, 128], strides = [1, 1]} : vector<8x512xf32> to vector<8x128xf32>
    %166 = math.tanh %165 : vector<8x128xf32>
    %167 = arith.mulf %164, %136 : vector<8x128xf32>
    %168 = arith.mulf %158, %166 : vector<8x128xf32>
    %169 = arith.addf %167, %168 : vector<8x128xf32>
    %170 = vector.extract_strided_slice %152 {offsets = [0, 384], sizes = [8, 128], strides = [1, 1]} : vector<8x512xf32> to vector<8x128xf32>
    %cst_51 = arith.constant dense<0.000000e+00> : vector<8x128xf32>
    %171 = tpu.matmul %169, %12, %cst_51 {dimension_numbers = #tpu.dot_dimension_numbers<[1], [0], [0], [1], [0, 0, 1, 1], [], []>} : vector<8x128xf32>, vector<128x128xf32>, vector<8x128xf32> -> vector<8x128xf32>
    %172 = arith.addf %170, %171 : vector<8x128xf32>
    %173 = arith.negf %172 : vector<8x128xf32>
    %174 = math.exp %173 : vector<8x128xf32>
    %cst_52 = arith.constant 1.000000e+00 : f32
    %175 = vector.broadcast %cst_52 : f32 to vector<8x128xf32>
    %176 = arith.addf %175, %174 : vector<8x128xf32>
    %177 = arith.divf %175, %176 : vector<8x128xf32>
    %178 = math.tanh %169 : vector<8x128xf32>
    %179 = arith.mulf %177, %178 : vector<8x128xf32>
    %c5_i32 = arith.constant 5 : i32
    %180 = arith.index_cast %c5_i32 : i32 to index
    %c0_53 = arith.constant 0 : index
    %c0_54 = arith.constant 0 : index
    %181 = vector.load %arg7[%180, %c0_53, %c0_54] : memref<8x8x512xf32, #tpu.memory_space<vmem>>, vector<1x8x512xf32>
    %182 = vector.shape_cast %181 : vector<1x8x512xf32> to vector<8x512xf32>
    %183 = tpu.concatenate %179, %169 in 1 : vector<8x128xf32>, vector<8x128xf32> -> vector<8x256xf32>
    %cst_55 = arith.constant dense<0.000000e+00> : vector<8x512xf32>
    %184 = tpu.matmul %183, %11, %cst_55 {dimension_numbers = #tpu.dot_dimension_numbers<[1], [0], [0], [1], [0, 0, 1, 1], [], []>} : vector<8x256xf32>, vector<256x512xf32>, vector<8x512xf32> -> vector<8x512xf32>
    %185 = arith.addf %182, %184 : vector<8x512xf32>
    %186 = vector.extract_strided_slice %185 {offsets = [0, 0], sizes = [8, 128], strides = [1, 1]} : vector<8x512xf32> to vector<8x128xf32>
    %187 = arith.negf %186 : vector<8x128xf32>
    %188 = math.exp %187 : vector<8x128xf32>
    %cst_56 = arith.constant 1.000000e+00 : f32
    %189 = vector.broadcast %cst_56 : f32 to vector<8x128xf32>
    %190 = arith.addf %189, %188 : vector<8x128xf32>
    %191 = arith.divf %189, %190 : vector<8x128xf32>
    %192 = vector.extract_strided_slice %185 {offsets = [0, 128], sizes = [8, 128], strides = [1, 1]} : vector<8x512xf32> to vector<8x128xf32>
    %193 = arith.negf %192 : vector<8x128xf32>
    %194 = math.exp %193 : vector<8x128xf32>
    %cst_57 = arith.constant 1.000000e+00 : f32
    %195 = vector.broadcast %cst_57 : f32 to vector<8x128xf32>
    %196 = arith.addf %195, %194 : vector<8x128xf32>
    %197 = arith.divf %195, %196 : vector<8x128xf32>
    %198 = vector.extract_strided_slice %185 {offsets = [0, 256], sizes = [8, 128], strides = [1, 1]} : vector<8x512xf32> to vector<8x128xf32>
    %199 = math.tanh %198 : vector<8x128xf32>
    %200 = arith.mulf %197, %169 : vector<8x128xf32>
    %201 = arith.mulf %191, %199 : vector<8x128xf32>
    %202 = arith.addf %200, %201 : vector<8x128xf32>
    %203 = vector.extract_strided_slice %185 {offsets = [0, 384], sizes = [8, 128], strides = [1, 1]} : vector<8x512xf32> to vector<8x128xf32>
    %cst_58 = arith.constant dense<0.000000e+00> : vector<8x128xf32>
    %204 = tpu.matmul %202, %12, %cst_58 {dimension_numbers = #tpu.dot_dimension_numbers<[1], [0], [0], [1], [0, 0, 1, 1], [], []>} : vector<8x128xf32>, vector<128x128xf32>, vector<8x128xf32> -> vector<8x128xf32>
    %205 = arith.addf %203, %204 : vector<8x128xf32>
    %206 = arith.negf %205 : vector<8x128xf32>
    %207 = math.exp %206 : vector<8x128xf32>
    %cst_59 = arith.constant 1.000000e+00 : f32
    %208 = vector.broadcast %cst_59 : f32 to vector<8x128xf32>
    %209 = arith.addf %208, %207 : vector<8x128xf32>
    %210 = arith.divf %208, %209 : vector<8x128xf32>
    %211 = math.tanh %202 : vector<8x128xf32>
    %212 = arith.mulf %210, %211 : vector<8x128xf32>
    %c6_i32 = arith.constant 6 : i32
    %213 = arith.index_cast %c6_i32 : i32 to index
    %c0_60 = arith.constant 0 : index
    %c0_61 = arith.constant 0 : index
    %214 = vector.load %arg7[%213, %c0_60, %c0_61] : memref<8x8x512xf32, #tpu.memory_space<vmem>>, vector<1x8x512xf32>
    %215 = vector.shape_cast %214 : vector<1x8x512xf32> to vector<8x512xf32>
    %216 = tpu.concatenate %212, %202 in 1 : vector<8x128xf32>, vector<8x128xf32> -> vector<8x256xf32>
    %cst_62 = arith.constant dense<0.000000e+00> : vector<8x512xf32>
    %217 = tpu.matmul %216, %11, %cst_62 {dimension_numbers = #tpu.dot_dimension_numbers<[1], [0], [0], [1], [0, 0, 1, 1], [], []>} : vector<8x256xf32>, vector<256x512xf32>, vector<8x512xf32> -> vector<8x512xf32>
    %218 = arith.addf %215, %217 : vector<8x512xf32>
    %219 = vector.extract_strided_slice %218 {offsets = [0, 0], sizes = [8, 128], strides = [1, 1]} : vector<8x512xf32> to vector<8x128xf32>
    %220 = arith.negf %219 : vector<8x128xf32>
    %221 = math.exp %220 : vector<8x128xf32>
    %cst_63 = arith.constant 1.000000e+00 : f32
    %222 = vector.broadcast %cst_63 : f32 to vector<8x128xf32>
    %223 = arith.addf %222, %221 : vector<8x128xf32>
    %224 = arith.divf %222, %223 : vector<8x128xf32>
    %225 = vector.extract_strided_slice %218 {offsets = [0, 128], sizes = [8, 128], strides = [1, 1]} : vector<8x512xf32> to vector<8x128xf32>
    %226 = arith.negf %225 : vector<8x128xf32>
    %227 = math.exp %226 : vector<8x128xf32>
    %cst_64 = arith.constant 1.000000e+00 : f32
    %228 = vector.broadcast %cst_64 : f32 to vector<8x128xf32>
    %229 = arith.addf %228, %227 : vector<8x128xf32>
    %230 = arith.divf %228, %229 : vector<8x128xf32>
    %231 = vector.extract_strided_slice %218 {offsets = [0, 256], sizes = [8, 128], strides = [1, 1]} : vector<8x512xf32> to vector<8x128xf32>
    %232 = math.tanh %231 : vector<8x128xf32>
    %233 = arith.mulf %230, %202 : vector<8x128xf32>
    %234 = arith.mulf %224, %232 : vector<8x128xf32>
    %235 = arith.addf %233, %234 : vector<8x128xf32>
    %236 = vector.extract_strided_slice %218 {offsets = [0, 384], sizes = [8, 128], strides = [1, 1]} : vector<8x512xf32> to vector<8x128xf32>
    %cst_65 = arith.constant dense<0.000000e+00> : vector<8x128xf32>
    %237 = tpu.matmul %235, %12, %cst_65 {dimension_numbers = #tpu.dot_dimension_numbers<[1], [0], [0], [1], [0, 0, 1, 1], [], []>} : vector<8x128xf32>, vector<128x128xf32>, vector<8x128xf32> -> vector<8x128xf32>
    %238 = arith.addf %236, %237 : vector<8x128xf32>
    %239 = arith.negf %238 : vector<8x128xf32>
    %240 = math.exp %239 : vector<8x128xf32>
    %cst_66 = arith.constant 1.000000e+00 : f32
    %241 = vector.broadcast %cst_66 : f32 to vector<8x128xf32>
    %242 = arith.addf %241, %240 : vector<8x128xf32>
    %243 = arith.divf %241, %242 : vector<8x128xf32>
    %244 = math.tanh %235 : vector<8x128xf32>
    %245 = arith.mulf %243, %244 : vector<8x128xf32>
    %c7_i32 = arith.constant 7 : i32
    %246 = arith.index_cast %c7_i32 : i32 to index
    %c0_67 = arith.constant 0 : index
    %c0_68 = arith.constant 0 : index
    %247 = vector.load %arg7[%246, %c0_67, %c0_68] : memref<8x8x512xf32, #tpu.memory_space<vmem>>, vector<1x8x512xf32>
    %248 = vector.shape_cast %247 : vector<1x8x512xf32> to vector<8x512xf32>
    %249 = tpu.concatenate %245, %235 in 1 : vector<8x128xf32>, vector<8x128xf32> -> vector<8x256xf32>
    %cst_69 = arith.constant dense<0.000000e+00> : vector<8x512xf32>
    %250 = tpu.matmul %249, %11, %cst_69 {dimension_numbers = #tpu.dot_dimension_numbers<[1], [0], [0], [1], [0, 0, 1, 1], [], []>} : vector<8x256xf32>, vector<256x512xf32>, vector<8x512xf32> -> vector<8x512xf32>
    %251 = arith.addf %248, %250 : vector<8x512xf32>
    %252 = vector.extract_strided_slice %251 {offsets = [0, 0], sizes = [8, 128], strides = [1, 1]} : vector<8x512xf32> to vector<8x128xf32>
    %253 = arith.negf %252 : vector<8x128xf32>
    %254 = math.exp %253 : vector<8x128xf32>
    %cst_70 = arith.constant 1.000000e+00 : f32
    %255 = vector.broadcast %cst_70 : f32 to vector<8x128xf32>
    %256 = arith.addf %255, %254 : vector<8x128xf32>
    %257 = arith.divf %255, %256 : vector<8x128xf32>
    %258 = vector.extract_strided_slice %251 {offsets = [0, 128], sizes = [8, 128], strides = [1, 1]} : vector<8x512xf32> to vector<8x128xf32>
    %259 = arith.negf %258 : vector<8x128xf32>
    %260 = math.exp %259 : vector<8x128xf32>
    %cst_71 = arith.constant 1.000000e+00 : f32
    %261 = vector.broadcast %cst_71 : f32 to vector<8x128xf32>
    %262 = arith.addf %261, %260 : vector<8x128xf32>
    %263 = arith.divf %261, %262 : vector<8x128xf32>
    %264 = vector.extract_strided_slice %251 {offsets = [0, 256], sizes = [8, 128], strides = [1, 1]} : vector<8x512xf32> to vector<8x128xf32>
    %265 = math.tanh %264 : vector<8x128xf32>
    %266 = arith.mulf %263, %235 : vector<8x128xf32>
    %267 = arith.mulf %257, %265 : vector<8x128xf32>
    %268 = arith.addf %266, %267 : vector<8x128xf32>
    %269 = vector.extract_strided_slice %251 {offsets = [0, 384], sizes = [8, 128], strides = [1, 1]} : vector<8x512xf32> to vector<8x128xf32>
    %cst_72 = arith.constant dense<0.000000e+00> : vector<8x128xf32>
    %270 = tpu.matmul %268, %12, %cst_72 {dimension_numbers = #tpu.dot_dimension_numbers<[1], [0], [0], [1], [0, 0, 1, 1], [], []>} : vector<8x128xf32>, vector<128x128xf32>, vector<8x128xf32> -> vector<8x128xf32>
    %271 = arith.addf %269, %270 : vector<8x128xf32>
    %272 = arith.negf %271 : vector<8x128xf32>
    %273 = math.exp %272 : vector<8x128xf32>
    %cst_73 = arith.constant 1.000000e+00 : f32
    %274 = vector.broadcast %cst_73 : f32 to vector<8x128xf32>
    %275 = arith.addf %274, %273 : vector<8x128xf32>
    %276 = arith.divf %274, %275 : vector<8x128xf32>
    %277 = math.tanh %268 : vector<8x128xf32>
    %278 = arith.mulf %276, %277 : vector<8x128xf32>
    %c8_i32 = arith.constant 8 : i32
    %c0_74 = arith.constant 0 : index
    %c0_75 = arith.constant 0 : index
    %279 = vector.load %arg8[%c0_74, %c0_75] : memref<8x128xf32, #tpu.memory_space<vmem>>, vector<8x128xf32>
    tpu.vector_store %arg8[%c0_74, %c0_75], %278 {strides = array<i32>} : memref<8x128xf32, #tpu.memory_space<vmem>>, vector<8x128xf32>,
    %c0_76 = arith.constant 0 : index
    %c0_77 = arith.constant 0 : index
    %280 = vector.load %arg9[%c0_76, %c0_77] : memref<8x128xf32, #tpu.memory_space<vmem>>, vector<8x128xf32>
    tpu.vector_store %arg9[%c0_76, %c0_77], %268 {strides = array<i32>} : memref<8x128xf32, #tpu.memory_space<vmem>>, vector<8x128xf32>,
    %c0_i32_78 = arith.constant 0 : i32
    %281 = arith.cmpi eq, %arg0, %c0_i32_78 : i32
    %282 = arith.extui %281 : i1 to i32
    %c0_i32_79 = arith.constant 0 : i32
    %283 = arith.cmpi ne, %282, %c0_i32_79 : i32
    scf.if %283 {
      %c0_80 = arith.constant 0 : index
      %c0_81 = arith.constant 0 : index
      %284 = vector.load %arg6[%c0_80, %c0_81] : memref<8x128xf32, #tpu.memory_space<vmem>>, vector<8x128xf32>
      tpu.vector_store %arg6[%c0_80, %c0_81], %278 {strides = array<i32>} : memref<8x128xf32, #tpu.memory_space<vmem>>, vector<8x128xf32>,
    } else {
    }
    return
  }
  func.func @transform_0(%arg0: i32) -> (i32, i32) {
    %c0_i32 = arith.constant 0 : i32
    %c0_i32_0 = arith.constant 0 : i32
    return %arg0, %c0_i32 : i32, i32
  }
  func.func @transform_1(%arg0: i32) -> (i32, i32) {
    %c0_i32 = arith.constant 0 : i32
    %c0_i32_0 = arith.constant 0 : i32
    %c0_i32_1 = arith.constant 0 : i32
    return %c0_i32, %c0_i32_0 : i32, i32
  }
  func.func @transform_2(%arg0: i32) -> (i32, i32) {
    %c0_i32 = arith.constant 0 : i32
    %c0_i32_0 = arith.constant 0 : i32
    %c0_i32_1 = arith.constant 0 : i32
    return %c0_i32, %c0_i32_0 : i32, i32
  }
  func.func @transform_3(%arg0: i32) -> (i32, i32) {
    %c0_i32 = arith.constant 0 : i32
    %c0_i32_0 = arith.constant 0 : i32
    %c0_i32_1 = arith.constant 0 : i32
    return %c0_i32, %c0_i32_0 : i32, i32
  }
  func.func @transform_4(%arg0: i32) -> (i32, i32) {
    %c0_i32 = arith.constant 0 : i32
    %c0_i32_0 = arith.constant 0 : i32
    %c0_i32_1 = arith.constant 0 : i32
    return %c0_i32, %c0_i32_0 : i32, i32
  }
  func.func @transform_5(%arg0: i32) -> (i32, i32) {
    %c0_i32 = arith.constant 0 : i32
    %c0_i32_0 = arith.constant 0 : i32
    %c0_i32_1 = arith.constant 0 : i32
    return %c0_i32, %c0_i32_0 : i32, i32
  }
}

</mosaic_0001>

<llo_original>
// kernel: tpu_custom_call.1
$region0: #{tpu_custom_call.1}
  #allocation0 [shape = 'u32[]', space=smem, size = 0x4, offset = 0x4, fixed_abs, tag = 'smem constant byte address 0x4 - core index']
  #allocation1 [shape = 'u32[144,128]{1,0:T(1,128)}', space=vmem, size = 0x12000, scoped, tag = 'internal scratch']
  #allocation2 [shape = 'f32[8,8,512]{2,1,0:T(8,128)}', space=vmem, size = 0x20000, scoped, tag = 'scratch operand']
  #allocation3 [shape = 'f32[8,128]{1,0:T(8,128)}', space=vmem, size = 0x1000, scoped, tag = 'scratch operand']
  #allocation4 [shape = 'f32[8,128]{1,0:T(8,128)}', space=vmem, size = 0x1000, scoped, tag = 'scratch operand']
  %s0 = inlined_call_operand.vmem [shape: f32[64,16], index: 0, kind: input, shape index: {}]
  %s1 = inlined_call_operand.vmem [shape: f32[16,512], index: 1, kind: input, shape index: {}]
  %s2 = inlined_call_operand.hbm [shape: f32[256,512], index: 2, kind: input, shape index: {}]
  %s3 = inlined_call_operand.hbm [shape: f32[128,128], index: 3, kind: input, shape index: {}]
  %s4 = inlined_call_operand.vmem [shape: f32[1,512], index: 4, kind: input, shape index: {}]
  %s5 = inlined_call_operand.hbm [shape: f32[8,128], index: 5, kind: output, shape index: {}]
  %s6 = sld [smem:[#allocation0]]
  $region46: #{tpu_custom_call.1} parent=0
    _
  %s8 = ssub.s32 1, %s6
  %s9 = scalar_select 0, %s8, %s6
  $region1: #{tpu_custom_call.1} parent=0
    #allocation5 [shape = 'u8[524288]{0}', space=vmem, size = 0x80000, scoped, tag = 'input window, operand 2, single buffered']
    #allocation6 [shape = 's32[1]{0}', space=sflag, size = 0x4, scoped, tag = 'scoped memory for tpu_custom_call.1']
    #allocation7 [shape = 's32[1]{0}', space=sflag, size = 0x4, scoped, tag = 'scoped memory for tpu_custom_call.1']
    #allocation8 [shape = 'u8[65536]{0}', space=vmem, size = 0x10000, scoped, tag = 'input window, operand 3, single buffered']
    #allocation9 [shape = 's32[1]{0}', space=sflag, size = 0x4, scoped, tag = 'scoped memory for tpu_custom_call.1']
    #allocation10 [shape = 'u8[4096]{0}', space=vmem, size = 0x1000, scoped, tag = 'output window, operand 0, single buffered']
    %10 = vsyncpa [#allocation6], 0
    %11 = vsyncpa [#allocation9], 0
    %12 = vsyncpa [#allocation7], 0
    // Predicated region
    $region2: #{tpu_custom_call.1} parent=1 // pred_check
      _
    $region3: #{tpu_custom_call.1} parent=1 // pred_check_branch
      %14 = sbr.rel (0) target = $region5
    $region4: #{tpu_custom_call.1} parent=1 // pred_region
      _
    $region5: #{tpu_custom_call.1} parent=1 // pred_fallthru
      _
    // Predicated region
    $region6: #{tpu_custom_call.1} parent=1 // pred_check
      _
    $region7: #{tpu_custom_call.1} parent=1 // pred_check_branch
      %16 = sbr.rel (0) target = $region9
    $region8: #{tpu_custom_call.1} parent=1 // pred_region
      _
    $region9: #{tpu_custom_call.1} parent=1 // pred_fallthru
      _
    // Predicated region
    $region10: #{tpu_custom_call.1} parent=1 // pred_check
      _
    $region11: #{tpu_custom_call.1} parent=1 // pred_check_branch
      %18 = sbr.rel (0) target = $region13
    $region12: #{tpu_custom_call.1} parent=1 // pred_region
      %s20 = ssub.s32 16384, 16384
      %21 = vsyncadd [#allocation6], %s20
      %s22 = sshll.u32 [#allocation5], 4
      %s23 = int_to_ptr.vmem [resolvable:$true] %s22
      %28 = dma.hbm_to_vmem [thread:$0]  %s2, 16384, %s23, [#allocation6], 512, 512, 32
    $region13: #{tpu_custom_call.1} parent=1 // pred_fallthru
      _
    // Predicated region
    $region14: #{tpu_custom_call.1} parent=1 // pred_check
      _
    $region15: #{tpu_custom_call.1} parent=1 // pred_check_branch
      %30 = sbr.rel (0) target = $region17
    $region16: #{tpu_custom_call.1} parent=1 // pred_region
      %s32 = ssub.s32 2048, 2048
      %33 = vsyncadd [#allocation9], %s32
      %s34 = sshll.u32 [#allocation8], 4
      %s35 = int_to_ptr.vmem [resolvable:$true] %s34
      %40 = dma.hbm_to_vmem [thread:$0]  %s3, 2048, %s35, [#allocation9], 128, 128, 8
    $region17: #{tpu_custom_call.1} parent=1 // pred_fallthru
      _
    // Predicated region
    $region18: #{tpu_custom_call.1} parent=1 // pred_check
      _
    $region19: #{tpu_custom_call.1} parent=1 // pred_check_branch
      %42 = sbr.rel (0) target = $region21
    $region20: #{tpu_custom_call.1} parent=1 // pred_region
      _
    $region21: #{tpu_custom_call.1} parent=1 // pred_fallthru
      _
    // Predicated region
    $region22: #{tpu_custom_call.1} parent=1 // pred_check
      _
    $region23: #{tpu_custom_call.1} parent=1 // pred_check_branch
      %44 = sbr.rel (0) target = $region25
    $region24: #{tpu_custom_call.1} parent=1 // pred_region
      %45 = dma.done [#allocation6], 16384
    $region25: #{tpu_custom_call.1} parent=1 // pred_fallthru
      _
    // Predicated region
    $region26: #{tpu_custom_call.1} parent=1 // pred_check
      _
    $region27: #{tpu_custom_call.1} parent=1 // pred_check_branch
      %47 = sbr.rel (0) target = $region29
    $region28: #{tpu_custom_call.1} parent=1 // pred_region
      %48 = dma.done [#allocation9], 2048
    $region29: #{tpu_custom_call.1} parent=1 // pred_fallthru
      _
    %p49 = scmp.eq.s32.totalorder 0, 0
    // Predicated region
    $region30: #{tpu_custom_call.1} parent=1 // pred_check
      %p50 = pneg %p49
    $region31: #{tpu_custom_call.1} parent=1 // pred_check_branch
      %52 = sbr.rel (%p50) target = $region33
    $region32: #{tpu_custom_call.1} parent=1 // pred_region
      %53 = vst [vmem:[#allocation3] sm:$0xff] 0.0
      %54 = vst [vmem:[#allocation4] sm:$0xff] 0.0
    $region33: #{tpu_custom_call.1} parent=1 // pred_fallthru
      _
    %v55 = vld [vmem:[%s0] sm:$0xff]
    %v56 = vld [vmem:[%s0 + $0x8] sm:$0xff]
    %v57 = vld [vmem:[%s0 + $0x10] sm:$0xff]
    %v58 = vld [vmem:[%s0 + $0x18] sm:$0xff]
    %v59 = vld [vmem:[%s0 + $0x20] sm:$0xff]
    %v60 = vld [vmem:[%s0 + $0x28] sm:$0xff]
    %v61 = vld [vmem:[%s0 + $0x30] sm:$0xff]
    %v62 = vld [vmem:[%s0 + $0x38] sm:$0xff]
    %v63 = vld [vmem:[%s1] sm:$0xff]
    %v64 = vld [vmem:[%s1 + $0x8] sm:$0xff]
    %v65 = vld [vmem:[%s1 + $0x10] sm:$0xff]
    %v66 = vld [vmem:[%s1 + $0x18] sm:$0xff]
    %v67 = vld [vmem:[%s1 + $0x20] sm:$0xff]
    %v68 = vld [vmem:[%s1 + $0x28] sm:$0xff]
    %v69 = vld [vmem:[%s1 + $0x30] sm:$0xff]
    %v70 = vld [vmem:[%s1 + $0x38] sm:$0xff]
    %v71 = vld [vmem:[%s4] sm:$0xf]
    %v73 = vlaneseq
    %v74 = vshrl.u32 %v73, 7
    %v75 = vsub.s32 0, %v74
    %v76 = vrot.slane %v71, %v75
    %v77 = vlaneseq
    %v78 = vshrl.u32 %v77, 7
    %v79 = vsub.s32 1, %v78
    %v80 = vrot.slane %v71, %v79
    %v81 = vlaneseq
    %v82 = vshrl.u32 %v81, 7
    %v83 = vsub.s32 2, %v82
    %v84 = vrot.slane %v71, %v83
    %v85 = vlaneseq
    %v86 = vshrl.u32 %v85, 7
    %v87 = vsub.s32 3, %v86
    %v88 = vrot.slane %v71, %v87
    %vm93 = vcmask 130048
    %v95 = vsel %vm93, %v55, 0
    %v98 = vsel %vm93, %v56, 0
    %v101 = vsel %vm93, %v57, 0
    %v104 = vsel %vm93, %v58, 0
    %v107 = vsel %vm93, %v59, 0
    %v110 = vsel %vm93, %v60, 0
    %v113 = vsel %vm93, %v61, 0
    %v116 = vsel %vm93, %v62, 0
    %118 = vmatprep.subr.mxu0 %v64
    %119 = vmatpush1.msra.mxu0 %v63
    %120 = vmatprep.subr.mxu0 %v68
    %121 = vmatpush1.msra.mxu0 %v67
    %122 = vmatprep.subr.mxu0 0.0
    %123 = vmatpush1.msra.mxu0 0.0
    %124 = vmatprep.subr.mxu0 0.0
    %125 = vmatpush1.msra.mxu0 0.0
    %126 = vmatprep.subr.mxu0 0.0
    %127 = vmatpush1.msra.mxu0 0.0
    %128 = vmatprep.subr.mxu0 0.0
    %129 = vmatpush1.msra.mxu0 0.0
    %130 = vmatprep.subr.mxu0 0.0
    %131 = vmatpush1.msra.mxu0 0.0
    %132 = vmatprep.subr.mxu0 0.0
    %133 = vmatpush1.msra.mxu0 0.0
    %134 = vmatprep.subr.mxu0 0.0
    %135 = vmatpush1.msra.mxu0 0.0
    %136 = vmatprep.subr.mxu0 0.0
    %137 = vmatpush1.msra.mxu0 0.0
    %138 = vmatprep.subr.mxu0 0.0
    %139 = vmatpush1.msra.mxu0 0.0
    %140 = vmatprep.subr.mxu0 0.0
    %141 = vmatpush1.msra.mxu0 0.0
    %142 = vmatprep.subr.mxu0 0.0
    %143 = vmatpush1.msra.mxu0 0.0
    %144 = vmatprep.subr.mxu0 0.0
    %145 = vmatpush1.msra.mxu0 0.0
    %146 = vmatprep.subr.mxu0 0.0
    %147 = vmatpush1.msra.mxu0 0.0
    %148 = vmatprep.subr.mxu0 0.0
    %149 = vmatpush1.msra.mxu0 0.0
    %150 = vmatprep.subr.mxu0 0.0
    %151 = vmatpush1.msra.mxu0 0.0
    %152 = vmatprep.subr.mxu0 0.0
    %153 = vmatpush1.msra.mxu0 0.0
    %154 = vmatprep.subr.mxu0 0.0
    %155 = vmatpush1.msra.mxu0 0.0
    %156 = vmatprep.subr.mxu0 0.0
    %157 = vmatpush1.msra.mxu0 0.0
    %158 = vmatprep.subr.mxu0 0.0
    %159 = vmatpush1.msra.mxu0 0.0
    %160 = vmatprep.subr.mxu0 0.0
    %161 = vmatpush1.msra.mxu0 0.0
    %162 = vmatprep.subr.mxu0 0.0
    %163 = vmatpush1.msra.mxu0 0.0
    %164 = vmatprep.subr.mxu0 0.0
    %165 = vmatpush1.msra.mxu0 0.0
    %166 = vmatprep.subr.mxu0 0.0
    %167 = vmatpush1.msra.mxu0 0.0
    %168 = vmatprep.subr.mxu0 0.0
    %169 = vmatpush1.msra.mxu0 0.0
    %170 = vmatprep.subr.mxu0 0.0
    %171 = vmatpush1.msra.mxu0 0.0
    %172 = vmatprep.subr.mxu0 0.0
    %173 = vmatpush1.msra.mxu0 0.0
    %174 = vmatprep.subr.mxu0 0.0
    %175 = vmatpush1.msra.mxu0 0.0
    %176 = vmatprep.subr.mxu0 0.0
    %177 = vmatpush1.msra.mxu0 0.0
    %178 = vmatprep.subr.mxu0 0.0
    %179 = vmatpush1.msra.mxu0 0.0
    %180 = vmatprep.subr.mxu0 0.0
    %181 = vmatpush1.msra.mxu0 0.0
    %182 = vmatprep.mubr.f32.mxu0 0.0
    %183 = vmatmul.mubr.f32.gmra.mrb[0].mxu0 %v95
    %v184 = vpop.f32.mrb[0].mxu0
    %v185 = vadd.f32 %v76, %v184
    %v186 = vpop.f32.mrb[0].mxu0
    %v187 = vadd.f32 %v80, %v186
    %188 = vmatprep.mubr.f32.mxu0 0.0
    %189 = vmatmul.mubr.f32.gmra.mrb[0].mxu0 %v98
    %v190 = vpop.f32.mrb[0].mxu0
    %v191 = vadd.f32 %v76, %v190
    %v192 = vpop.f32.mrb[0].mxu0
    %v193 = vadd.f32 %v80, %v192
    %194 = vmatprep.mubr.f32.mxu0 0.0
    %195 = vmatmul.mubr.f32.gmra.mrb[0].mxu0 %v101
    %v196 = vpop.f32.mrb[0].mxu0
    %v197 = vadd.f32 %v76, %v196
    %v198 = vpop.f32.mrb[0].mxu0
    %v199 = vadd.f32 %v80, %v198
    %200 = vmatprep.mubr.f32.mxu0 0.0
    %201 = vmatmul.mubr.f32.gmra.mrb[0].mxu0 %v104
    %v202 = vpop.f32.mrb[0].mxu0
    %v203 = vadd.f32 %v76, %v202
    %v204 = vpop.f32.mrb[0].mxu0
    %v205 = vadd.f32 %v80, %v204
    %206 = vmatprep.mubr.f32.mxu0 0.0
    %207 = vmatmul.mubr.f32.gmra.mrb[0].mxu0 %v107
    %v208 = vpop.f32.mrb[0].mxu0
    %v209 = vadd.f32 %v76, %v208
    %v210 = vpop.f32.mrb[0].mxu0
    %v211 = vadd.f32 %v80, %v210
    %212 = vmatprep.mubr.f32.mxu0 0.0
    %213 = vmatmul.mubr.f32.gmra.mrb[0].mxu0 %v110
    %v214 = vpop.f32.mrb[0].mxu0
    %v215 = vadd.f32 %v76, %v214
    %v216 = vpop.f32.mrb[0].mxu0
    %v217 = vadd.f32 %v80, %v216
    %218 = vmatprep.mubr.f32.mxu0 0.0
    %219 = vmatmul.mubr.f32.gmra.mrb[0].mxu0 %v113
    %v220 = vpop.f32.mrb[0].mxu0
    %v221 = vadd.f32 %v76, %v220
    %v222 = vpop.f32.mrb[0].mxu0
    %v223 = vadd.f32 %v80, %v222
    %224 = vmatprep.mubr.f32.mxu0 0.0
    %225 = vmatmul.mubr.f32.gmra.mrb[0].mxu0 %v116
    %v226 = vpop.f32.mrb[0].mxu0
    %v227 = vadd.f32 %v76, %v226
    %v228 = vpop.f32.mrb[0].mxu0
    %v229 = vadd.f32 %v80, %v228
    %230 = vdwg.mxu0
    %231 = vmatprep.subr.mxu0 %v66
    %232 = vmatpush1.msra.mxu0 %v65
    %233 = vmatprep.subr.mxu0 %v70
    %234 = vmatpush1.msra.mxu0 %v69
    %235 = vmatprep.subr.mxu0 0.0
    %236 = vmatpush1.msra.mxu0 0.0
    %237 = vmatprep.subr.mxu0 0.0
    %238 = vmatpush1.msra.mxu0 0.0
    %239 = vmatprep.subr.mxu0 0.0
    %240 = vmatpush1.msra.mxu0 0.0
    %241 = vmatprep.subr.mxu0 0.0
    %242 = vmatpush1.msra.mxu0 0.0
    %243 = vmatprep.subr.mxu0 0.0
    %244 = vmatpush1.msra.mxu0 0.0
    %245 = vmatprep.subr.mxu0 0.0
    %246 = vmatpush1.msra.mxu0 0.0
    %247 = vmatprep.subr.mxu0 0.0
    %248 = vmatpush1.msra.mxu0 0.0
    %249 = vmatprep.subr.mxu0 0.0
    %250 = vmatpush1.msra.mxu0 0.0
    %251 = vmatprep.subr.mxu0 0.0
    %252 = vmatpush1.msra.mxu0 0.0
    %253 = vmatprep.subr.mxu0 0.0
    %254 = vmatpush1.msra.mxu0 0.0
    %255 = vmatprep.subr.mxu0 0.0
    %256 = vmatpush1.msra.mxu0 0.0
    %257 = vmatprep.subr.mxu0 0.0
    %258 = vmatpush1.msra.mxu0 0.0
    %259 = vmatprep.subr.mxu0 0.0
    %260 = vmatpush1.msra.mxu0 0.0
    %261 = vmatprep.subr.mxu0 0.0
    %262 = vmatpush1.msra.mxu0 0.0
    %263 = vmatprep.subr.mxu0 0.0
    %264 = vmatpush1.msra.mxu0 0.0
    %265 = vmatprep.subr.mxu0 0.0
    %266 = vmatpush1.msra.mxu0 0.0
    %267 = vmatprep.subr.mxu0 0.0
    %268 = vmatpush1.msra.mxu0 0.0
    %269 = vmatprep.subr.mxu0 0.0
    %270 = vmatpush1.msra.mxu0 0.0
    %271 = vmatprep.subr.mxu0 0.0
    %272 = vmatpush1.msra.mxu0 0.0
    %273 = vmatprep.subr.mxu0 0.0
    %274 = vmatpush1.msra.mxu0 0.0
    %275 = vmatprep.subr.mxu0 0.0
    %276 = vmatpush1.msra.mxu0 0.0
    %277 = vmatprep.subr.mxu0 0.0
    %278 = vmatpush1.msra.mxu0 0.0
    %279 = vmatprep.subr.mxu0 0.0
    %280 = vmatpush1.msra.mxu0 0.0
    %281 = vmatprep.subr.mxu0 0.0
    %282 = vmatpush1.msra.mxu0 0.0
    %283 = vmatprep.subr.mxu0 0.0
    %284 = vmatpush1.msra.mxu0 0.0
    %285 = vmatprep.subr.mxu0 0.0
    %286 = vmatpush1.msra.mxu0 0.0
    %287 = vmatprep.subr.mxu0 0.0
    %288 = vmatpush1.msra.mxu0 0.0
    %289 = vmatprep.subr.mxu0 0.0
    %290 = vmatpush1.msra.mxu0 0.0
    %291 = vmatprep.subr.mxu0 0.0
    %292 = vmatpush1.msra.mxu0 0.0
    %293 = vmatprep.subr.mxu0 0.0
    %294 = vmatpush1.msra.mxu0 0.0
    %295 = vmatprep.mubr.f32.mxu0 0.0
    %296 = vmatmul.mubr.f32.gmra.mrb[0].mxu0 %v95
    %v297 = vpop.f32.mrb[0].mxu0
    %v298 = vadd.f32 %v84, %v297
    %v299 = vpop.f32.mrb[0].mxu0
    %v300 = vadd.f32 %v88, %v299
    %301 = vmatprep.mubr.f32.mxu0 0.0
    %302 = vmatmul.mubr.f32.gmra.mrb[0].mxu0 %v98
    %v303 = vpop.f32.mrb[0].mxu0
    %v304 = vadd.f32 %v84, %v303
    %v305 = vpop.f32.mrb[0].mxu0
    %v306 = vadd.f32 %v88, %v305
    %307 = vmatprep.mubr.f32.mxu0 0.0
    %308 = vmatmul.mubr.f32.gmra.mrb[0].mxu0 %v101
    %v309 = vpop.f32.mrb[0].mxu0
    %v310 = vadd.f32 %v84, %v309
    %v311 = vpop.f32.mrb[0].mxu0
    %v312 = vadd.f32 %v88, %v311
    %313 = vmatprep.mubr.f32.mxu0 0.0
    %314 = vmatmul.mubr.f32.gmra.mrb[0].mxu0 %v104
    %v315 = vpop.f32.mrb[0].mxu0
    %v316 = vadd.f32 %v84, %v315
    %v317 = vpop.f32.mrb[0].mxu0
    %v318 = vadd.f32 %v88, %v317
    %319 = vmatprep.mubr.f32.mxu0 0.0
    %320 = vmatmul.mubr.f32.gmra.mrb[0].mxu0 %v107
    %v321 = vpop.f32.mrb[0].mxu0
    %v322 = vadd.f32 %v84, %v321
    %v323 = vpop.f32.mrb[0].mxu0
    %v324 = vadd.f32 %v88, %v323
    %325 = vmatprep.mubr.f32.mxu0 0.0
    %326 = vmatmul.mubr.f32.gmra.mrb[0].mxu0 %v110
    %v327 = vpop.f32.mrb[0].mxu0
    %v328 = vadd.f32 %v84, %v327
    %v329 = vpop.f32.mrb[0].mxu0
    %v330 = vadd.f32 %v88, %v329
    %331 = vmatprep.mubr.f32.mxu0 0.0
    %332 = vmatmul.mubr.f32.gmra.mrb[0].mxu0 %v113
    %v333 = vpop.f32.mrb[0].mxu0
    %v334 = vadd.f32 %v84, %v333
    %v335 = vpop.f32.mrb[0].mxu0
    %v336 = vadd.f32 %v88, %v335
    %337 = vmatprep.mubr.f32.mxu0 0.0
    %338 = vmatmul.mubr.f32.gmra.mrb[0].mxu0 %v116
    %v339 = vpop.f32.mrb[0].mxu0
    %v340 = vadd.f32 %v84, %v339
    %v341 = vpop.f32.mrb[0].mxu0
    %v342 = vadd.f32 %v88, %v341
    %343 = vdwg.mxu0
    %344 = vst [vmem:[#allocation2] sm:$0xff] %v185
    %345 = vst [vmem:[#allocation2 + $0x8] sm:$0xff] %v187
    %346 = vst [vmem:[#allocation2 + $0x10] sm:$0xff] %v298
    %347 = vst [vmem:[#allocation2 + $0x18] sm:$0xff] %v300
    %348 = vst [vmem:[#allocation2 + $0x20] sm:$0xff] %v191
    %349 = vst [vmem:[#allocation2 + $0x28] sm:$0xff] %v193
    %350 = vst [vmem:[#allocation2 + $0x30] sm:$0xff] %v304
    %351 = vst [vmem:[#allocation2 + $0x38] sm:$0xff] %v306
    %352 = vst [vmem:[#allocation2 + $0x40] sm:$0xff] %v197
    %353 = vst [vmem:[#allocation2 + $0x48] sm:$0xff] %v199
    %354 = vst [vmem:[#allocation2 + $0x50] sm:$0xff] %v310
    %355 = vst [vmem:[#allocation2 + $0x58] sm:$0xff] %v312
    %356 = vst [vmem:[#allocation2 + $0x60] sm:$0xff] %v203
    %357 = vst [vmem:[#allocation2 + $0x68] sm:$0xff] %v205
    %358 = vst [vmem:[#allocation2 + $0x70] sm:$0xff] %v316
    %359 = vst [vmem:[#allocation2 + $0x78] sm:$0xff] %v318
    %360 = vst [vmem:[#allocation2 + $0x80] sm:$0xff] %v209
    %361 = vst [vmem:[#allocation2 + $0x88] sm:$0xff] %v211
    %362 = vst [vmem:[#allocation2 + $0x90] sm:$0xff] %v322
    %363 = vst [vmem:[#allocation2 + $0x98] sm:$0xff] %v324
    %364 = vst [vmem:[#allocation2 + $0xa0] sm:$0xff] %v215
    %365 = vst [vmem:[#allocation2 + $0xa8] sm:$0xff] %v217
    %366 = vst [vmem:[#allocation2 + $0xb0] sm:$0xff] %v328
    %367 = vst [vmem:[#allocation2 + $0xb8] sm:$0xff] %v330
    %368 = vst [vmem:[#allocation2 + $0xc0] sm:$0xff] %v221
    %369 = vst [vmem:[#allocation2 + $0xc8] sm:$0xff] %v223
    %370 = vst [vmem:[#allocation2 + $0xd0] sm:$0xff] %v334
    %371 = vst [vmem:[#allocation2 + $0xd8] sm:$0xff] %v336
    %372 = vst [vmem:[#allocation2 + $0xe0] sm:$0xff] %v227
    %373 = vst [vmem:[#allocation2 + $0xe8] sm:$0xff] %v229
    %374 = vst [vmem:[#allocation2 + $0xf0] sm:$0xff] %v340
    %375 = vst [vmem:[#allocation2 + $0xf8] sm:$0xff] %v342
    %v376 = vld [vmem:[#allocation5] sm:$0xff]
    %v377 = vld [vmem:[#allocation5 + $0x8] sm:$0xff]
    %v378 = vld [vmem:[#allocation5 + $0x10] sm:$0xff]
    %v379 = vld [vmem:[#allocation5 + $0x18] sm:$0xff]
    %v380 = vld [vmem:[#allocation5 + $0x20] sm:$0xff]
    %v381 = vld [vmem:[#allocation5 + $0x28] sm:$0xff]
    %v382 = vld [vmem:[#allocation5 + $0x30] sm:$0xff]
    %v383 = vld [vmem:[#allocation5 + $0x38] sm:$0xff]
    %v384 = vld [vmem:[#allocation5 + $0x40] sm:$0xff]
    %v385 = vld [vmem:[#allocation5 + $0x48] sm:$0xff]
    %v386 = vld [vmem:[#allocation5 + $0x50] sm:$0xff]
    %v387 = vld [vmem:[#allocation5 + $0x58] sm:$0xff]
    %v388 = vld [vmem:[#allocation5 + $0x60] sm:$0xff]
    %v389 = vld [vmem:[#allocation5 + $0x68] sm:$0xff]
    %v390 = vld [vmem:[#allocation5 + $0x70] sm:$0xff]
    %v391 = vld [vmem:[#allocation5 + $0x78] sm:$0xff]
    %v392 = vld [vmem:[#allocation5 + $0x80] sm:$0xff]
    %v393 = vld [vmem:[#allocation5 + $0x88] sm:$0xff]
    %v394 = vld [vmem:[#allocation5 + $0x90] sm:$0xff]
    %v395 = vld [vmem:[#allocation5 + $0x98] sm:$0xff]
    %v396 = vld [vmem:[#allocation5 + $0xa0] sm:$0xff]
    %v397 = vld [vmem:[#allocation5 + $0xa8] sm:$0xff]
    %v398 = vld [vmem:[#allocation5 + $0xb0] sm:$0xff]
    %v399 = vld [vmem:[#allocation5 + $0xb8] sm:$0xff]
    %v400 = vld [vmem:[#allocation5 + $0xc0] sm:$0xff]
    %v401 = vld [vmem:[#allocation5 + $0xc8] sm:$0xff]
    %v402 = vld [vmem:[#allocation5 + $0xd0] sm:$0xff]
    %v403 = vld [vmem:[#allocation5 + $0xd8] sm:$0xff]
    %v404 = vld [vmem:[#allocation5 + $0xe0] sm:$0xff]
    %v405 = vld [vmem:[#allocation5 + $0xe8] sm:$0xff]
    %v406 = vld [vmem:[#allocation5 + $0xf0] sm:$0xff]
    %v407 = vld [vmem:[#allocation5 + $0xf8] sm:$0xff]
    %v408 = vld [vmem:[#allocation5 + $0x100] sm:$0xff]
    %v409 = vld [vmem:[#allocation5 + $0x108] sm:$0xff]
    %v410 = vld [vmem:[#allocation5 + $0x110] sm:$0xff]
    %v411 = vld [vmem:[#allocation5 + $0x118] sm:$0xff]
    %v412 = vld [vmem:[#allocation5 + $0x120] sm:$0xff]
    %v413 = vld [vmem:[#allocation5 + $0x128] sm:$0xff]
    %v414 = vld [vmem:[#allocation5 + $0x130] sm:$0xff]
    %v415 = vld [vmem:[#allocation5 + $0x138] sm:$0xff]
    %v416 = vld [vmem:[#allocation5 + $0x140] sm:$0xff]
    %v417 = vld [vmem:[#allocation5 + $0x148] sm:$0xff]
    %v418 = vld [vmem:[#allocation5 + $0x150] sm:$0xff]
    %v419 = vld [vmem:[#allocation5 + $0x158] sm:$0xff]
    %v420 = vld [vmem:[#allocation5 + $0x160] sm:$0xff]
    %v421 = vld [vmem:[#allocation5 + $0x168] sm:$0xff]
    %v422 = vld [vmem:[#allocation5 + $0x170] sm:$0xff]
    %v423 = vld [vmem:[#allocation5 + $0x178] sm:$0xff]
    %v424 = vld [vmem:[#allocation5 + $0x180] sm:$0xff]
    %v425 = vld [vmem:[#allocation5 + $0x188] sm:$0xff]
    %v426 = vld [vmem:[#allocation5 + $0x190] sm:$0xff]
    %v427 = vld [vmem:[#allocation5 + $0x198] sm:$0xff]
    %v428 = vld [vmem:[#allocation5 + $0x1a0] sm:$0xff]
    %v429 = vld [vmem:[#allocation5 + $0x1a8] sm:$0xff]
    %v430 = vld [vmem:[#allocation5 + $0x1b0] sm:$0xff]
    %v431 = vld [vmem:[#allocation5 + $0x1b8] sm:$0xff]
    %v432 = vld [vmem:[#allocation5 + $0x1c0] sm:$0xff]
    %v433 = vld [vmem:[#allocation5 + $0x1c8] sm:$0xff]
    %v434 = vld [vmem:[#allocation5 + $0x1d0] sm:$0xff]
    %v435 = vld [vmem:[#allocation5 + $0x1d8] sm:$0xff]
    %v436 = vld [vmem:[#allocation5 + $0x1e0] sm:$0xff]
    %v437 = vld [vmem:[#allocation5 + $0x1e8] sm:$0xff]
    %v438 = vld [vmem:[#allocation5 + $0x1f0] sm:$0xff]
    %v439 = vld [vmem:[#allocation5 + $0x1f8] sm:$0xff]
    %v440 = vld [vmem:[#allocation5 + $0x200] sm:$0xff]
    %v441 = vld [vmem:[#allocation5 + $0x208] sm:$0xff]
    %v442 = vld [vmem:[#allocation5 + $0x210] sm:$0xff]
    %v443 = vld [vmem:[#allocation5 + $0x218] sm:$0xff]
    %v444 = vld [vmem:[#allocation5 + $0x220] sm:$0xff]
    %v445 = vld [vmem:[#allocation5 + $0x228] sm:$0xff]
    %v446 = vld [vmem:[#allocation5 + $0x230] sm:$0xff]
    %v447 = vld [vmem:[#allocation5 + $0x238] sm:$0xff]
    %v448 = vld [vmem:[#allocation5 + $0x240] sm:$0xff]
    %v449 = vld [vmem:[#allocation5 + $0x248] sm:$0xff]
    %v450 = vld [vmem:[#allocation5 + $0x250] sm:$0xff]
    %v451 = vld [vmem:[#allocation5 + $0x258] sm:$0xff]
    %v452 = vld [vmem:[#allocation5 + $0x260] sm:$0xff]
    %v453 = vld [vmem:[#allocation5 + $0x268] sm:$0xff]
    %v454 = vld [vmem:[#allocation5 + $0x270] sm:$0xff]
    %v455 = vld [vmem:[#allocation5 + $0x278] sm:$0xff]
    %v456 = vld [vmem:[#allocation5 + $0x280] sm:$0xff]
    %v457 = vld [vmem:[#allocation5 + $0x288] sm:$0xff]
    %v458 = vld [vmem:[#allocation5 + $0x290] sm:$0xff]
    %v459 = vld [vmem:[#allocation5 + $0x298] sm:$0xff]
    %v460 = vld [vmem:[#allocation5 + $0x2a0] sm:$0xff]
    %v461 = vld [vmem:[#allocation5 + $0x2a8] sm:$0xff]
    %v462 = vld [vmem:[#allocation5 + $0x2b0] sm:$0xff]
    %v463 = vld [vmem:[#allocation5 + $0x2b8] sm:$0xff]
    %v464 = vld [vmem:[#allocation5 + $0x2c0] sm:$0xff]
    %v465 = vld [vmem:[#allocation5 + $0x2c8] sm:$0xff]
    %v466 = vld [vmem:[#allocation5 + $0x2d0] sm:$0xff]
    %v467 = vld [vmem:[#allocation5 + $0x2d8] sm:$0xff]
    %v468 = vld [vmem:[#allocation5 + $0x2e0] sm:$0xff]
    %v469 = vld [vmem:[#allocation5 + $0x2e8] sm:$0xff]
    %v470 = vld [vmem:[#allocation5 + $0x2f0] sm:$0xff]
    %v471 = vld [vmem:[#allocation5 + $0x2f8] sm:$0xff]
    %v472 = vld [vmem:[#allocation5 + $0x300] sm:$0xff]
    %v473 = vld [vmem:[#allocation5 + $0x308] sm:$0xff]
    %v474 = vld [vmem:[#allocation5 + $0x310] sm:$0xff]
    %v475 = vld [vmem:[#allocation5 + $0x318] sm:$0xff]
    %v476 = vld [vmem:[#allocation5 + $0x320] sm:$0xff]
    %v477 = vld [vmem:[#allocation5 + $0x328] sm:$0xff]
    %v478 = vld [vmem:[#allocation5 + $0x330] sm:$0xff]
    %v479 = vld [vmem:[#allocation5 + $0x338] sm:$0xff]
    %v480 = vld [vmem:[#allocation5 + $0x340] sm:$0xff]
    %v481 = vld [vmem:[#allocation5 + $0x348] sm:$0xff]
    %v482 = vld [vmem:[#allocation5 + $0x350] sm:$0xff]
    %v483 = vld [vmem:[#allocation5 + $0x358] sm:$0xff]
    %v484 = vld [vmem:[#allocation5 + $0x360] sm:$0xff]
    %v485 = vld [vmem:[#allocation5 + $0x368] sm:$0xff]
    %v486 = vld [vmem:[#allocation5 + $0x370] sm:$0xff]
    %v487 = vld [vmem:[#allocation5 + $0x378] sm:$0xff]
    %v488 = vld [vmem:[#allocation5 + $0x380] sm:$0xff]
    %v489 = vld [vmem:[#allocation5 + $0x388] sm:$0xff]
    %v490 = vld [vmem:[#allocation5 + $0x390] sm:$0xff]
    %v491 = vld [vmem:[#allocation5 + $0x398] sm:$0xff]
    %v492 = vld [vmem:[#allocation5 + $0x3a0] sm:$0xff]
    %v493 = vld [vmem:[#allocation5 + $0x3a8] sm:$0xff]
    %v494 = vld [vmem:[#allocation5 + $0x3b0] sm:$0xff]
    %v495 = vld [vmem:[#allocation5 + $0x3b8] sm:$0xff]
    %v496 = vld [vmem:[#allocation5 + $0x3c0] sm:$0xff]
    %v497 = vld [vmem:[#allocation5 + $0x3c8] sm:$0xff]
    %v498 = vld [vmem:[#allocation5 + $0x3d0] sm:$0xff]
    %v499 = vld [vmem:[#allocation5 + $0x3d8] sm:$0xff]
    %v500 = vld [vmem:[#allocation5 + $0x3e0] sm:$0xff]
    %v501 = vld [vmem:[#allocation5 + $0x3e8] sm:$0xff]
    %v502 = vld [vmem:[#allocation5 + $0x3f0] sm:$0xff]
    %v503 = vld [vmem:[#allocation5 + $0x3f8] sm:$0xff]
    %v504 = vld [vmem:[#allocation8] sm:$0xff]
    %v505 = vld [vmem:[#allocation8 + $0x8] sm:$0xff]
    %v506 = vld [vmem:[#allocation8 + $0x10] sm:$0xff]
    %v507 = vld [vmem:[#allocation8 + $0x18] sm:$0xff]
    %v508 = vld [vmem:[#allocation8 + $0x20] sm:$0xff]
    %v509 = vld [vmem:[#allocation8 + $0x28] sm:$0xff]
    %v510 = vld [vmem:[#allocation8 + $0x30] sm:$0xff]
    %v511 = vld [vmem:[#allocation8 + $0x38] sm:$0xff]
    %v512 = vld [vmem:[#allocation8 + $0x40] sm:$0xff]
    %v513 = vld [vmem:[#allocation8 + $0x48] sm:$0xff]
    %v514 = vld [vmem:[#allocation8 + $0x50] sm:$0xff]
    %v515 = vld [vmem:[#allocation8 + $0x58] sm:$0xff]
    %v516 = vld [vmem:[#allocation8 + $0x60] sm:$0xff]
    %v517 = vld [vmem:[#allocation8 + $0x68] sm:$0xff]
    %v518 = vld [vmem:[#allocation8 + $0x70] sm:$0xff]
    %v519 = vld [vmem:[#allocation8 + $0x78] sm:$0xff]
    %v520 = vld [vmem:[#allocation3] sm:$0xff]
    %v521 = vld [vmem:[#allocation4] sm:$0xff]
    %v522 = vld [vmem:[#allocation2] sm:$0xff]
    %v523 = vld [vmem:[#allocation2 + $0x8] sm:$0xff]
    %v524 = vld [vmem:[#allocation2 + $0x10] sm:$0xff]
    %v525 = vld [vmem:[#allocation2 + $0x18] sm:$0xff]
    %526 = vmatprep.subr.mxu0 %v377
    %527 = vmatpush1.msra.mxu0 %v376
    %528 = vmatprep.subr.mxu0 %v381
    %529 = vmatpush1.msra.mxu0 %v380
    %530 = vmatprep.subr.mxu0 %v385
    %531 = vmatpush1.msra.mxu0 %v384
    %532 = vmatprep.subr.mxu0 %v389
    %533 = vmatpush1.msra.mxu0 %v388
    %534 = vmatprep.subr.mxu0 %v393
    %535 = vmatpush1.msra.mxu0 %v392
    %536 = vmatprep.subr.mxu0 %v397
    %537 = vmatpush1.msra.mxu0 %v396
    %538 = vmatprep.subr.mxu0 %v401
    %539 = vmatpush1.msra.mxu0 %v400
    %540 = vmatprep.subr.mxu0 %v405
    %541 = vmatpush1.msra.mxu0 %v404
    %542 = vmatprep.subr.mxu0 %v409
    %543 = vmatpush1.msra.mxu0 %v408
    %544 = vmatprep.subr.mxu0 %v413
    %545 = vmatpush1.msra.mxu0 %v412
    %546 = vmatprep.subr.mxu0 %v417
    %547 = vmatpush1.msra.mxu0 %v416
    %548 = vmatprep.subr.mxu0 %v421
    %549 = vmatpush1.msra.mxu0 %v420
    %550 = vmatprep.subr.mxu0 %v425
    %551 = vmatpush1.msra.mxu0 %v424
    %552 = vmatprep.subr.mxu0 %v429
    %553 = vmatpush1.msra.mxu0 %v428
    %554 = vmatprep.subr.mxu0 %v433
    %555 = vmatpush1.msra.mxu0 %v432
    %556 = vmatprep.subr.mxu0 %v437
    %557 = vmatpush1.msra.mxu0 %v436
    %558 = vmatprep.subr.mxu0 %v441
    %559 = vmatpush1.msra.mxu0 %v440
    %560 = vmatprep.subr.mxu0 %v445
    %561 = vmatpush1.msra.mxu0 %v444
    %562 = vmatprep.subr.mxu0 %v449
    %563 = vmatpush1.msra.mxu0 %v448
    %564 = vmatprep.subr.mxu0 %v453
    %565 = vmatpush1.msra.mxu0 %v452
    %566 = vmatprep.subr.mxu0 %v457
    %567 = vmatpush1.msra.mxu0 %v456
    %568 = vmatprep.subr.mxu0 %v461
    %569 = vmatpush1.msra.mxu0 %v460
    %570 = vmatprep.subr.mxu0 %v465
    %571 = vmatpush1.msra.mxu0 %v464
    %572 = vmatprep.subr.mxu0 %v469
    %573 = vmatpush1.msra.mxu0 %v468
    %574 = vmatprep.subr.mxu0 %v473
    %575 = vmatpush1.msra.mxu0 %v472
    %576 = vmatprep.subr.mxu0 %v477
    %577 = vmatpush1.msra.mxu0 %v476
    %578 = vmatprep.subr.mxu0 %v481
    %579 = vmatpush1.msra.mxu0 %v480
    %580 = vmatprep.subr.mxu0 %v485
    %581 = vmatpush1.msra.mxu0 %v484
    %582 = vmatprep.subr.mxu0 %v489
    %583 = vmatpush1.msra.mxu0 %v488
    %584 = vmatprep.subr.mxu0 %v493
    %585 = vmatpush1.msra.mxu0 %v492
    %586 = vmatprep.subr.mxu0 %v497
    %587 = vmatpush1.msra.mxu0 %v496
    %588 = vmatprep.subr.mxu0 %v501
    %589 = vmatpush1.msra.mxu0 %v500
    %590 = vmatprep.mubr.f32.mxu0 %v521
    %591 = vmatmul.mubr.f32.gmra.mrb[0].mxu0 %v520
    %v592 = vpop.f32.mrb[0].mxu0
    %v593 = vadd.f32 0.0, %v592
    %v594 = vpop.f32.mrb[0].mxu0
    %v595 = vadd.f32 0.0, %v594
    %596 = vdwg.mxu0
    %597 = vmatprep.subr.mxu0 %v379
    %598 = vmatpush1.msra.mxu0 %v378
    %599 = vmatprep.subr.mxu0 %v383
    %600 = vmatpush1.msra.mxu0 %v382
    %601 = vmatprep.subr.mxu0 %v387
    %602 = vmatpush1.msra.mxu0 %v386
    %603 = vmatprep.subr.mxu0 %v391
    %604 = vmatpush1.msra.mxu0 %v390
    %605 = vmatprep.subr.mxu0 %v395
    %606 = vmatpush1.msra.mxu0 %v394
    %607 = vmatprep.subr.mxu0 %v399
    %608 = vmatpush1.msra.mxu0 %v398
    %609 = vmatprep.subr.mxu0 %v403
    %610 = vmatpush1.msra.mxu0 %v402
    %611 = vmatprep.subr.mxu0 %v407
    %612 = vmatpush1.msra.mxu0 %v406
    %613 = vmatprep.subr.mxu0 %v411
    %614 = vmatpush1.msra.mxu0 %v410
    %615 = vmatprep.subr.mxu0 %v415
    %616 = vmatpush1.msra.mxu0 %v414
    %617 = vmatprep.subr.mxu0 %v419
    %618 = vmatpush1.msra.mxu0 %v418
    %619 = vmatprep.subr.mxu0 %v423
    %620 = vmatpush1.msra.mxu0 %v422
    %621 = vmatprep.subr.mxu0 %v427
    %622 = vmatpush1.msra.mxu0 %v426
    %623 = vmatprep.subr.mxu0 %v431
    %624 = vmatpush1.msra.mxu0 %v430
    %625 = vmatprep.subr.mxu0 %v435
    %626 = vmatpush1.msra.mxu0 %v434
    %627 = vmatprep.subr.mxu0 %v439
    %628 = vmatpush1.msra.mxu0 %v438
    %629 = vmatprep.subr.mxu0 %v443
    %630 = vmatpush1.msra.mxu0 %v442
    %631 = vmatprep.subr.mxu0 %v447
    %632 = vmatpush1.msra.mxu0 %v446
    %633 = vmatprep.subr.mxu0 %v451
    %634 = vmatpush1.msra.mxu0 %v450
    %635 = vmatprep.subr.mxu0 %v455
    %636 = vmatpush1.msra.mxu0 %v454
    %637 = vmatprep.subr.mxu0 %v459
    %638 = vmatpush1.msra.mxu0 %v458
    %639 = vmatprep.subr.mxu0 %v463
    %640 = vmatpush1.msra.mxu0 %v462
    %641 = vmatprep.subr.mxu0 %v467
    %642 = vmatpush1.msra.mxu0 %v466
    %643 = vmatprep.subr.mxu0 %v471
    %644 = vmatpush1.msra.mxu0 %v470
    %645 = vmatprep.subr.mxu0 %v475
    %646 = vmatpush1.msra.mxu0 %v474
    %647 = vmatprep.subr.mxu0 %v479
    %648 = vmatpush1.msra.mxu0 %v478
    %649 = vmatprep.subr.mxu0 %v483
    %650 = vmatpush1.msra.mxu0 %v482
    %651 = vmatprep.subr.mxu0 %v487
    %652 = vmatpush1.msra.mxu0 %v486
    %653 = vmatprep.subr.mxu0 %v491
    %654 = vmatpush1.msra.mxu0 %v490
    %655 = vmatprep.subr.mxu0 %v495
    %656 = vmatpush1.msra.mxu0 %v494
    %657 = vmatprep.subr.mxu0 %v499
    %658 = vmatpush1.msra.mxu0 %v498
    %659 = vmatprep.subr.mxu0 %v503
    %660 = vmatpush1.msra.mxu0 %v502
    %661 = vmatprep.mubr.f32.mxu0 %v521
    %662 = vmatmul.mubr.f32.gmra.mrb[0].mxu0 %v520
    %v663 = vpop.f32.mrb[0].mxu0
    %v664 = vadd.f32 0.0, %v663
    %v665 = vpop.f32.mrb[0].mxu0
    %v666 = vadd.f32 0.0, %v665
    %667 = vdwg.mxu0
    %v668 = vadd.f32 %v522, %v593
    %v669 = vadd.f32 %v523, %v595
    %v670 = vadd.f32 %v524, %v664
    %v671 = vadd.f32 %v525, %v666
    %v672 = vxor.u32 %v668, 2147483648
    %v673 = vmul.f32 %v672, 1.442695
    %v674 = vpow.pop %v673
    %v675 = vadd.f32 %v674, 1.0
    %v676 = vrcp.pop %v675
    %v677 = vmul.f32 1.0, %v676
    %v678 = vxor.u32 %v669, 2147483648
    %v679 = vmul.f32 %v678, 1.442695
    %v680 = vpow.pop %v679
    %v681 = vadd.f32 %v680, 1.0
    %v682 = vrcp.pop %v681
    %v683 = vmul.f32 1.0, %v682
    %v684 = vtanh.pop %v670
    %v685 = vmul.f32 %v683, %v521
    %v686 = vmul.f32 %v677, %v684
    %v687 = vadd.f32 %v685, %v686
    %688 = vmatprep.subr.mxu0 0.0
    %689 = vmatpush1.msra.mxu0 %v504
    %690 = vmatprep.subr.mxu0 0.0
    %691 = vmatpush1.msra.mxu0 %v505
    %692 = vmatprep.subr.mxu0 0.0
    %693 = vmatpush1.msra.mxu0 %v506
    %694 = vmatprep.subr.mxu0 0.0
    %695 = vmatpush1.msra.mxu0 %v507
    %696 = vmatprep.subr.mxu0 0.0
    %697 = vmatpush1.msra.mxu0 %v508
    %698 = vmatprep.subr.mxu0 0.0
    %699 = vmatpush1.msra.mxu0 %v509
    %700 = vmatprep.subr.mxu0 0.0
    %701 = vmatpush1.msra.mxu0 %v510
    %702 = vmatprep.subr.mxu0 0.0
    %703 = vmatpush1.msra.mxu0 %v511
    %704 = vmatprep.subr.mxu0 0.0
    %705 = vmatpush1.msra.mxu0 %v512
    %706 = vmatprep.subr.mxu0 0.0
    %707 = vmatpush1.msra.mxu0 %v513
    %708 = vmatprep.subr.mxu0 0.0
    %709 = vmatpush1.msra.mxu0 %v514
    %710 = vmatprep.subr.mxu0 0.0
    %711 = vmatpush1.msra.mxu0 %v515
    %712 = vmatprep.subr.mxu0 0.0
    %713 = vmatpush1.msra.mxu0 %v516
    %714 = vmatprep.subr.mxu0 0.0
    %715 = vmatpush1.msra.mxu0 %v517
    %716 = vmatprep.subr.mxu0 0.0
    %717 = vmatpush1.msra.mxu0 %v518
    %718 = vmatprep.subr.mxu0 0.0
    %719 = vmatpush1.msra.mxu0 %v519
    %720 = vmatprep.subr.mxu0 0.0
    %721 = vmatpush1.msra.mxu0 0.0
    %722 = vmatprep.subr.mxu0 0.0
    %723 = vmatpush1.msra.mxu0 0.0
    %724 = vmatprep.subr.mxu0 0.0
    %725 = vmatpush1.msra.mxu0 0.0
    %726 = vmatprep.subr.mxu0 0.0
    %727 = vmatpush1.msra.mxu0 0.0
    %728 = vmatprep.subr.mxu0 0.0
    %729 = vmatpush1.msra.mxu0 0.0
    %730 = vmatprep.subr.mxu0 0.0
    %731 = vmatpush1.msra.mxu0 0.0
    %732 = vmatprep.subr.mxu0 0.0
    %733 = vmatpush1.msra.mxu0 0.0
    %734 = vmatprep.subr.mxu0 0.0
    %735 = vmatpush1.msra.mxu0 0.0
    %736 = vmatprep.subr.mxu0 0.0
    %737 = vmatpush1.msra.mxu0 0.0
    %738 = vmatprep.subr.mxu0 0.0
    %739 = vmatpush1.msra.mxu0 0.0
    %740 = vmatprep.subr.mxu0 0.0
    %741 = vmatpush1.msra.mxu0 0.0
    %742 = vmatprep.subr.mxu0 0.0
    %743 = vmatpush1.msra.mxu0 0.0
    %744 = vmatprep.subr.mxu0 0.0
    %745 = vmatpush1.msra.mxu0 0.0
    %746 = vmatprep.subr.mxu0 0.0
    %747 = vmatpush1.msra.mxu0 0.0
    %748 = vmatprep.subr.mxu0 0.0
    %749 = vmatpush1.msra.mxu0 0.0
    %750 = vmatprep.subr.mxu0 0.0
    %751 = vmatpush1.msra.mxu0 0.0
    %752 = vmatprep.mubr.f32.mxu0 0.0
    %753 = vmatmul.mubr.f32.gmra.mrb[0].mxu0 %v687
    %v754 = vpop.f32.mrb[0].mxu0
    %v755 = vadd.f32 0.0, %v754
    %v756 = vpop.f32.mrb[0].mxu0
    %757 = vdwg.mxu0
    %v758 = vadd.f32 %v671, %v755
    %v759 = vxor.u32 %v758, 2147483648
    %v760 = vmul.f32 %v759, 1.442695
    %v761 = vpow.pop %v760
    %v762 = vadd.f32 %v761, 1.0
    %v763 = vrcp.pop %v762
    %v764 = vmul.f32 1.0, %v763
    %v765 = vtanh.pop %v687
    %v766 = vmul.f32 %v764, %v765
    %s767 = scalar_lea.vmem [#allocation2], 32
    %v768 = vld [vmem:[%s767] sm:$0xff]
    %v769 = vld [vmem:[%s767 + $0x8] sm:$0xff]
    %v770 = vld [vmem:[%s767 + $0x10] sm:$0xff]
    %v771 = vld [vmem:[%s767 + $0x18] sm:$0xff]
    %772 = vmatprep.subr.mxu0 %v377
    %773 = vmatpush1.msra.mxu0 %v376
    %774 = vmatprep.subr.mxu0 %v381
    %775 = vmatpush1.msra.mxu0 %v380
    %776 = vmatprep.subr.mxu0 %v385
    %777 = vmatpush1.msra.mxu0 %v384
    %778 = vmatprep.subr.mxu0 %v389
    %779 = vmatpush1.msra.mxu0 %v388
    %780 = vmatprep.subr.mxu0 %v393
    %781 = vmatpush1.msra.mxu0 %v392
    %782 = vmatprep.subr.mxu0 %v397
    %783 = vmatpush1.msra.mxu0 %v396
    %784 = vmatprep.subr.mxu0 %v401
    %785 = vmatpush1.msra.mxu0 %v400
    %786 = vmatprep.subr.mxu0 %v405
    %787 = vmatpush1.msra.mxu0 %v404
    %788 = vmatprep.subr.mxu0 %v409
    %789 = vmatpush1.msra.mxu0 %v408
    %790 = vmatprep.subr.mxu0 %v413
    %791 = vmatpush1.msra.mxu0 %v412
    %792 = vmatprep.subr.mxu0 %v417
    %793 = vmatpush1.msra.mxu0 %v416
    %794 = vmatprep.subr.mxu0 %v421
    %795 = vmatpush1.msra.mxu0 %v420
    %796 = vmatprep.subr.mxu0 %v425
    %797 = vmatpush1.msra.mxu0 %v424
    %798 = vmatprep.subr.mxu0 %v429
    %799 = vmatpush1.msra.mxu0 %v428
    %800 = vmatprep.subr.mxu0 %v433
    %801 = vmatpush1.msra.mxu0 %v432
    %802 = vmatprep.subr.mxu0 %v437
    %803 = vmatpush1.msra.mxu0 %v436
    %804 = vmatprep.subr.mxu0 %v441
    %805 = vmatpush1.msra.mxu0 %v440
    %806 = vmatprep.subr.mxu0 %v445
    %807 = vmatpush1.msra.mxu0 %v444
    %808 = vmatprep.subr.mxu0 %v449
    %809 = vmatpush1.msra.mxu0 %v448
    %810 = vmatprep.subr.mxu0 %v453
    %811 = vmatpush1.msra.mxu0 %v452
    %812 = vmatprep.subr.mxu0 %v457
    %813 = vmatpush1.msra.mxu0 %v456
    %814 = vmatprep.subr.mxu0 %v461
    %815 = vmatpush1.msra.mxu0 %v460
    %816 = vmatprep.subr.mxu0 %v465
    %817 = vmatpush1.msra.mxu0 %v464
    %818 = vmatprep.subr.mxu0 %v469
    %819 = vmatpush1.msra.mxu0 %v468
    %820 = vmatprep.subr.mxu0 %v473
    %821 = vmatpush1.msra.mxu0 %v472
    %822 = vmatprep.subr.mxu0 %v477
    %823 = vmatpush1.msra.mxu0 %v476
    %824 = vmatprep.subr.mxu0 %v481
    %825 = vmatpush1.msra.mxu0 %v480
    %826 = vmatprep.subr.mxu0 %v485
    %827 = vmatpush1.msra.mxu0 %v484
    %828 = vmatprep.subr.mxu0 %v489
    %829 = vmatpush1.msra.mxu0 %v488
    %830 = vmatprep.subr.mxu0 %v493
    %831 = vmatpush1.msra.mxu0 %v492
    %832 = vmatprep.subr.mxu0 %v497
    %833 = vmatpush1.msra.mxu0 %v496
    %834 = vmatprep.subr.mxu0 %v501
    %835 = vmatpush1.msra.mxu0 %v500
    %836 = vmatprep.mubr.f32.mxu0 %v687
    %837 = vmatmul.mubr.f32.gmra.mrb[0].mxu0 %v766
    %v838 = vpop.f32.mrb[0].mxu0
    %v839 = vadd.f32 0.0, %v838
    %v840 = vpop.f32.mrb[0].mxu0
    %v841 = vadd.f32 0.0, %v840
    %842 = vdwg.mxu0
    %843 = vmatprep.subr.mxu0 %v379
    %844 = vmatpush1.msra.mxu0 %v378
    %845 = vmatprep.subr.mxu0 %v383
    %846 = vmatpush1.msra.mxu0 %v382
    %847 = vmatprep.subr.mxu0 %v387
    %848 = vmatpush1.msra.mxu0 %v386
    %849 = vmatprep.subr.mxu0 %v391
    %850 = vmatpush1.msra.mxu0 %v390
    %851 = vmatprep.subr.mxu0 %v395
    %852 = vmatpush1.msra.mxu0 %v394
    %853 = vmatprep.subr.mxu0 %v399
    %854 = vmatpush1.msra.mxu0 %v398
    %855 = vmatprep.subr.mxu0 %v403
    %856 = vmatpush1.msra.mxu0 %v402
    %857 = vmatprep.subr.mxu0 %v407
    %858 = vmatpush1.msra.mxu0 %v406
    %859 = vmatprep.subr.mxu0 %v411
    %860 = vmatpush1.msra.mxu0 %v410
    %861 = vmatprep.subr.mxu0 %v415
    %862 = vmatpush1.msra.mxu0 %v414
    %863 = vmatprep.subr.mxu0 %v419
    %864 = vmatpush1.msra.mxu0 %v418
    %865 = vmatprep.subr.mxu0 %v423
    %866 = vmatpush1.msra.mxu0 %v422
    %867 = vmatprep.subr.mxu0 %v427
    %868 = vmatpush1.msra.mxu0 %v426
    %869 = vmatprep.subr.mxu0 %v431
    %870 = vmatpush1.msra.mxu0 %v430
    %871 = vmatprep.subr.mxu0 %v435
    %872 = vmatpush1.msra.mxu0 %v434
    %873 = vmatprep.subr.mxu0 %v439
    %874 = vmatpush1.msra.mxu0 %v438
    %875 = vmatprep.subr.mxu0 %v443
    %876 = vmatpush1.msra.mxu0 %v442
    %877 = vmatprep.subr.mxu0 %v447
    %878 = vmatpush1.msra.mxu0 %v446
    %879 = vmatprep.subr.mxu0 %v451
    %880 = vmatpush1.msra.mxu0 %v450
    %881 = vmatprep.subr.mxu0 %v455
    %882 = vmatpush1.msra.mxu0 %v454
    %883 = vmatprep.subr.mxu0 %v459
    %884 = vmatpush1.msra.mxu0 %v458
    %885 = vmatprep.subr.mxu0 %v463
    %886 = vmatpush1.msra.mxu0 %v462
    %887 = vmatprep.subr.mxu0 %v467
    %888 = vmatpush1.msra.mxu0 %v466
    %889 = vmatprep.subr.mxu0 %v471
    %890 = vmatpush1.msra.mxu0 %v470
    %891 = vmatprep.subr.mxu0 %v475
    %892 = vmatpush1.msra.mxu0 %v474
    %893 = vmatprep.subr.mxu0 %v479
    %894 = vmatpush1.msra.mxu0 %v478
    %895 = vmatprep.subr.mxu0 %v483
    %896 = vmatpush1.msra.mxu0 %v482
    %897 = vmatprep.subr.mxu0 %v487
    %898 = vmatpush1.msra.mxu0 %v486
    %899 = vmatprep.subr.mxu0 %v491
    %900 = vmatpush1.msra.mxu0 %v490
    %901 = vmatprep.subr.mxu0 %v495
    %902 = vmatpush1.msra.mxu0 %v494
    %903 = vmatprep.subr.mxu0 %v499
    %904 = vmatpush1.msra.mxu0 %v498
    %905 = vmatprep.subr.mxu0 %v503
    %906 = vmatpush1.msra.mxu0 %v502
    %907 = vmatprep.mubr.f32.mxu0 %v687
    %908 = vmatmul.mubr.f32.gmra.mrb[0].mxu0 %v766
    %v909 = vpop.f32.mrb[0].mxu0
    %v910 = vadd.f32 0.0, %v909
    %v911 = vpop.f32.mrb[0].mxu0
    %v912 = vadd.f32 0.0, %v911
    %913 = vdwg.mxu0
    %v914 = vadd.f32 %v768, %v839
    %v915 = vadd.f32 %v769, %v841
    %v916 = vadd.f32 %v770, %v910
    %v917 = vadd.f32 %v771, %v912
    %v918 = vxor.u32 %v914, 2147483648
    %v919 = vmul.f32 %v918, 1.442695
    %v920 = vpow.pop %v919
    %v921 = vadd.f32 %v920, 1.0
    %v922 = vrcp.pop %v921
    %v923 = vmul.f32 1.0, %v922
    %v924 = vxor.u32 %v915, 2147483648
    %v925 = vmul.f32 %v924, 1.442695
    %v926 = vpow.pop %v925
    %v927 = vadd.f32 %v926, 1.0
    %v928 = vrcp.pop %v927
    %v929 = vmul.f32 1.0, %v928
    %v930 = vtanh.pop %v916
    %v931 = vmul.f32 %v929, %v687
    %v932 = vmul.f32 %v923, %v930
    %v933 = vadd.f32 %v931, %v932
    %934 = vmatprep.subr.mxu0 0.0
    %935 = vmatpush1.msra.mxu0 %v504
    %936 = vmatprep.subr.mxu0 0.0
    %937 = vmatpush1.msra.mxu0 %v505
    %938 = vmatprep.subr.mxu0 0.0
    %939 = vmatpush1.msra.mxu0 %v506
    %940 = vmatprep.subr.mxu0 0.0
    %941 = vmatpush1.msra.mxu0 %v507
    %942 = vmatprep.subr.mxu0 0.0
    %943 = vmatpush1.msra.mxu0 %v508
    %944 = vmatprep.subr.mxu0 0.0
    %945 = vmatpush1.msra.mxu0 %v509
    %946 = vmatprep.subr.mxu0 0.0
    %947 = vmatpush1.msra.mxu0 %v510
    %948 = vmatprep.subr.mxu0 0.0
    %949 = vmatpush1.msra.mxu0 %v511
    %950 = vmatprep.subr.mxu0 0.0
    %951 = vmatpush1.msra.mxu0 %v512
    %952 = vmatprep.subr.mxu0 0.0
    %953 = vmatpush1.msra.mxu0 %v513
    %954 = vmatprep.subr.mxu0 0.0
    %955 = vmatpush1.msra.mxu0 %v514
    %956 = vmatprep.subr.mxu0 0.0
    %957 = vmatpush1.msra.mxu0 %v515
    %958 = vmatprep.subr.mxu0 0.0
    %959 = vmatpush1.msra.mxu0 %v516
    %960 = vmatprep.subr.mxu0 0.0
    %961 = vmatpush1.msra.mxu0 %v517
    %962 = vmatprep.subr.mxu0 0.0
    %963 = vmatpush1.msra.mxu0 %v518
    %964 = vmatprep.subr.mxu0 0.0
    %965 = vmatpush1.msra.mxu0 %v519
    %966 = vmatprep.subr.mxu0 0.0
    %967 = vmatpush1.msra.mxu0 0.0
    %968 = vmatprep.subr.mxu0 0.0
    %969 = vmatpush1.msra.mxu0 0.0
    %970 = vmatprep.subr.mxu0 0.0
    %971 = vmatpush1.msra.mxu0 0.0
    %972 = vmatprep.subr.mxu0 0.0
    %973 = vmatpush1.msra.mxu0 0.0
    %974 = vmatprep.subr.mxu0 0.0
    %975 = vmatpush1.msra.mxu0 0.0
    %976 = vmatprep.subr.mxu0 0.0
    %977 = vmatpush1.msra.mxu0 0.0
    %978 = vmatprep.subr.mxu0 0.0
    %979 = vmatpush1.msra.mxu0 0.0
    %980 = vmatprep.subr.mxu0 0.0
    %981 = vmatpush1.msra.mxu0 0.0
    %982 = vmatprep.subr.mxu0 0.0
    %983 = vmatpush1.msra.mxu0 0.0
    %984 = vmatprep.subr.mxu0 0.0
    %985 = vmatpush1.msra.mxu0 0.0
    %986 = vmatprep.subr.mxu0 0.0
    %987 = vmatpush1.msra.mxu0 0.0
    %988 = vmatprep.subr.mxu0 0.0
    %989 = vmatpush1.msra.mxu0 0.0
    %990 = vmatprep.subr.mxu0 0.0
    %991 = vmatpush1.msra.mxu0 0.0
    %992 = vmatprep.subr.mxu0 0.0
    %993 = vmatpush1.msra.mxu0 0.0
    %994 = vmatprep.subr.mxu0 0.0
    %995 = vmatpush1.msra.mxu0 0.0
    %996 = vmatprep.subr.mxu0 0.0
    %997 = vmatpush1.msra.mxu0 0.0
    %998 = vmatprep.mubr.f32.mxu0 0.0
    %999 = vmatmul.mubr.f32.gmra.mrb[0].mxu0 %v933
    %v1000 = vpop.f32.mrb[0].mxu0
    %v1001 = vadd.f32 0.0, %v1000
    %v1002 = vpop.f32.mrb[0].mxu0
    %1003 = vdwg.mxu0
    %v1004 = vadd.f32 %v917, %v1001
    %v1005 = vxor.u32 %v1004, 2147483648
    %v1006 = vmul.f32 %v1005, 1.442695
    %v1007 = vpow.pop %v1006
    %v1008 = vadd.f32 %v1007, 1.0
    %v1009 = vrcp.pop %v1008
    %v1010 = vmul.f32 1.0, %v1009
    %v1011 = vtanh.pop %v933
    %v1012 = vmul.f32 %v1010, %v1011
    %s1013 = scalar_lea.vmem [#allocation2], 64
    %v1014 = vld [vmem:[%s1013] sm:$0xff]
    %v1015 = vld [vmem:[%s1013 + $0x8] sm:$0xff]
    %v1016 = vld [vmem:[%s1013 + $0x10] sm:$0xff]
    %v1017 = vld [vmem:[%s1013 + $0x18] sm:$0xff]
    %1018 = vmatprep.subr.mxu0 %v377
    %1019 = vmatpush1.msra.mxu0 %v376
    %1020 = vmatprep.subr.mxu0 %v381
    %1021 = vmatpush1.msra.mxu0 %v380
    %1022 = vmatprep.subr.mxu0 %v385
    %1023 = vmatpush1.msra.mxu0 %v384
    %1024 = vmatprep.subr.mxu0 %v389
    %1025 = vmatpush1.msra.mxu0 %v388
    %1026 = vmatprep.subr.mxu0 %v393
    %1027 = vmatpush1.msra.mxu0 %v392
    %1028 = vmatprep.subr.mxu0 %v397
    %1029 = vmatpush1.msra.mxu0 %v396
    %1030 = vmatprep.subr.mxu0 %v401
    %1031 = vmatpush1.msra.mxu0 %v400
    %1032 = vmatprep.subr.mxu0 %v405
    %1033 = vmatpush1.msra.mxu0 %v404
    %1034 = vmatprep.subr.mxu0 %v409
    %1035 = vmatpush1.msra.mxu0 %v408
    %1036 = vmatprep.subr.mxu0 %v413
    %1037 = vmatpush1.msra.mxu0 %v412
    %1038 = vmatprep.subr.mxu0 %v417
    %1039 = vmatpush1.msra.mxu0 %v416
    %1040 = vmatprep.subr.mxu0 %v421
    %1041 = vmatpush1.msra.mxu0 %v420
    %1042 = vmatprep.subr.mxu0 %v425
    %1043 = vmatpush1.msra.mxu0 %v424
    %1044 = vmatprep.subr.mxu0 %v429
    %1045 = vmatpush1.msra.mxu0 %v428
    %1046 = vmatprep.subr.mxu0 %v433
    %1047 = vmatpush1.msra.mxu0 %v432
    %1048 = vmatprep.subr.mxu0 %v437
    %1049 = vmatpush1.msra.mxu0 %v436
    %1050 = vmatprep.subr.mxu0 %v441
    %1051 = vmatpush1.msra.mxu0 %v440
    %1052 = vmatprep.subr.mxu0 %v445
    %1053 = vmatpush1.msra.mxu0 %v444
    %1054 = vmatprep.subr.mxu0 %v449
    %1055 = vmatpush1.msra.mxu0 %v448
    %1056 = vmatprep.subr.mxu0 %v453
    %1057 = vmatpush1.msra.mxu0 %v452
    %1058 = vmatprep.subr.mxu0 %v457
    %1059 = vmatpush1.msra.mxu0 %v456
    %1060 = vmatprep.subr.mxu0 %v461
    %1061 = vmatpush1.msra.mxu0 %v460
    %1062 = vmatprep.subr.mxu0 %v465
    %1063 = vmatpush1.msra.mxu0 %v464
    %1064 = vmatprep.subr.mxu0 %v469
    %1065 = vmatpush1.msra.mxu0 %v468
    %1066 = vmatprep.subr.mxu0 %v473
    %1067 = vmatpush1.msra.mxu0 %v472
    %1068 = vmatprep.subr.mxu0 %v477
    %1069 = vmatpush1.msra.mxu0 %v476
    %1070 = vmatprep.subr.mxu0 %v481
    %1071 = vmatpush1.msra.mxu0 %v480
    %1072 = vmatprep.subr.mxu0 %v485
    %1073 = vmatpush1.msra.mxu0 %v484
    %1074 = vmatprep.subr.mxu0 %v489
    %1075 = vmatpush1.msra.mxu0 %v488
    %1076 = vmatprep.subr.mxu0 %v493
    %1077 = vmatpush1.msra.mxu0 %v492
    %1078 = vmatprep.subr.mxu0 %v497
    %1079 = vmatpush1.msra.mxu0 %v496
    %1080 = vmatprep.subr.mxu0 %v501
    %1081 = vmatpush1.msra.mxu0 %v500
    %1082 = vmatprep.mubr.f32.mxu0 %v933
    %1083 = vmatmul.mubr.f32.gmra.mrb[0].mxu0 %v1012
    %v1084 = vpop.f32.mrb[0].mxu0
    %v1085 = vadd.f32 0.0, %v1084
    %v1086 = vpop.f32.mrb[0].mxu0
    %v1087 = vadd.f32 0.0, %v1086
    %1088 = vdwg.mxu0
    %1089 = vmatprep.subr.mxu0 %v379
    %1090 = vmatpush1.msra.mxu0 %v378
    %1091 = vmatprep.subr.mxu0 %v383
    %1092 = vmatpush1.msra.mxu0 %v382
    %1093 = vmatprep.subr.mxu0 %v387
    %1094 = vmatpush1.msra.mxu0 %v386
    %1095 = vmatprep.subr.mxu0 %v391
    %1096 = vmatpush1.msra.mxu0 %v390
    %1097 = vmatprep.subr.mxu0 %v395
    %1098 = vmatpush1.msra.mxu0 %v394
    %1099 = vmatprep.subr.mxu0 %v399
    %1100 = vmatpush1.msra.mxu0 %v398
    %1101 = vmatprep.subr.mxu0 %v403
    %1102 = vmatpush1.msra.mxu0 %v402
    %1103 = vmatprep.subr.mxu0 %v407
    %1104 = vmatpush1.msra.mxu0 %v406
    %1105 = vmatprep.subr.mxu0 %v411
    %1106 = vmatpush1.msra.mxu0 %v410
    %1107 = vmatprep.subr.mxu0 %v415
    %1108 = vmatpush1.msra.mxu0 %v414
    %1109 = vmatprep.subr.mxu0 %v419
    %1110 = vmatpush1.msra.mxu0 %v418
    %1111 = vmatprep.subr.mxu0 %v423
    %1112 = vmatpush1.msra.mxu0 %v422
    %1113 = vmatprep.subr.mxu0 %v427
    %1114 = vmatpush1.msra.mxu0 %v426
    %1115 = vmatprep.subr.mxu0 %v431
    %1116 = vmatpush1.msra.mxu0 %v430
    %1117 = vmatprep.subr.mxu0 %v435
    %1118 = vmatpush1.msra.mxu0 %v434
    %1119 = vmatprep.subr.mxu0 %v439
    %1120 = vmatpush1.msra.mxu0 %v438
    %1121 = vmatprep.subr.mxu0 %v443
    %1122 = vmatpush1.msra.mxu0 %v442
    %1123 = vmatprep.subr.mxu0 %v447
    %1124 = vmatpush1.msra.mxu0 %v446
    %1125 = vmatprep.subr.mxu0 %v451
    %1126 = vmatpush1.msra.mxu0 %v450
    %1127 = vmatprep.subr.mxu0 %v455
    %1128 = vmatpush1.msra.mxu0 %v454
    %1129 = vmatprep.subr.mxu0 %v459
    %1130 = vmatpush1.msra.mxu0 %v458
    %1131 = vmatprep.subr.mxu0 %v463
    %1132 = vmatpush1.msra.mxu0 %v462
    %1133 = vmatprep.subr.mxu0 %v467
    %1134 = vmatpush1.msra.mxu0 %v466
    %1135 = vmatprep.subr.mxu0 %v471
    %1136 = vmatpush1.msra.mxu0 %v470
    %1137 = vmatprep.subr.mxu0 %v475
    %1138 = vmatpush1.msra.mxu0 %v474
    %1139 = vmatprep.subr.mxu0 %v479
    %1140 = vmatpush1.msra.mxu0 %v478
    %1141 = vmatprep.subr.mxu0 %v483
    %1142 = vmatpush1.msra.mxu0 %v482
    %1143 = vmatprep.subr.mxu0 %v487
    %1144 = vmatpush1.msra.mxu0 %v486
    %1145 = vmatprep.subr.mxu0 %v491
    %1146 = vmatpush1.msra.mxu0 %v490
    %1147 = vmatprep.subr.mxu0 %v495
    %1148 = vmatpush1.msra.mxu0 %v494
    %1149 = vmatprep.subr.mxu0 %v499
    %1150 = vmatpush1.msra.mxu0 %v498
    %1151 = vmatprep.subr.mxu0 %v503
    %1152 = vmatpush1.msra.mxu0 %v502
    %1153 = vmatprep.mubr.f32.mxu0 %v933
    %1154 = vmatmul.mubr.f32.gmra.mrb[0].mxu0 %v1012
    %v1155 = vpop.f32.mrb[0].mxu0
    %v1156 = vadd.f32 0.0, %v1155
    %v1157 = vpop.f32.mrb[0].mxu0
    %v1158 = vadd.f32 0.0, %v1157
    %1159 = vdwg.mxu0
    %v1160 = vadd.f32 %v1014, %v1085
    %v1161 = vadd.f32 %v1015, %v1087
    %v1162 = vadd.f32 %v1016, %v1156
    %v1163 = vadd.f32 %v1017, %v1158
    %v1164 = vxor.u32 %v1160, 2147483648
    %v1165 = vmul.f32 %v1164, 1.442695
    %v1166 = vpow.pop %v1165
    %v1167 = vadd.f32 %v1166, 1.0
    %v1168 = vrcp.pop %v1167
    %v1169 = vmul.f32 1.0, %v1168
    %v1170 = vxor.u32 %v1161, 2147483648
    %v1171 = vmul.f32 %v1170, 1.442695
    %v1172 = vpow.pop %v1171
    %v1173 = vadd.f32 %v1172, 1.0
    %v1174 = vrcp.pop %v1173
    %v1175 = vmul.f32 1.0, %v1174
    %v1176 = vtanh.pop %v1162
    %v1177 = vmul.f32 %v1175, %v933
    %v1178 = vmul.f32 %v1169, %v1176
    %v1179 = vadd.f32 %v1177, %v1178
    %1180 = vmatprep.subr.mxu0 0.0
    %1181 = vmatpush1.msra.mxu0 %v504
    %1182 = vmatprep.subr.mxu0 0.0
    %1183 = vmatpush1.msra.mxu0 %v505
    %1184 = vmatprep.subr.mxu0 0.0
    %1185 = vmatpush1.msra.mxu0 %v506
    %1186 = vmatprep.subr.mxu0 0.0
    %1187 = vmatpush1.msra.mxu0 %v507
    %1188 = vmatprep.subr.mxu0 0.0
    %1189 = vmatpush1.msra.mxu0 %v508
    %1190 = vmatprep.subr.mxu0 0.0
    %1191 = vmatpush1.msra.mxu0 %v509
    %1192 = vmatprep.subr.mxu0 0.0
    %1193 = vmatpush1.msra.mxu0 %v510
    %1194 = vmatprep.subr.mxu0 0.0
    %1195 = vmatpush1.msra.mxu0 %v511
    %1196 = vmatprep.subr.mxu0 0.0
    %1197 = vmatpush1.msra.mxu0 %v512
    %1198 = vmatprep.subr.mxu0 0.0
    %1199 = vmatpush1.msra.mxu0 %v513
    %1200 = vmatprep.subr.mxu0 0.0
    %1201 = vmatpush1.msra.mxu0 %v514
    %1202 = vmatprep.subr.mxu0 0.0
    %1203 = vmatpush1.msra.mxu0 %v515
    %1204 = vmatprep.subr.mxu0 0.0
    %1205 = vmatpush1.msra.mxu0 %v516
    %1206 = vmatprep.subr.mxu0 0.0
    %1207 = vmatpush1.msra.mxu0 %v517
    %1208 = vmatprep.subr.mxu0 0.0
    %1209 = vmatpush1.msra.mxu0 %v518
    %1210 = vmatprep.subr.mxu0 0.0
    %1211 = vmatpush1.msra.mxu0 %v519
    %1212 = vmatprep.subr.mxu0 0.0
    %1213 = vmatpush1.msra.mxu0 0.0
    %1214 = vmatprep.subr.mxu0 0.0
    %1215 = vmatpush1.msra.mxu0 0.0
    %1216 = vmatprep.subr.mxu0 0.0
    %1217 = vmatpush1.msra.mxu0 0.0
    %1218 = vmatprep.subr.mxu0 0.0
    %1219 = vmatpush1.msra.mxu0 0.0
    %1220 = vmatprep.subr.mxu0 0.0
    %1221 = vmatpush1.msra.mxu0 0.0
    %1222 = vmatprep.subr.mxu0 0.0
    %1223 = vmatpush1.msra.mxu0 0.0
    %1224 = vmatprep.subr.mxu0 0.0
    %1225 = vmatpush1.msra.mxu0 0.0
    %1226 = vmatprep.subr.mxu0 0.0
    %1227 = vmatpush1.msra.mxu0 0.0
    %1228 = vmatprep.subr.mxu0 0.0
    %1229 = vmatpush1.msra.mxu0 0.0
    %1230 = vmatprep.subr.mxu0 0.0
    %1231 = vmatpush1.msra.mxu0 0.0
    %1232 = vmatprep.subr.mxu0 0.0
    %1233 = vmatpush1.msra.mxu0 0.0
    %1234 = vmatprep.subr.mxu0 0.0
    %1235 = vmatpush1.msra.mxu0 0.0
    %1236 = vmatprep.subr.mxu0 0.0
    %1237 = vmatpush1.msra.mxu0 0.0
    %1238 = vmatprep.subr.mxu0 0.0
    %1239 = vmatpush1.msra.mxu0 0.0
    %1240 = vmatprep.subr.mxu0 0.0
    %1241 = vmatpush1.msra.mxu0 0.0
    %1242 = vmatprep.subr.mxu0 0.0
    %1243 = vmatpush1.msra.mxu0 0.0
    %1244 = vmatprep.mubr.f32.mxu0 0.0
    %1245 = vmatmul.mubr.f32.gmra.mrb[0].mxu0 %v1179
    %v1246 = vpop.f32.mrb[0].mxu0
    %v1247 = vadd.f32 0.0, %v1246
    %v1248 = vpop.f32.mrb[0].mxu0
    %1249 = vdwg.mxu0
    %v1250 = vadd.f32 %v1163, %v1247
    %v1251 = vxor.u32 %v1250, 2147483648
    %v1252 = vmul.f32 %v1251, 1.442695
    %v1253 = vpow.pop %v1252
    %v1254 = vadd.f32 %v1253, 1.0
    %v1255 = vrcp.pop %v1254
    %v1256 = vmul.f32 1.0, %v1255
    %v1257 = vtanh.pop %v1179
    %v1258 = vmul.f32 %v1256, %v1257
    %s1259 = scalar_lea.vmem [#allocation2], 96
    %v1260 = vld [vmem:[%s1259] sm:$0xff]
    %v1261 = vld [vmem:[%s1259 + $0x8] sm:$0xff]
    %v1262 = vld [vmem:[%s1259 + $0x10] sm:$0xff]
    %v1263 = vld [vmem:[%s1259 + $0x18] sm:$0xff]
    %1264 = vmatprep.subr.mxu0 %v377
    %1265 = vmatpush1.msra.mxu0 %v376
    %1266 = vmatprep.subr.mxu0 %v381
    %1267 = vmatpush1.msra.mxu0 %v380
    %1268 = vmatprep.subr.mxu0 %v385
    %1269 = vmatpush1.msra.mxu0 %v384
    %1270 = vmatprep.subr.mxu0 %v389
    %1271 = vmatpush1.msra.mxu0 %v388
    %1272 = vmatprep.subr.mxu0 %v393
    %1273 = vmatpush1.msra.mxu0 %v392
    %1274 = vmatprep.subr.mxu0 %v397
    %1275 = vmatpush1.msra.mxu0 %v396
    %1276 = vmatprep.subr.mxu0 %v401
    %1277 = vmatpush1.msra.mxu0 %v400
    %1278 = vmatprep.subr.mxu0 %v405
    %1279 = vmatpush1.msra.mxu0 %v404
    %1280 = vmatprep.subr.mxu0 %v409
    %1281 = vmatpush1.msra.mxu0 %v408
    %1282 = vmatprep.subr.mxu0 %v413
    %1283 = vmatpush1.msra.mxu0 %v412
    %1284 = vmatprep.subr.mxu0 %v417
    %1285 = vmatpush1.msra.mxu0 %v416
    %1286 = vmatprep.subr.mxu0 %v421
    %1287 = vmatpush1.msra.mxu0 %v420
    %1288 = vmatprep.subr.mxu0 %v425
    %1289 = vmatpush1.msra.mxu0 %v424
    %1290 = vmatprep.subr.mxu0 %v429
    %1291 = vmatpush1.msra.mxu0 %v428
    %1292 = vmatprep.subr.mxu0 %v433
    %1293 = vmatpush1.msra.mxu0 %v432
    %1294 = vmatprep.subr.mxu0 %v437
    %1295 = vmatpush1.msra.mxu0 %v436
    %1296 = vmatprep.subr.mxu0 %v441
    %1297 = vmatpush1.msra.mxu0 %v440
    %1298 = vmatprep.subr.mxu0 %v445
    %1299 = vmatpush1.msra.mxu0 %v444
    %1300 = vmatprep.subr.mxu0 %v449
    %1301 = vmatpush1.msra.mxu0 %v448
    %1302 = vmatprep.subr.mxu0 %v453
    %1303 = vmatpush1.msra.mxu0 %v452
    %1304 = vmatprep.subr.mxu0 %v457
    %1305 = vmatpush1.msra.mxu0 %v456
    %1306 = vmatprep.subr.mxu0 %v461
    %1307 = vmatpush1.msra.mxu0 %v460
    %1308 = vmatprep.subr.mxu0 %v465
    %1309 = vmatpush1.msra.mxu0 %v464
    %1310 = vmatprep.subr.mxu0 %v469
    %1311 = vmatpush1.msra.mxu0 %v468
    %1312 = vmatprep.subr.mxu0 %v473
    %1313 = vmatpush1.msra.mxu0 %v472
    %1314 = vmatprep.subr.mxu0 %v477
    %1315 = vmatpush1.msra.mxu0 %v476
    %1316 = vmatprep.subr.mxu0 %v481
    %1317 = vmatpush1.msra.mxu0 %v480
    %1318 = vmatprep.subr.mxu0 %v485
    %1319 = vmatpush1.msra.mxu0 %v484
    %1320 = vmatprep.subr.mxu0 %v489
    %1321 = vmatpush1.msra.mxu0 %v488
    %1322 = vmatprep.subr.mxu0 %v493
    %1323 = vmatpush1.msra.mxu0 %v492
    %1324 = vmatprep.subr.mxu0 %v497
    %1325 = vmatpush1.msra.mxu0 %v496
    %1326 = vmatprep.subr.mxu0 %v501
    %1327 = vmatpush1.msra.mxu0 %v500
    %1328 = vmatprep.mubr.f32.mxu0 %v1179
    %1329 = vmatmul.mubr.f32.gmra.mrb[0].mxu0 %v1258
    %v1330 = vpop.f32.mrb[0].mxu0
    %v1331 = vadd.f32 0.0, %v1330
    %v1332 = vpop.f32.mrb[0].mxu0
    %v1333 = vadd.f32 0.0, %v1332
    %1334 = vdwg.mxu0
    %1335 = vmatprep.subr.mxu0 %v379
    %1336 = vmatpush1.msra.mxu0 %v378
    %1337 = vmatprep.subr.mxu0 %v383
    %1338 = vmatpush1.msra.mxu0 %v382
    %1339 = vmatprep.subr.mxu0 %v387
    %1340 = vmatpush1.msra.mxu0 %v386
    %1341 = vmatprep.subr.mxu0 %v391
    %1342 = vmatpush1.msra.mxu0 %v390
    %1343 = vmatprep.subr.mxu0 %v395
    %1344 = vmatpush1.msra.mxu0 %v394
    %1345 = vmatprep.subr.mxu0 %v399
    %1346 = vmatpush1.msra.mxu0 %v398
    %1347 = vmatprep.subr.mxu0 %v403
    %1348 = vmatpush1.msra.mxu0 %v402
    %1349 = vmatprep.subr.mxu0 %v407
    %1350 = vmatpush1.msra.mxu0 %v406
    %1351 = vmatprep.subr.mxu0 %v411
    %1352 = vmatpush1.msra.mxu0 %v410
    %1353 = vmatprep.subr.mxu0 %v415
    %1354 = vmatpush1.msra.mxu0 %v414
    %1355 = vmatprep.subr.mxu0 %v419
    %1356 = vmatpush1.msra.mxu0 %v418
    %1357 = vmatprep.subr.mxu0 %v423
    %1358 = vmatpush1.msra.mxu0 %v422
    %1359 = vmatprep.subr.mxu0 %v427
    %1360 = vmatpush1.msra.mxu0 %v426
    %1361 = vmatprep.subr.mxu0 %v431
    %1362 = vmatpush1.msra.mxu0 %v430
    %1363 = vmatprep.subr.mxu0 %v435
    %1364 = vmatpush1.msra.mxu0 %v434
    %1365 = vmatprep.subr.mxu0 %v439
    %1366 = vmatpush1.msra.mxu0 %v438
    %1367 = vmatprep.subr.mxu0 %v443
    %1368 = vmatpush1.msra.mxu0 %v442
    %1369 = vmatprep.subr.mxu0 %v447
    %1370 = vmatpush1.msra.mxu0 %v446
    %1371 = vmatprep.subr.mxu0 %v451
    %1372 = vmatpush1.msra.mxu0 %v450
    %1373 = vmatprep.subr.mxu0 %v455
    %1374 = vmatpush1.msra.mxu0 %v454
    %1375 = vmatprep.subr.mxu0 %v459
    %1376 = vmatpush1.msra.mxu0 %v458
    %1377 = vmatprep.subr.mxu0 %v463
    %1378 = vmatpush1.msra.mxu0 %v462
    %1379 = vmatprep.subr.mxu0 %v467
    %1380 = vmatpush1.msra.mxu0 %v466
    %1381 = vmatprep.subr.mxu0 %v471
    %1382 = vmatpush1.msra.mxu0 %v470
    %1383 = vmatprep.subr.mxu0 %v475
    %1384 = vmatpush1.msra.mxu0 %v474
    %1385 = vmatprep.subr.mxu0 %v479
    %1386 = vmatpush1.msra.mxu0 %v478
    %1387 = vmatprep.subr.mxu0 %v483
    %1388 = vmatpush1.msra.mxu0 %v482
    %1389 = vmatprep.subr.mxu0 %v487
    %1390 = vmatpush1.msra.mxu0 %v486
    %1391 = vmatprep.subr.mxu0 %v491
    %1392 = vmatpush1.msra.mxu0 %v490
    %1393 = vmatprep.subr.mxu0 %v495
    %1394 = vmatpush1.msra.mxu0 %v494
    %1395 = vmatprep.subr.mxu0 %v499
    %1396 = vmatpush1.msra.mxu0 %v498
    %1397 = vmatprep.subr.mxu0 %v503
    %1398 = vmatpush1.msra.mxu0 %v502
    %1399 = vmatprep.mubr.f32.mxu0 %v1179
    %1400 = vmatmul.mubr.f32.gmra.mrb[0].mxu0 %v1258
    %v1401 = vpop.f32.mrb[0].mxu0
    %v1402 = vadd.f32 0.0, %v1401
    %v1403 = vpop.f32.mrb[0].mxu0
    %v1404 = vadd.f32 0.0, %v1403
    %1405 = vdwg.mxu0
    %v1406 = vadd.f32 %v1260, %v1331
    %v1407 = vadd.f32 %v1261, %v1333
    %v1408 = vadd.f32 %v1262, %v1402
    %v1409 = vadd.f32 %v1263, %v1404
    %v1410 = vxor.u32 %v1406, 2147483648
    %v1411 = vmul.f32 %v1410, 1.442695
    %v1412 = vpow.pop %v1411
    %v1413 = vadd.f32 %v1412, 1.0
    %v1414 = vrcp.pop %v1413
    %v1415 = vmul.f32 1.0, %v1414
    %v1416 = vxor.u32 %v1407, 2147483648
    %v1417 = vmul.f32 %v1416, 1.442695
    %v1418 = vpow.pop %v1417
    %v1419 = vadd.f32 %v1418, 1.0
    %v1420 = vrcp.pop %v1419
    %v1421 = vmul.f32 1.0, %v1420
    %v1422 = vtanh.pop %v1408
    %v1423 = vmul.f32 %v1421, %v1179
    %v1424 = vmul.f32 %v1415, %v1422
    %v1425 = vadd.f32 %v1423, %v1424
    %1426 = vmatprep.subr.mxu0 0.0
    %1427 = vmatpush1.msra.mxu0 %v504
    %1428 = vmatprep.subr.mxu0 0.0
    %1429 = vmatpush1.msra.mxu0 %v505
    %1430 = vmatprep.subr.mxu0 0.0
    %1431 = vmatpush1.msra.mxu0 %v506
    %1432 = vmatprep.subr.mxu0 0.0
    %1433 = vmatpush1.msra.mxu0 %v507
    %1434 = vmatprep.subr.mxu0 0.0
    %1435 = vmatpush1.msra.mxu0 %v508
    %1436 = vmatprep.subr.mxu0 0.0
    %1437 = vmatpush1.msra.mxu0 %v509
    %1438 = vmatprep.subr.mxu0 0.0
    %1439 = vmatpush1.msra.mxu0 %v510
    %1440 = vmatprep.subr.mxu0 0.0
    %1441 = vmatpush1.msra.mxu0 %v511
    %1442 = vmatprep.subr.mxu0 0.0
    %1443 = vmatpush1.msra.mxu0 %v512
    %1444 = vmatprep.subr.mxu0 0.0
    %1445 = vmatpush1.msra.mxu0 %v513
    %1446 = vmatprep.subr.mxu0 0.0
    %1447 = vmatpush1.msra.mxu0 %v514
    %1448 = vmatprep.subr.mxu0 0.0
    %1449 = vmatpush1.msra.mxu0 %v515
    %1450 = vmatprep.subr.mxu0 0.0
    %1451 = vmatpush1.msra.mxu0 %v516
    %1452 = vmatprep.subr.mxu0 0.0
    %1453 = vmatpush1.msra.mxu0 %v517
    %1454 = vmatprep.subr.mxu0 0.0
    %1455 = vmatpush1.msra.mxu0 %v518
    %1456 = vmatprep.subr.mxu0 0.0
    %1457 = vmatpush1.msra.mxu0 %v519
    %1458 = vmatprep.subr.mxu0 0.0
    %1459 = vmatpush1.msra.mxu0 0.0
    %1460 = vmatprep.subr.mxu0 0.0
    %1461 = vmatpush1.msra.mxu0 0.0
    %1462 = vmatprep.subr.mxu0 0.0
    %1463 = vmatpush1.msra.mxu0 0.0
    %1464 = vmatprep.subr.mxu0 0.0
    %1465 = vmatpush1.msra.mxu0 0.0
    %1466 = vmatprep.subr.mxu0 0.0
    %1467 = vmatpush1.msra.mxu0 0.0
    %1468 = vmatprep.subr.mxu0 0.0
    %1469 = vmatpush1.msra.mxu0 0.0
    %1470 = vmatprep.subr.mxu0 0.0
    %1471 = vmatpush1.msra.mxu0 0.0
    %1472 = vmatprep.subr.mxu0 0.0
    %1473 = vmatpush1.msra.mxu0 0.0
    %1474 = vmatprep.subr.mxu0 0.0
    %1475 = vmatpush1.msra.mxu0 0.0
    %1476 = vmatprep.subr.mxu0 0.0
    %1477 = vmatpush1.msra.mxu0 0.0
    %1478 = vmatprep.subr.mxu0 0.0
    %1479 = vmatpush1.msra.mxu0 0.0
    %1480 = vmatprep.subr.mxu0 0.0
    %1481 = vmatpush1.msra.mxu0 0.0
    %1482 = vmatprep.subr.mxu0 0.0
    %1483 = vmatpush1.msra.mxu0 0.0
    %1484 = vmatprep.subr.mxu0 0.0
    %1485 = vmatpush1.msra.mxu0 0.0
    %1486 = vmatprep.subr.mxu0 0.0
    %1487 = vmatpush1.msra.mxu0 0.0
    %1488 = vmatprep.subr.mxu0 0.0
    %1489 = vmatpush1.msra.mxu0 0.0
    %1490 = vmatprep.mubr.f32.mxu0 0.0
    %1491 = vmatmul.mubr.f32.gmra.mrb[0].mxu0 %v1425
    %v1492 = vpop.f32.mrb[0].mxu0
    %v1493 = vadd.f32 0.0, %v1492
    %v1494 = vpop.f32.mrb[0].mxu0
    %1495 = vdwg.mxu0
    %v1496 = vadd.f32 %v1409, %v1493
    %v1497 = vxor.u32 %v1496, 2147483648
    %v1498 = vmul.f32 %v1497, 1.442695
    %v1499 = vpow.pop %v1498
    %v1500 = vadd.f32 %v1499, 1.0
    %v1501 = vrcp.pop %v1500
    %v1502 = vmul.f32 1.0, %v1501
    %v1503 = vtanh.pop %v1425
    %v1504 = vmul.f32 %v1502, %v1503
    %s1505 = scalar_lea.vmem [#allocation2], 128
    %v1506 = vld [vmem:[%s1505] sm:$0xff]
    %v1507 = vld [vmem:[%s1505 + $0x8] sm:$0xff]
    %v1508 = vld [vmem:[%s1505 + $0x10] sm:$0xff]
    %v1509 = vld [vmem:[%s1505 + $0x18] sm:$0xff]
    %1510 = vmatprep.subr.mxu0 %v377
    %1511 = vmatpush1.msra.mxu0 %v376
    %1512 = vmatprep.subr.mxu0 %v381
    %1513 = vmatpush1.msra.mxu0 %v380
    %1514 = vmatprep.subr.mxu0 %v385
    %1515 = vmatpush1.msra.mxu0 %v384
    %1516 = vmatprep.subr.mxu0 %v389
    %1517 = vmatpush1.msra.mxu0 %v388
    %1518 = vmatprep.subr.mxu0 %v393
    %1519 = vmatpush1.msra.mxu0 %v392
    %1520 = vmatprep.subr.mxu0 %v397
    %1521 = vmatpush1.msra.mxu0 %v396
    %1522 = vmatprep.subr.mxu0 %v401
    %1523 = vmatpush1.msra.mxu0 %v400
    %1524 = vmatprep.subr.mxu0 %v405
    %1525 = vmatpush1.msra.mxu0 %v404
    %1526 = vmatprep.subr.mxu0 %v409
    %1527 = vmatpush1.msra.mxu0 %v408
    %1528 = vmatprep.subr.mxu0 %v413
    %1529 = vmatpush1.msra.mxu0 %v412
    %1530 = vmatprep.subr.mxu0 %v417
    %1531 = vmatpush1.msra.mxu0 %v416
    %1532 = vmatprep.subr.mxu0 %v421
    %1533 = vmatpush1.msra.mxu0 %v420
    %1534 = vmatprep.subr.mxu0 %v425
    %1535 = vmatpush1.msra.mxu0 %v424
    %1536 = vmatprep.subr.mxu0 %v429
    %1537 = vmatpush1.msra.mxu0 %v428
    %1538 = vmatprep.subr.mxu0 %v433
    %1539 = vmatpush1.msra.mxu0 %v432
    %1540 = vmatprep.subr.mxu0 %v437
    %1541 = vmatpush1.msra.mxu0 %v436
    %1542 = vmatprep.subr.mxu0 %v441
    %1543 = vmatpush1.msra.mxu0 %v440
    %1544 = vmatprep.subr.mxu0 %v445
    %1545 = vmatpush1.msra.mxu0 %v444
    %1546 = vmatprep.subr.mxu0 %v449
    %1547 = vmatpush1.msra.mxu0 %v448
    %1548 = vmatprep.subr.mxu0 %v453
    %1549 = vmatpush1.msra.mxu0 %v452
    %1550 = vmatprep.subr.mxu0 %v457
    %1551 = vmatpush1.msra.mxu0 %v456
    %1552 = vmatprep.subr.mxu0 %v461
    %1553 = vmatpush1.msra.mxu0 %v460
    %1554 = vmatprep.subr.mxu0 %v465
    %1555 = vmatpush1.msra.mxu0 %v464
    %1556 = vmatprep.subr.mxu0 %v469
    %1557 = vmatpush1.msra.mxu0 %v468
    %1558 = vmatprep.subr.mxu0 %v473
    %1559 = vmatpush1.msra.mxu0 %v472
    %1560 = vmatprep.subr.mxu0 %v477
    %1561 = vmatpush1.msra.mxu0 %v476
    %1562 = vmatprep.subr.mxu0 %v481
    %1563 = vmatpush1.msra.mxu0 %v480
    %1564 = vmatprep.subr.mxu0 %v485
    %1565 = vmatpush1.msra.mxu0 %v484
    %1566 = vmatprep.subr.mxu0 %v489
    %1567 = vmatpush1.msra.mxu0 %v488
    %1568 = vmatprep.subr.mxu0 %v493
    %1569 = vmatpush1.msra.mxu0 %v492
    %1570 = vmatprep.subr.mxu0 %v497
    %1571 = vmatpush1.msra.mxu0 %v496
    %1572 = vmatprep.subr.mxu0 %v501
    %1573 = vmatpush1.msra.mxu0 %v500
    %1574 = vmatprep.mubr.f32.mxu0 %v1425
    %1575 = vmatmul.mubr.f32.gmra.mrb[0].mxu0 %v1504
    %v1576 = vpop.f32.mrb[0].mxu0
    %v1577 = vadd.f32 0.0, %v1576
    %v1578 = vpop.f32.mrb[0].mxu0
    %v1579 = vadd.f32 0.0, %v1578
    %1580 = vdwg.mxu0
    %1581 = vmatprep.subr.mxu0 %v379
    %1582 = vmatpush1.msra.mxu0 %v378
    %1583 = vmatprep.subr.mxu0 %v383
    %1584 = vmatpush1.msra.mxu0 %v382
    %1585 = vmatprep.subr.mxu0 %v387
    %1586 = vmatpush1.msra.mxu0 %v386
    %1587 = vmatprep.subr.mxu0 %v391
    %1588 = vmatpush1.msra.mxu0 %v390
    %1589 = vmatprep.subr.mxu0 %v395
    %1590 = vmatpush1.msra.mxu0 %v394
    %1591 = vmatprep.subr.mxu0 %v399
    %1592 = vmatpush1.msra.mxu0 %v398
    %1593 = vmatprep.subr.mxu0 %v403
    %1594 = vmatpush1.msra.mxu0 %v402
    %1595 = vmatprep.subr.mxu0 %v407
    %1596 = vmatpush1.msra.mxu0 %v406
    %1597 = vmatprep.subr.mxu0 %v411
    %1598 = vmatpush1.msra.mxu0 %v410
    %1599 = vmatprep.subr.mxu0 %v415
    %1600 = vmatpush1.msra.mxu0 %v414
    %1601 = vmatprep.subr.mxu0 %v419
    %1602 = vmatpush1.msra.mxu0 %v418
    %1603 = vmatprep.subr.mxu0 %v423
    %1604 = vmatpush1.msra.mxu0 %v422
    %1605 = vmatprep.subr.mxu0 %v427
    %1606 = vmatpush1.msra.mxu0 %v426
    %1607 = vmatprep.subr.mxu0 %v431
    %1608 = vmatpush1.msra.mxu0 %v430
    %1609 = vmatprep.subr.mxu0 %v435
    %1610 = vmatpush1.msra.mxu0 %v434
    %1611 = vmatprep.subr.mxu0 %v439
    %1612 = vmatpush1.msra.mxu0 %v438
    %1613 = vmatprep.subr.mxu0 %v443
    %1614 = vmatpush1.msra.mxu0 %v442
    %1615 = vmatprep.subr.mxu0 %v447
    %1616 = vmatpush1.msra.mxu0 %v446
    %1617 = vmatprep.subr.mxu0 %v451
    %1618 = vmatpush1.msra.mxu0 %v450
    %1619 = vmatprep.subr.mxu0 %v455
    %1620 = vmatpush1.msra.mxu0 %v454
    %1621 = vmatprep.subr.mxu0 %v459
    %1622 = vmatpush1.msra.mxu0 %v458
    %1623 = vmatprep.subr.mxu0 %v463
    %1624 = vmatpush1.msra.mxu0 %v462
    %1625 = vmatprep.subr.mxu0 %v467
    %1626 = vmatpush1.msra.mxu0 %v466
    %1627 = vmatprep.subr.mxu0 %v471
    %1628 = vmatpush1.msra.mxu0 %v470
    %1629 = vmatprep.subr.mxu0 %v475
    %1630 = vmatpush1.msra.mxu0 %v474
    %1631 = vmatprep.subr.mxu0 %v479
    %1632 = vmatpush1.msra.mxu0 %v478
    %1633 = vmatprep.subr.mxu0 %v483
    %1634 = vmatpush1.msra.mxu0 %v482
    %1635 = vmatprep.subr.mxu0 %v487
    %1636 = vmatpush1.msra.mxu0 %v486
    %1637 = vmatprep.subr.mxu0 %v491
    %1638 = vmatpush1.msra.mxu0 %v490
    %1639 = vmatprep.subr.mxu0 %v495
    %1640 = vmatpush1.msra.mxu0 %v494
    %1641 = vmatprep.subr.mxu0 %v499
    %1642 = vmatpush1.msra.mxu0 %v498
    %1643 = vmatprep.subr.mxu0 %v503
    %1644 = vmatpush1.msra.mxu0 %v502
    %1645 = vmatprep.mubr.f32.mxu0 %v1425
    %1646 = vmatmul.mubr.f32.gmra.mrb[0].mxu0 %v1504
    %v1647 = vpop.f32.mrb[0].mxu0
    %v1648 = vadd.f32 0.0, %v1647
    %v1649 = vpop.f32.mrb[0].mxu0
    %v1650 = vadd.f32 0.0, %v1649
    %1651 = vdwg.mxu0
    %v1652 = vadd.f32 %v1506, %v1577
    %v1653 = vadd.f32 %v1507, %v1579
    %v1654 = vadd.f32 %v1508, %v1648
    %v1655 = vadd.f32 %v1509, %v1650
    %v1656 = vxor.u32 %v1652, 2147483648
    %v1657 = vmul.f32 %v1656, 1.442695
    %v1658 = vpow.pop %v1657
    %v1659 = vadd.f32 %v1658, 1.0
    %v1660 = vrcp.pop %v1659
    %v1661 = vmul.f32 1.0, %v1660
    %v1662 = vxor.u32 %v1653, 2147483648
    %v1663 = vmul.f32 %v1662, 1.442695
    %v1664 = vpow.pop %v1663
    %v1665 = vadd.f32 %v1664, 1.0
    %v1666 = vrcp.pop %v1665
    %v1667 = vmul.f32 1.0, %v1666
    %v1668 = vtanh.pop %v1654
    %v1669 = vmul.f32 %v1667, %v1425
    %v1670 = vmul.f32 %v1661, %v1668
    %v1671 = vadd.f32 %v1669, %v1670
    %1672 = vmatprep.subr.mxu0 0.0
    %1673 = vmatpush1.msra.mxu0 %v504
    %1674 = vmatprep.subr.mxu0 0.0
    %1675 = vmatpush1.msra.mxu0 %v505
    %1676 = vmatprep.subr.mxu0 0.0
    %1677 = vmatpush1.msra.mxu0 %v506
    %1678 = vmatprep.subr.mxu0 0.0
    %1679 = vmatpush1.msra.mxu0 %v507
    %1680 = vmatprep.subr.mxu0 0.0
    %1681 = vmatpush1.msra.mxu0 %v508
    %1682 = vmatprep.subr.mxu0 0.0
    %1683 = vmatpush1.msra.mxu0 %v509
    %1684 = vmatprep.subr.mxu0 0.0
    %1685 = vmatpush1.msra.mxu0 %v510
    %1686 = vmatprep.subr.mxu0 0.0
    %1687 = vmatpush1.msra.mxu0 %v511
    %1688 = vmatprep.subr.mxu0 0.0
    %1689 = vmatpush1.msra.mxu0 %v512
    %1690 = vmatprep.subr.mxu0 0.0
    %1691 = vmatpush1.msra.mxu0 %v513
    %1692 = vmatprep.subr.mxu0 0.0
    %1693 = vmatpush1.msra.mxu0 %v514
    %1694 = vmatprep.subr.mxu0 0.0
    %1695 = vmatpush1.msra.mxu0 %v515
    %1696 = vmatprep.subr.mxu0 0.0
    %1697 = vmatpush1.msra.mxu0 %v516
    %1698 = vmatprep.subr.mxu0 0.0
    %1699 = vmatpush1.msra.mxu0 %v517
    %1700 = vmatprep.subr.mxu0 0.0
    %1701 = vmatpush1.msra.mxu0 %v518
    %1702 = vmatprep.subr.mxu0 0.0
    %1703 = vmatpush1.msra.mxu0 %v519
    %1704 = vmatprep.subr.mxu0 0.0
    %1705 = vmatpush1.msra.mxu0 0.0
    %1706 = vmatprep.subr.mxu0 0.0
    %1707 = vmatpush1.msra.mxu0 0.0
    %1708 = vmatprep.subr.mxu0 0.0
    %1709 = vmatpush1.msra.mxu0 0.0
    %1710 = vmatprep.subr.mxu0 0.0
    %1711 = vmatpush1.msra.mxu0 0.0
    %1712 = vmatprep.subr.mxu0 0.0
    %1713 = vmatpush1.msra.mxu0 0.0
    %1714 = vmatprep.subr.mxu0 0.0
    %1715 = vmatpush1.msra.mxu0 0.0
    %1716 = vmatprep.subr.mxu0 0.0
    %1717 = vmatpush1.msra.mxu0 0.0
    %1718 = vmatprep.subr.mxu0 0.0
    %1719 = vmatpush1.msra.mxu0 0.0
    %1720 = vmatprep.subr.mxu0 0.0
    %1721 = vmatpush1.msra.mxu0 0.0
    %1722 = vmatprep.subr.mxu0 0.0
    %1723 = vmatpush1.msra.mxu0 0.0
    %1724 = vmatprep.subr.mxu0 0.0
    %1725 = vmatpush1.msra.mxu0 0.0
    %1726 = vmatprep.subr.mxu0 0.0
    %1727 = vmatpush1.msra.mxu0 0.0
    %1728 = vmatprep.subr.mxu0 0.0
    %1729 = vmatpush1.msra.mxu0 0.0
    %1730 = vmatprep.subr.mxu0 0.0
    %1731 = vmatpush1.msra.mxu0 0.0
    %1732 = vmatprep.subr.mxu0 0.0
    %1733 = vmatpush1.msra.mxu0 0.0
    %1734 = vmatprep.subr.mxu0 0.0
    %1735 = vmatpush1.msra.mxu0 0.0
    %1736 = vmatprep.mubr.f32.mxu0 0.0
    %1737 = vmatmul.mubr.f32.gmra.mrb[0].mxu0 %v1671
    %v1738 = vpop.f32.mrb[0].mxu0
    %v1739 = vadd.f32 0.0, %v1738
    %v1740 = vpop.f32.mrb[0].mxu0
    %1741 = vdwg.mxu0
    %v1742 = vadd.f32 %v1655, %v1739
    %v1743 = vxor.u32 %v1742, 2147483648
    %v1744 = vmul.f32 %v1743, 1.442695
    %v1745 = vpow.pop %v1744
    %v1746 = vadd.f32 %v1745, 1.0
    %v1747 = vrcp.pop %v1746
    %v1748 = vmul.f32 1.0, %v1747
    %v1749 = vtanh.pop %v1671
    %v1750 = vmul.f32 %v1748, %v1749
    %s1751 = scalar_lea.vmem [#allocation2], 160
    %v1752 = vld [vmem:[%s1751] sm:$0xff]
    %v1753 = vld [vmem:[%s1751 + $0x8] sm:$0xff]
    %v1754 = vld [vmem:[%s1751 + $0x10] sm:$0xff]
    %v1755 = vld [vmem:[%s1751 + $0x18] sm:$0xff]
    %1756 = vmatprep.subr.mxu0 %v377
    %1757 = vmatpush1.msra.mxu0 %v376
    %1758 = vmatprep.subr.mxu0 %v381
    %1759 = vmatpush1.msra.mxu0 %v380
    %1760 = vmatprep.subr.mxu0 %v385
    %1761 = vmatpush1.msra.mxu0 %v384
    %1762 = vmatprep.subr.mxu0 %v389
    %1763 = vmatpush1.msra.mxu0 %v388
    %1764 = vmatprep.subr.mxu0 %v393
    %1765 = vmatpush1.msra.mxu0 %v392
    %1766 = vmatprep.subr.mxu0 %v397
    %1767 = vmatpush1.msra.mxu0 %v396
    %1768 = vmatprep.subr.mxu0 %v401
    %1769 = vmatpush1.msra.mxu0 %v400
    %1770 = vmatprep.subr.mxu0 %v405
    %1771 = vmatpush1.msra.mxu0 %v404
    %1772 = vmatprep.subr.mxu0 %v409
    %1773 = vmatpush1.msra.mxu0 %v408
    %1774 = vmatprep.subr.mxu0 %v413
    %1775 = vmatpush1.msra.mxu0 %v412
    %1776 = vmatprep.subr.mxu0 %v417
    %1777 = vmatpush1.msra.mxu0 %v416
    %1778 = vmatprep.subr.mxu0 %v421
    %1779 = vmatpush1.msra.mxu0 %v420
    %1780 = vmatprep.subr.mxu0 %v425
    %1781 = vmatpush1.msra.mxu0 %v424
    %1782 = vmatprep.subr.mxu0 %v429
    %1783 = vmatpush1.msra.mxu0 %v428
    %1784 = vmatprep.subr.mxu0 %v433
    %1785 = vmatpush1.msra.mxu0 %v432
    %1786 = vmatprep.subr.mxu0 %v437
    %1787 = vmatpush1.msra.mxu0 %v436
    %1788 = vmatprep.subr.mxu0 %v441
    %1789 = vmatpush1.msra.mxu0 %v440
    %1790 = vmatprep.subr.mxu0 %v445
    %1791 = vmatpush1.msra.mxu0 %v444
    %1792 = vmatprep.subr.mxu0 %v449
    %1793 = vmatpush1.msra.mxu0 %v448
    %1794 = vmatprep.subr.mxu0 %v453
    %1795 = vmatpush1.msra.mxu0 %v452
    %1796 = vmatprep.subr.mxu0 %v457
    %1797 = vmatpush1.msra.mxu0 %v456
    %1798 = vmatprep.subr.mxu0 %v461
    %1799 = vmatpush1.msra.mxu0 %v460
    %1800 = vmatprep.subr.mxu0 %v465
    %1801 = vmatpush1.msra.mxu0 %v464
    %1802 = vmatprep.subr.mxu0 %v469
    %1803 = vmatpush1.msra.mxu0 %v468
    %1804 = vmatprep.subr.mxu0 %v473
    %1805 = vmatpush1.msra.mxu0 %v472
    %1806 = vmatprep.subr.mxu0 %v477
    %1807 = vmatpush1.msra.mxu0 %v476
    %1808 = vmatprep.subr.mxu0 %v481
    %1809 = vmatpush1.msra.mxu0 %v480
    %1810 = vmatprep.subr.mxu0 %v485
    %1811 = vmatpush1.msra.mxu0 %v484
    %1812 = vmatprep.subr.mxu0 %v489
    %1813 = vmatpush1.msra.mxu0 %v488
    %1814 = vmatprep.subr.mxu0 %v493
    %1815 = vmatpush1.msra.mxu0 %v492
    %1816 = vmatprep.subr.mxu0 %v497
    %1817 = vmatpush1.msra.mxu0 %v496
    %1818 = vmatprep.subr.mxu0 %v501
    %1819 = vmatpush1.msra.mxu0 %v500
    %1820 = vmatprep.mubr.f32.mxu0 %v1671
    %1821 = vmatmul.mubr.f32.gmra.mrb[0].mxu0 %v1750
    %v1822 = vpop.f32.mrb[0].mxu0
    %v1823 = vadd.f32 0.0, %v1822
    %v1824 = vpop.f32.mrb[0].mxu0
    %v1825 = vadd.f32 0.0, %v1824
    %1826 = vdwg.mxu0
    %1827 = vmatprep.subr.mxu0 %v379
    %1828 = vmatpush1.msra.mxu0 %v378
    %1829 = vmatprep.subr.mxu0 %v383
    %1830 = vmatpush1.msra.mxu0 %v382
    %1831 = vmatprep.subr.mxu0 %v387
    %1832 = vmatpush1.msra.mxu0 %v386
    %1833 = vmatprep.subr.mxu0 %v391
    %1834 = vmatpush1.msra.mxu0 %v390
    %1835 = vmatprep.subr.mxu0 %v395
    %1836 = vmatpush1.msra.mxu0 %v394
    %1837 = vmatprep.subr.mxu0 %v399
    %1838 = vmatpush1.msra.mxu0 %v398
    %1839 = vmatprep.subr.mxu0 %v403
    %1840 = vmatpush1.msra.mxu0 %v402
    %1841 = vmatprep.subr.mxu0 %v407
    %1842 = vmatpush1.msra.mxu0 %v406
    %1843 = vmatprep.subr.mxu0 %v411
    %1844 = vmatpush1.msra.mxu0 %v410
    %1845 = vmatprep.subr.mxu0 %v415
    %1846 = vmatpush1.msra.mxu0 %v414
    %1847 = vmatprep.subr.mxu0 %v419
    %1848 = vmatpush1.msra.mxu0 %v418
    %1849 = vmatprep.subr.mxu0 %v423
    %1850 = vmatpush1.msra.mxu0 %v422
    %1851 = vmatprep.subr.mxu0 %v427
    %1852 = vmatpush1.msra.mxu0 %v426
    %1853 = vmatprep.subr.mxu0 %v431
    %1854 = vmatpush1.msra.mxu0 %v430
    %1855 = vmatprep.subr.mxu0 %v435
    %1856 = vmatpush1.msra.mxu0 %v434
    %1857 = vmatprep.subr.mxu0 %v439
    %1858 = vmatpush1.msra.mxu0 %v438
    %1859 = vmatprep.subr.mxu0 %v443
    %1860 = vmatpush1.msra.mxu0 %v442
    %1861 = vmatprep.subr.mxu0 %v447
    %1862 = vmatpush1.msra.mxu0 %v446
    %1863 = vmatprep.subr.mxu0 %v451
    %1864 = vmatpush1.msra.mxu0 %v450
    %1865 = vmatprep.subr.mxu0 %v455
    %1866 = vmatpush1.msra.mxu0 %v454
    %1867 = vmatprep.subr.mxu0 %v459
    %1868 = vmatpush1.msra.mxu0 %v458
    %1869 = vmatprep.subr.mxu0 %v463
    %1870 = vmatpush1.msra.mxu0 %v462
    %1871 = vmatprep.subr.mxu0 %v467
    %1872 = vmatpush1.msra.mxu0 %v466
    %1873 = vmatprep.subr.mxu0 %v471
    %1874 = vmatpush1.msra.mxu0 %v470
    %1875 = vmatprep.subr.mxu0 %v475
    %1876 = vmatpush1.msra.mxu0 %v474
    %1877 = vmatprep.subr.mxu0 %v479
    %1878 = vmatpush1.msra.mxu0 %v478
    %1879 = vmatprep.subr.mxu0 %v483
    %1880 = vmatpush1.msra.mxu0 %v482
    %1881 = vmatprep.subr.mxu0 %v487
    %1882 = vmatpush1.msra.mxu0 %v486
    %1883 = vmatprep.subr.mxu0 %v491
    %1884 = vmatpush1.msra.mxu0 %v490
    %1885 = vmatprep.subr.mxu0 %v495
    %1886 = vmatpush1.msra.mxu0 %v494
    %1887 = vmatprep.subr.mxu0 %v499
    %1888 = vmatpush1.msra.mxu0 %v498
    %1889 = vmatprep.subr.mxu0 %v503
    %1890 = vmatpush1.msra.mxu0 %v502
    %1891 = vmatprep.mubr.f32.mxu0 %v1671
    %1892 = vmatmul.mubr.f32.gmra.mrb[0].mxu0 %v1750
    %v1893 = vpop.f32.mrb[0].mxu0
    %v1894 = vadd.f32 0.0, %v1893
    %v1895 = vpop.f32.mrb[0].mxu0
    %v1896 = vadd.f32 0.0, %v1895
    %1897 = vdwg.mxu0
    %v1898 = vadd.f32 %v1752, %v1823
    %v1899 = vadd.f32 %v1753, %v1825
    %v1900 = vadd.f32 %v1754, %v1894
    %v1901 = vadd.f32 %v1755, %v1896
    %v1902 = vxor.u32 %v1898, 2147483648
    %v1903 = vmul.f32 %v1902, 1.442695
    %v1904 = vpow.pop %v1903
    %v1905 = vadd.f32 %v1904, 1.0
    %v1906 = vrcp.pop %v1905
    %v1907 = vmul.f32 1.0, %v1906
    %v1908 = vxor.u32 %v1899, 2147483648
    %v1909 = vmul.f32 %v1908, 1.442695
    %v1910 = vpow.pop %v1909
    %v1911 = vadd.f32 %v1910, 1.0
    %v1912 = vrcp.pop %v1911
    %v1913 = vmul.f32 1.0, %v1912
    %v1914 = vtanh.pop %v1900
    %v1915 = vmul.f32 %v1913, %v1671
    %v1916 = vmul.f32 %v1907, %v1914
    %v1917 = vadd.f32 %v1915, %v1916
    %1918 = vmatprep.subr.mxu0 0.0
    %1919 = vmatpush1.msra.mxu0 %v504
    %1920 = vmatprep.subr.mxu0 0.0
    %1921 = vmatpush1.msra.mxu0 %v505
    %1922 = vmatprep.subr.mxu0 0.0
    %1923 = vmatpush1.msra.mxu0 %v506
    %1924 = vmatprep.subr.mxu0 0.0
    %1925 = vmatpush1.msra.mxu0 %v507
    %1926 = vmatprep.subr.mxu0 0.0
    %1927 = vmatpush1.msra.mxu0 %v508
    %1928 = vmatprep.subr.mxu0 0.0
    %1929 = vmatpush1.msra.mxu0 %v509
    %1930 = vmatprep.subr.mxu0 0.0
    %1931 = vmatpush1.msra.mxu0 %v510
    %1932 = vmatprep.subr.mxu0 0.0
    %1933 = vmatpush1.msra.mxu0 %v511
    %1934 = vmatprep.subr.mxu0 0.0
    %1935 = vmatpush1.msra.mxu0 %v512
    %1936 = vmatprep.subr.mxu0 0.0
    %1937 = vmatpush1.msra.mxu0 %v513
    %1938 = vmatprep.subr.mxu0 0.0
    %1939 = vmatpush1.msra.mxu0 %v514
    %1940 = vmatprep.subr.mxu0 0.0
    %1941 = vmatpush1.msra.mxu0 %v515
    %1942 = vmatprep.subr.mxu0 0.0
    %1943 = vmatpush1.msra.mxu0 %v516
    %1944 = vmatprep.subr.mxu0 0.0
    %1945 = vmatpush1.msra.mxu0 %v517
    %1946 = vmatprep.subr.mxu0 0.0
    %1947 = vmatpush1.msra.mxu0 %v518
    %1948 = vmatprep.subr.mxu0 0.0
    %1949 = vmatpush1.msra.mxu0 %v519
    %1950 = vmatprep.subr.mxu0 0.0
    %1951 = vmatpush1.msra.mxu0 0.0
    %1952 = vmatprep.subr.mxu0 0.0
    %1953 = vmatpush1.msra.mxu0 0.0
    %1954 = vmatprep.subr.mxu0 0.0
    %1955 = vmatpush1.msra.mxu0 0.0
    %1956 = vmatprep.subr.mxu0 0.0
    %1957 = vmatpush1.msra.mxu0 0.0
    %1958 = vmatprep.subr.mxu0 0.0
    %1959 = vmatpush1.msra.mxu0 0.0
    %1960 = vmatprep.subr.mxu0 0.0
    %1961 = vmatpush1.msra.mxu0 0.0
    %1962 = vmatprep.subr.mxu0 0.0
    %1963 = vmatpush1.msra.mxu0 0.0
    %1964 = vmatprep.subr.mxu0 0.0
    %1965 = vmatpush1.msra.mxu0 0.0
    %1966 = vmatprep.subr.mxu0 0.0
    %1967 = vmatpush1.msra.mxu0 0.0
    %1968 = vmatprep.subr.mxu0 0.0
    %1969 = vmatpush1.msra.mxu0 0.0
    %1970 = vmatprep.subr.mxu0 0.0
    %1971 = vmatpush1.msra.mxu0 0.0
    %1972 = vmatprep.subr.mxu0 0.0
    %1973 = vmatpush1.msra.mxu0 0.0
    %1974 = vmatprep.subr.mxu0 0.0
    %1975 = vmatpush1.msra.mxu0 0.0
    %1976 = vmatprep.subr.mxu0 0.0
    %1977 = vmatpush1.msra.mxu0 0.0
    %1978 = vmatprep.subr.mxu0 0.0
    %1979 = vmatpush1.msra.mxu0 0.0
    %1980 = vmatprep.subr.mxu0 0.0
    %1981 = vmatpush1.msra.mxu0 0.0
    %1982 = vmatprep.mubr.f32.mxu0 0.0
    %1983 = vmatmul.mubr.f32.gmra.mrb[0].mxu0 %v1917
    %v1984 = vpop.f32.mrb[0].mxu0
    %v1985 = vadd.f32 0.0, %v1984
    %v1986 = vpop.f32.mrb[0].mxu0
    %1987 = vdwg.mxu0
    %v1988 = vadd.f32 %v1901, %v1985
    %v1989 = vxor.u32 %v1988, 2147483648
    %v1990 = vmul.f32 %v1989, 1.442695
    %v1991 = vpow.pop %v1990
    %v1992 = vadd.f32 %v1991, 1.0
    %v1993 = vrcp.pop %v1992
    %v1994 = vmul.f32 1.0, %v1993
    %v1995 = vtanh.pop %v1917
    %v1996 = vmul.f32 %v1994, %v1995
    %s1997 = scalar_lea.vmem [#allocation2], 192
    %v1998 = vld [vmem:[%s1997] sm:$0xff]
    %v1999 = vld [vmem:[%s1997 + $0x8] sm:$0xff]
    %v2000 = vld [vmem:[%s1997 + $0x10] sm:$0xff]
    %v2001 = vld [vmem:[%s1997 + $0x18] sm:$0xff]
    %2002 = vmatprep.subr.mxu0 %v377
    %2003 = vmatpush1.msra.mxu0 %v376
    %2004 = vmatprep.subr.mxu0 %v381
    %2005 = vmatpush1.msra.mxu0 %v380
    %2006 = vmatprep.subr.mxu0 %v385
    %2007 = vmatpush1.msra.mxu0 %v384
    %2008 = vmatprep.subr.mxu0 %v389
    %2009 = vmatpush1.msra.mxu0 %v388
    %2010 = vmatprep.subr.mxu0 %v393
    %2011 = vmatpush1.msra.mxu0 %v392
    %2012 = vmatprep.subr.mxu0 %v397
    %2013 = vmatpush1.msra.mxu0 %v396
    %2014 = vmatprep.subr.mxu0 %v401
    %2015 = vmatpush1.msra.mxu0 %v400
    %2016 = vmatprep.subr.mxu0 %v405
    %2017 = vmatpush1.msra.mxu0 %v404
    %2018 = vmatprep.subr.mxu0 %v409
    %2019 = vmatpush1.msra.mxu0 %v408
    %2020 = vmatprep.subr.mxu0 %v413
    %2021 = vmatpush1.msra.mxu0 %v412
    %2022 = vmatprep.subr.mxu0 %v417
    %2023 = vmatpush1.msra.mxu0 %v416
    %2024 = vmatprep.subr.mxu0 %v421
    %2025 = vmatpush1.msra.mxu0 %v420
    %2026 = vmatprep.subr.mxu0 %v425
    %2027 = vmatpush1.msra.mxu0 %v424
    %2028 = vmatprep.subr.mxu0 %v429
    %2029 = vmatpush1.msra.mxu0 %v428
    %2030 = vmatprep.subr.mxu0 %v433
    %2031 = vmatpush1.msra.mxu0 %v432
    %2032 = vmatprep.subr.mxu0 %v437
    %2033 = vmatpush1.msra.mxu0 %v436
    %2034 = vmatprep.subr.mxu0 %v441
    %2035 = vmatpush1.msra.mxu0 %v440
    %2036 = vmatprep.subr.mxu0 %v445
    %2037 = vmatpush1.msra.mxu0 %v444
    %2038 = vmatprep.subr.mxu0 %v449
    %2039 = vmatpush1.msra.mxu0 %v448
    %2040 = vmatprep.subr.mxu0 %v453
    %2041 = vmatpush1.msra.mxu0 %v452
    %2042 = vmatprep.subr.mxu0 %v457
    %2043 = vmatpush1.msra.mxu0 %v456
    %2044 = vmatprep.subr.mxu0 %v461
    %2045 = vmatpush1.msra.mxu0 %v460
    %2046 = vmatprep.subr.mxu0 %v465
    %2047 = vmatpush1.msra.mxu0 %v464
    %2048 = vmatprep.subr.mxu0 %v469
    %2049 = vmatpush1.msra.mxu0 %v468
    %2050 = vmatprep.subr.mxu0 %v473
    %2051 = vmatpush1.msra.mxu0 %v472
    %2052 = vmatprep.subr.mxu0 %v477
    %2053 = vmatpush1.msra.mxu0 %v476
    %2054 = vmatprep.subr.mxu0 %v481
    %2055 = vmatpush1.msra.mxu0 %v480
    %2056 = vmatprep.subr.mxu0 %v485
    %2057 = vmatpush1.msra.mxu0 %v484
    %2058 = vmatprep.subr.mxu0 %v489
    %2059 = vmatpush1.msra.mxu0 %v488
    %2060 = vmatprep.subr.mxu0 %v493
    %2061 = vmatpush1.msra.mxu0 %v492
    %2062 = vmatprep.subr.mxu0 %v497
    %2063 = vmatpush1.msra.mxu0 %v496
    %2064 = vmatprep.subr.mxu0 %v501
    %2065 = vmatpush1.msra.mxu0 %v500
    %2066 = vmatprep.mubr.f32.mxu0 %v1917
    %2067 = vmatmul.mubr.f32.gmra.mrb[0].mxu0 %v1996
    %v2068 = vpop.f32.mrb[0].mxu0
    %v2069 = vadd.f32 0.0, %v2068
    %v2070 = vpop.f32.mrb[0].mxu0
    %v2071 = vadd.f32 0.0, %v2070
    %2072 = vdwg.mxu0
    %2073 = vmatprep.subr.mxu0 %v379
    %2074 = vmatpush1.msra.mxu0 %v378
    %2075 = vmatprep.subr.mxu0 %v383
    %2076 = vmatpush1.msra.mxu0 %v382
    %2077 = vmatprep.subr.mxu0 %v387
    %2078 = vmatpush1.msra.mxu0 %v386
    %2079 = vmatprep.subr.mxu0 %v391
    %2080 = vmatpush1.msra.mxu0 %v390
    %2081 = vmatprep.subr.mxu0 %v395
    %2082 = vmatpush1.msra.mxu0 %v394
    %2083 = vmatprep.subr.mxu0 %v399
    %2084 = vmatpush1.msra.mxu0 %v398
    %2085 = vmatprep.subr.mxu0 %v403
    %2086 = vmatpush1.msra.mxu0 %v402
    %2087 = vmatprep.subr.mxu0 %v407
    %2088 = vmatpush1.msra.mxu0 %v406
    %2089 = vmatprep.subr.mxu0 %v411
    %2090 = vmatpush1.msra.mxu0 %v410
    %2091 = vmatprep.subr.mxu0 %v415
    %2092 = vmatpush1.msra.mxu0 %v414
    %2093 = vmatprep.subr.mxu0 %v419
    %2094 = vmatpush1.msra.mxu0 %v418
    %2095 = vmatprep.subr.mxu0 %v423
    %2096 = vmatpush1.msra.mxu0 %v422
    %2097 = vmatprep.subr.mxu0 %v427
    %2098 = vmatpush1.msra.mxu0 %v426
    %2099 = vmatprep.subr.mxu0 %v431
    %2100 = vmatpush1.msra.mxu0 %v430
    %2101 = vmatprep.subr.mxu0 %v435
    %2102 = vmatpush1.msra.mxu0 %v434
    %2103 = vmatprep.subr.mxu0 %v439
    %2104 = vmatpush1.msra.mxu0 %v438
    %2105 = vmatprep.subr.mxu0 %v443
    %2106 = vmatpush1.msra.mxu0 %v442
    %2107 = vmatprep.subr.mxu0 %v447
    %2108 = vmatpush1.msra.mxu0 %v446
    %2109 = vmatprep.subr.mxu0 %v451
    %2110 = vmatpush1.msra.mxu0 %v450
    %2111 = vmatprep.subr.mxu0 %v455
    %2112 = vmatpush1.msra.mxu0 %v454
    %2113 = vmatprep.subr.mxu0 %v459
    %2114 = vmatpush1.msra.mxu0 %v458
    %2115 = vmatprep.subr.mxu0 %v463
    %2116 = vmatpush1.msra.mxu0 %v462
    %2117 = vmatprep.subr.mxu0 %v467
    %2118 = vmatpush1.msra.mxu0 %v466
    %2119 = vmatprep.subr.mxu0 %v471
    %2120 = vmatpush1.msra.mxu0 %v470
    %2121 = vmatprep.subr.mxu0 %v475
    %2122 = vmatpush1.msra.mxu0 %v474
    %2123 = vmatprep.subr.mxu0 %v479
    %2124 = vmatpush1.msra.mxu0 %v478
    %2125 = vmatprep.subr.mxu0 %v483
    %2126 = vmatpush1.msra.mxu0 %v482
    %2127 = vmatprep.subr.mxu0 %v487
    %2128 = vmatpush1.msra.mxu0 %v486
    %2129 = vmatprep.subr.mxu0 %v491
    %2130 = vmatpush1.msra.mxu0 %v490
    %2131 = vmatprep.subr.mxu0 %v495
    %2132 = vmatpush1.msra.mxu0 %v494
    %2133 = vmatprep.subr.mxu0 %v499
    %2134 = vmatpush1.msra.mxu0 %v498
    %2135 = vmatprep.subr.mxu0 %v503
    %2136 = vmatpush1.msra.mxu0 %v502
    %2137 = vmatprep.mubr.f32.mxu0 %v1917
    %2138 = vmatmul.mubr.f32.gmra.mrb[0].mxu0 %v1996
    %v2139 = vpop.f32.mrb[0].mxu0
    %v2140 = vadd.f32 0.0, %v2139
    %v2141 = vpop.f32.mrb[0].mxu0
    %v2142 = vadd.f32 0.0, %v2141
    %2143 = vdwg.mxu0
    %v2144 = vadd.f32 %v1998, %v2069
    %v2145 = vadd.f32 %v1999, %v2071
    %v2146 = vadd.f32 %v2000, %v2140
    %v2147 = vadd.f32 %v2001, %v2142
    %v2148 = vxor.u32 %v2144, 2147483648
    %v2149 = vmul.f32 %v2148, 1.442695
    %v2150 = vpow.pop %v2149
    %v2151 = vadd.f32 %v2150, 1.0
    %v2152 = vrcp.pop %v2151
    %v2153 = vmul.f32 1.0, %v2152
    %v2154 = vxor.u32 %v2145, 2147483648
    %v2155 = vmul.f32 %v2154, 1.442695
    %v2156 = vpow.pop %v2155
    %v2157 = vadd.f32 %v2156, 1.0
    %v2158 = vrcp.pop %v2157
    %v2159 = vmul.f32 1.0, %v2158
    %v2160 = vtanh.pop %v2146
    %v2161 = vmul.f32 %v2159, %v1917
    %v2162 = vmul.f32 %v2153, %v2160
    %v2163 = vadd.f32 %v2161, %v2162
    %2164 = vmatprep.subr.mxu0 0.0
    %2165 = vmatpush1.msra.mxu0 %v504
    %2166 = vmatprep.subr.mxu0 0.0
    %2167 = vmatpush1.msra.mxu0 %v505
    %2168 = vmatprep.subr.mxu0 0.0
    %2169 = vmatpush1.msra.mxu0 %v506
    %2170 = vmatprep.subr.mxu0 0.0
    %2171 = vmatpush1.msra.mxu0 %v507
    %2172 = vmatprep.subr.mxu0 0.0
    %2173 = vmatpush1.msra.mxu0 %v508
    %2174 = vmatprep.subr.mxu0 0.0
    %2175 = vmatpush1.msra.mxu0 %v509
    %2176 = vmatprep.subr.mxu0 0.0
    %2177 = vmatpush1.msra.mxu0 %v510
    %2178 = vmatprep.subr.mxu0 0.0
    %2179 = vmatpush1.msra.mxu0 %v511
    %2180 = vmatprep.subr.mxu0 0.0
    %2181 = vmatpush1.msra.mxu0 %v512
    %2182 = vmatprep.subr.mxu0 0.0
    %2183 = vmatpush1.msra.mxu0 %v513
    %2184 = vmatprep.subr.mxu0 0.0
    %2185 = vmatpush1.msra.mxu0 %v514
    %2186 = vmatprep.subr.mxu0 0.0
    %2187 = vmatpush1.msra.mxu0 %v515
    %2188 = vmatprep.subr.mxu0 0.0
    %2189 = vmatpush1.msra.mxu0 %v516
    %2190 = vmatprep.subr.mxu0 0.0
    %2191 = vmatpush1.msra.mxu0 %v517
    %2192 = vmatprep.subr.mxu0 0.0
    %2193 = vmatpush1.msra.mxu0 %v518
    %2194 = vmatprep.subr.mxu0 0.0
    %2195 = vmatpush1.msra.mxu0 %v519
    %2196 = vmatprep.subr.mxu0 0.0
    %2197 = vmatpush1.msra.mxu0 0.0
    %2198 = vmatprep.subr.mxu0 0.0
    %2199 = vmatpush1.msra.mxu0 0.0
    %2200 = vmatprep.subr.mxu0 0.0
    %2201 = vmatpush1.msra.mxu0 0.0
    %2202 = vmatprep.subr.mxu0 0.0
    %2203 = vmatpush1.msra.mxu0 0.0
    %2204 = vmatprep.subr.mxu0 0.0
    %2205 = vmatpush1.msra.mxu0 0.0
    %2206 = vmatprep.subr.mxu0 0.0
    %2207 = vmatpush1.msra.mxu0 0.0
    %2208 = vmatprep.subr.mxu0 0.0
    %2209 = vmatpush1.msra.mxu0 0.0
    %2210 = vmatprep.subr.mxu0 0.0
    %2211 = vmatpush1.msra.mxu0 0.0
    %2212 = vmatprep.subr.mxu0 0.0
    %2213 = vmatpush1.msra.mxu0 0.0
    %2214 = vmatprep.subr.mxu0 0.0
    %2215 = vmatpush1.msra.mxu0 0.0
    %2216 = vmatprep.subr.mxu0 0.0
    %2217 = vmatpush1.msra.mxu0 0.0
    %2218 = vmatprep.subr.mxu0 0.0
    %2219 = vmatpush1.msra.mxu0 0.0
    %2220 = vmatprep.subr.mxu0 0.0
    %2221 = vmatpush1.msra.mxu0 0.0
    %2222 = vmatprep.subr.mxu0 0.0
    %2223 = vmatpush1.msra.mxu0 0.0
    %2224 = vmatprep.subr.mxu0 0.0
    %2225 = vmatpush1.msra.mxu0 0.0
    %2226 = vmatprep.subr.mxu0 0.0
    %2227 = vmatpush1.msra.mxu0 0.0
    %2228 = vmatprep.mubr.f32.mxu0 0.0
    %2229 = vmatmul.mubr.f32.gmra.mrb[0].mxu0 %v2163
    %v2230 = vpop.f32.mrb[0].mxu0
    %v2231 = vadd.f32 0.0, %v2230
    %v2232 = vpop.f32.mrb[0].mxu0
    %2233 = vdwg.mxu0
    %v2234 = vadd.f32 %v2147, %v2231
    %v2235 = vxor.u32 %v2234, 2147483648
    %v2236 = vmul.f32 %v2235, 1.442695
    %v2237 = vpow.pop %v2236
    %v2238 = vadd.f32 %v2237, 1.0
    %v2239 = vrcp.pop %v2238
    %v2240 = vmul.f32 1.0, %v2239
    %v2241 = vtanh.pop %v2163
    %v2242 = vmul.f32 %v2240, %v2241
    %s2243 = scalar_lea.vmem [#allocation2], 224
    %v2244 = vld [vmem:[%s2243] sm:$0xff]
    %v2245 = vld [vmem:[%s2243 + $0x8] sm:$0xff]
    %v2246 = vld [vmem:[%s2243 + $0x10] sm:$0xff]
    %v2247 = vld [vmem:[%s2243 + $0x18] sm:$0xff]
    %2248 = vmatprep.subr.mxu0 %v377
    %2249 = vmatpush1.msra.mxu0 %v376
    %2250 = vmatprep.subr.mxu0 %v381
    %2251 = vmatpush1.msra.mxu0 %v380
    %2252 = vmatprep.subr.mxu0 %v385
    %2253 = vmatpush1.msra.mxu0 %v384
    %2254 = vmatprep.subr.mxu0 %v389
    %2255 = vmatpush1.msra.mxu0 %v388
    %2256 = vmatprep.subr.mxu0 %v393
    %2257 = vmatpush1.msra.mxu0 %v392
    %2258 = vmatprep.subr.mxu0 %v397
    %2259 = vmatpush1.msra.mxu0 %v396
    %2260 = vmatprep.subr.mxu0 %v401
    %2261 = vmatpush1.msra.mxu0 %v400
    %2262 = vmatprep.subr.mxu0 %v405
    %2263 = vmatpush1.msra.mxu0 %v404
    %2264 = vmatprep.subr.mxu0 %v409
    %2265 = vmatpush1.msra.mxu0 %v408
    %2266 = vmatprep.subr.mxu0 %v413
    %2267 = vmatpush1.msra.mxu0 %v412
    %2268 = vmatprep.subr.mxu0 %v417
    %2269 = vmatpush1.msra.mxu0 %v416
    %2270 = vmatprep.subr.mxu0 %v421
    %2271 = vmatpush1.msra.mxu0 %v420
    %2272 = vmatprep.subr.mxu0 %v425
    %2273 = vmatpush1.msra.mxu0 %v424
    %2274 = vmatprep.subr.mxu0 %v429
    %2275 = vmatpush1.msra.mxu0 %v428
    %2276 = vmatprep.subr.mxu0 %v433
    %2277 = vmatpush1.msra.mxu0 %v432
    %2278 = vmatprep.subr.mxu0 %v437
    %2279 = vmatpush1.msra.mxu0 %v436
    %2280 = vmatprep.subr.mxu0 %v441
    %2281 = vmatpush1.msra.mxu0 %v440
    %2282 = vmatprep.subr.mxu0 %v445
    %2283 = vmatpush1.msra.mxu0 %v444
    %2284 = vmatprep.subr.mxu0 %v449
    %2285 = vmatpush1.msra.mxu0 %v448
    %2286 = vmatprep.subr.mxu0 %v453
    %2287 = vmatpush1.msra.mxu0 %v452
    %2288 = vmatprep.subr.mxu0 %v457
    %2289 = vmatpush1.msra.mxu0 %v456
    %2290 = vmatprep.subr.mxu0 %v461
    %2291 = vmatpush1.msra.mxu0 %v460
    %2292 = vmatprep.subr.mxu0 %v465
    %2293 = vmatpush1.msra.mxu0 %v464
    %2294 = vmatprep.subr.mxu0 %v469
    %2295 = vmatpush1.msra.mxu0 %v468
    %2296 = vmatprep.subr.mxu0 %v473
    %2297 = vmatpush1.msra.mxu0 %v472
    %2298 = vmatprep.subr.mxu0 %v477
    %2299 = vmatpush1.msra.mxu0 %v476
    %2300 = vmatprep.subr.mxu0 %v481
    %2301 = vmatpush1.msra.mxu0 %v480
    %2302 = vmatprep.subr.mxu0 %v485
    %2303 = vmatpush1.msra.mxu0 %v484
    %2304 = vmatprep.subr.mxu0 %v489
    %2305 = vmatpush1.msra.mxu0 %v488
    %2306 = vmatprep.subr.mxu0 %v493
    %2307 = vmatpush1.msra.mxu0 %v492
    %2308 = vmatprep.subr.mxu0 %v497
    %2309 = vmatpush1.msra.mxu0 %v496
    %2310 = vmatprep.subr.mxu0 %v501
    %2311 = vmatpush1.msra.mxu0 %v500
    %2312 = vmatprep.mubr.f32.mxu0 %v2163
    %2313 = vmatmul.mubr.f32.gmra.mrb[0].mxu0 %v2242
    %v2314 = vpop.f32.mrb[0].mxu0
    %v2315 = vadd.f32 0.0, %v2314
    %v2316 = vpop.f32.mrb[0].mxu0
    %v2317 = vadd.f32 0.0, %v2316
    %2318 = vdwg.mxu0
    %2319 = vmatprep.subr.mxu0 %v379
    %2320 = vmatpush1.msra.mxu0 %v378
    %2321 = vmatprep.subr.mxu0 %v383
    %2322 = vmatpush1.msra.mxu0 %v382
    %2323 = vmatprep.subr.mxu0 %v387
    %2324 = vmatpush1.msra.mxu0 %v386
    %2325 = vmatprep.subr.mxu0 %v391
    %2326 = vmatpush1.msra.mxu0 %v390
    %2327 = vmatprep.subr.mxu0 %v395
    %2328 = vmatpush1.msra.mxu0 %v394
    %2329 = vmatprep.subr.mxu0 %v399
    %2330 = vmatpush1.msra.mxu0 %v398
    %2331 = vmatprep.subr.mxu0 %v403
    %2332 = vmatpush1.msra.mxu0 %v402
    %2333 = vmatprep.subr.mxu0 %v407
    %2334 = vmatpush1.msra.mxu0 %v406
    %2335 = vmatprep.subr.mxu0 %v411
    %2336 = vmatpush1.msra.mxu0 %v410
    %2337 = vmatprep.subr.mxu0 %v415
    %2338 = vmatpush1.msra.mxu0 %v414
    %2339 = vmatprep.subr.mxu0 %v419
    %2340 = vmatpush1.msra.mxu0 %v418
    %2341 = vmatprep.subr.mxu0 %v423
    %2342 = vmatpush1.msra.mxu0 %v422
    %2343 = vmatprep.subr.mxu0 %v427
    %2344 = vmatpush1.msra.mxu0 %v426
    %2345 = vmatprep.subr.mxu0 %v431
    %2346 = vmatpush1.msra.mxu0 %v430
    %2347 = vmatprep.subr.mxu0 %v435
    %2348 = vmatpush1.msra.mxu0 %v434
    %2349 = vmatprep.subr.mxu0 %v439
    %2350 = vmatpush1.msra.mxu0 %v438
    %2351 = vmatprep.subr.mxu0 %v443
    %2352 = vmatpush1.msra.mxu0 %v442
    %2353 = vmatprep.subr.mxu0 %v447
    %2354 = vmatpush1.msra.mxu0 %v446
    %2355 = vmatprep.subr.mxu0 %v451
    %2356 = vmatpush1.msra.mxu0 %v450
    %2357 = vmatprep.subr.mxu0 %v455
    %2358 = vmatpush1.msra.mxu0 %v454
    %2359 = vmatprep.subr.mxu0 %v459
    %2360 = vmatpush1.msra.mxu0 %v458
    %2361 = vmatprep.subr.mxu0 %v463
    %2362 = vmatpush1.msra.mxu0 %v462
    %2363 = vmatprep.subr.mxu0 %v467
    %2364 = vmatpush1.msra.mxu0 %v466
    %2365 = vmatprep.subr.mxu0 %v471
    %2366 = vmatpush1.msra.mxu0 %v470
    %2367 = vmatprep.subr.mxu0 %v475
    %2368 = vmatpush1.msra.mxu0 %v474
    %2369 = vmatprep.subr.mxu0 %v479
    %2370 = vmatpush1.msra.mxu0 %v478
    %2371 = vmatprep.subr.mxu0 %v483
    %2372 = vmatpush1.msra.mxu0 %v482
    %2373 = vmatprep.subr.mxu0 %v487
    %2374 = vmatpush1.msra.mxu0 %v486
    %2375 = vmatprep.subr.mxu0 %v491
    %2376 = vmatpush1.msra.mxu0 %v490
    %2377 = vmatprep.subr.mxu0 %v495
    %2378 = vmatpush1.msra.mxu0 %v494
    %2379 = vmatprep.subr.mxu0 %v499
    %2380 = vmatpush1.msra.mxu0 %v498
    %2381 = vmatprep.subr.mxu0 %v503
    %2382 = vmatpush1.msra.mxu0 %v502
    %2383 = vmatprep.mubr.f32.mxu0 %v2163
    %2384 = vmatmul.mubr.f32.gmra.mrb[0].mxu0 %v2242
    %v2385 = vpop.f32.mrb[0].mxu0
    %v2386 = vadd.f32 0.0, %v2385
    %v2387 = vpop.f32.mrb[0].mxu0
    %v2388 = vadd.f32 0.0, %v2387
    %2389 = vdwg.mxu0
    %v2390 = vadd.f32 %v2244, %v2315
    %v2391 = vadd.f32 %v2245, %v2317
    %v2392 = vadd.f32 %v2246, %v2386
    %v2393 = vadd.f32 %v2247, %v2388
    %v2394 = vxor.u32 %v2390, 2147483648
    %v2395 = vmul.f32 %v2394, 1.442695
    %v2396 = vpow.pop %v2395
    %v2397 = vadd.f32 %v2396, 1.0
    %v2398 = vrcp.pop %v2397
    %v2399 = vmul.f32 1.0, %v2398
    %v2400 = vxor.u32 %v2391, 2147483648
    %v2401 = vmul.f32 %v2400, 1.442695
    %v2402 = vpow.pop %v2401
    %v2403 = vadd.f32 %v2402, 1.0
    %v2404 = vrcp.pop %v2403
    %v2405 = vmul.f32 1.0, %v2404
    %v2406 = vtanh.pop %v2392
    %v2407 = vmul.f32 %v2405, %v2163
    %v2408 = vmul.f32 %v2399, %v2406
    %v2409 = vadd.f32 %v2407, %v2408
    %2410 = vmatprep.subr.mxu0 0.0
    %2411 = vmatpush1.msra.mxu0 %v504
    %2412 = vmatprep.subr.mxu0 0.0
    %2413 = vmatpush1.msra.mxu0 %v505
    %2414 = vmatprep.subr.mxu0 0.0
    %2415 = vmatpush1.msra.mxu0 %v506
    %2416 = vmatprep.subr.mxu0 0.0
    %2417 = vmatpush1.msra.mxu0 %v507
    %2418 = vmatprep.subr.mxu0 0.0
    %2419 = vmatpush1.msra.mxu0 %v508
    %2420 = vmatprep.subr.mxu0 0.0
    %2421 = vmatpush1.msra.mxu0 %v509
    %2422 = vmatprep.subr.mxu0 0.0
    %2423 = vmatpush1.msra.mxu0 %v510
    %2424 = vmatprep.subr.mxu0 0.0
    %2425 = vmatpush1.msra.mxu0 %v511
    %2426 = vmatprep.subr.mxu0 0.0
    %2427 = vmatpush1.msra.mxu0 %v512
    %2428 = vmatprep.subr.mxu0 0.0
    %2429 = vmatpush1.msra.mxu0 %v513
    %2430 = vmatprep.subr.mxu0 0.0
    %2431 = vmatpush1.msra.mxu0 %v514
    %2432 = vmatprep.subr.mxu0 0.0
    %2433 = vmatpush1.msra.mxu0 %v515
    %2434 = vmatprep.subr.mxu0 0.0
    %2435 = vmatpush1.msra.mxu0 %v516
    %2436 = vmatprep.subr.mxu0 0.0
    %2437 = vmatpush1.msra.mxu0 %v517
    %2438 = vmatprep.subr.mxu0 0.0
    %2439 = vmatpush1.msra.mxu0 %v518
    %2440 = vmatprep.subr.mxu0 0.0
    %2441 = vmatpush1.msra.mxu0 %v519
    %2442 = vmatprep.subr.mxu0 0.0
    %2443 = vmatpush1.msra.mxu0 0.0
    %2444 = vmatprep.subr.mxu0 0.0
    %2445 = vmatpush1.msra.mxu0 0.0
    %2446 = vmatprep.subr.mxu0 0.0
    %2447 = vmatpush1.msra.mxu0 0.0
    %2448 = vmatprep.subr.mxu0 0.0
    %2449 = vmatpush1.msra.mxu0 0.0
    %2450 = vmatprep.subr.mxu0 0.0
    %2451 = vmatpush1.msra.mxu0 0.0
    %2452 = vmatprep.subr.mxu0 0.0
    %2453 = vmatpush1.msra.mxu0 0.0
    %2454 = vmatprep.subr.mxu0 0.0
    %2455 = vmatpush1.msra.mxu0 0.0
    %2456 = vmatprep.subr.mxu0 0.0
    %2457 = vmatpush1.msra.mxu0 0.0
    %2458 = vmatprep.subr.mxu0 0.0
    %2459 = vmatpush1.msra.mxu0 0.0
    %2460 = vmatprep.subr.mxu0 0.0
    %2461 = vmatpush1.msra.mxu0 0.0
    %2462 = vmatprep.subr.mxu0 0.0
    %2463 = vmatpush1.msra.mxu0 0.0
    %2464 = vmatprep.subr.mxu0 0.0
    %2465 = vmatpush1.msra.mxu0 0.0
    %2466 = vmatprep.subr.mxu0 0.0
    %2467 = vmatpush1.msra.mxu0 0.0
    %2468 = vmatprep.subr.mxu0 0.0
    %2469 = vmatpush1.msra.mxu0 0.0
    %2470 = vmatprep.subr.mxu0 0.0
    %2471 = vmatpush1.msra.mxu0 0.0
    %2472 = vmatprep.subr.mxu0 0.0
    %2473 = vmatpush1.msra.mxu0 0.0
    %2474 = vmatprep.mubr.f32.mxu0 0.0
    %2475 = vmatmul.mubr.f32.gmra.mrb[0].mxu0 %v2409
    %v2476 = vpop.f32.mrb[0].mxu0
    %v2477 = vadd.f32 0.0, %v2476
    %v2478 = vpop.f32.mrb[0].mxu0
    %2479 = vdwg.mxu0
    %v2480 = vadd.f32 %v2393, %v2477
    %v2481 = vxor.u32 %v2480, 2147483648
    %v2482 = vmul.f32 %v2481, 1.442695
    %v2483 = vpow.pop %v2482
    %v2484 = vadd.f32 %v2483, 1.0
    %v2485 = vrcp.pop %v2484
    %v2486 = vmul.f32 1.0, %v2485
    %v2487 = vtanh.pop %v2409
    %v2488 = vmul.f32 %v2486, %v2487
    %2489 = vst [vmem:[#allocation3] sm:$0xff] %v2488
    %2490 = vst [vmem:[#allocation4] sm:$0xff] %v2409
    // Predicated region
    $region34: #{tpu_custom_call.1} parent=1 // pred_check
      %p2491 = pneg %p49
    $region35: #{tpu_custom_call.1} parent=1 // pred_check_branch
      %2493 = sbr.rel (%p2491) target = $region37
    $region36: #{tpu_custom_call.1} parent=1 // pred_region
      %2494 = vst [vmem:[#allocation10] sm:$0xff] %v2488
    $region37: #{tpu_custom_call.1} parent=1 // pred_fallthru
      _
    // Predicated region
    $region38: #{tpu_custom_call.1} parent=1 // pred_check
      _
    $region39: #{tpu_custom_call.1} parent=1 // pred_check_branch
      %2496 = sbr.rel (0) target = $region41
    $region40: #{tpu_custom_call.1} parent=1 // pred_region
      %s2498 = ssub.s32 128, 128
      %2499 = vsyncadd [#allocation7], %s2498
      %s2501 = sshll.u32 [#allocation10], 4
      %s2502 = int_to_ptr.vmem [resolvable:$true] %s2501
      %2504 = dma.vmem_to_hbm [thread:$0]  %s2502, 128, %s5, [#allocation7]
    $region41: #{tpu_custom_call.1} parent=1 // pred_fallthru
      _
    // Predicated region
    $region42: #{tpu_custom_call.1} parent=1 // pred_check
      _
    $region43: #{tpu_custom_call.1} parent=1 // pred_check_branch
      %2506 = sbr.rel (0) target = $region45
    $region44: #{tpu_custom_call.1} parent=1 // pred_region
      %2507 = dma.done [#allocation7], 128
    $region45: #{tpu_custom_call.1} parent=1 // pred_fallthru
      _
    %2508 = vsyncpa [#allocation6], 1
    %2509 = vsyncpa [#allocation9], 1
    %2510 = vsyncpa [#allocation7], 1

</llo_original>
